<compile_context>
chip_gen: v7x
topology: tpu7x:2x2x1
jax: 0.10.0
libtpu: 0.0.40
codegen_flags: <defaults>
</compile_context>

<pallas_src>
import functools
import math

import jax
import jax.numpy as jnp
from jax.experimental import pallas as pl
from jax.experimental.pallas import tpu as pltpu

LN_EPS = 1e-5


def _layer_norm(x, gamma, beta):
    # x: (R, D); gamma/beta: (1, D).  Matches torch.nn.LayerNorm (biased variance).
    mean = jnp.mean(x, axis=-1, keepdims=True)
    xc = x - mean
    var = jnp.mean(xc * xc, axis=-1, keepdims=True)
    inv = jax.lax.rsqrt(var + LN_EPS)
    return xc * inv * gamma + beta


def _encoder_kernel(num_heads, d_k, seq_len, ff_chunk,
                    x_ref,
                    wqkv_ref, bqkv_ref,
                    wo_ref, bo_ref,
                    g1_ref, be1_ref,
                    w1_ref, bf1_ref, w2_ref, bf2_ref,
                    g2_ref, be2_ref,
                    o_ref):
    H = num_heads
    D = H * d_k
    R = x_ref.shape[0]          # rows in this block = G * seq_len
    G = R // seq_len            # number of (T, D) slabs processed this step
    mm = wqkv_ref.dtype         # MXU operand dtype (f32 or bf16)

    x_f32 = x_ref[...].astype(jnp.float32)      # residual / LayerNorm path stays f32
    x_mm = x_f32.astype(mm)

    # ---- fused QKV projection: one MXU pass with N = 3*D output lanes --------
    qkv = jnp.dot(x_mm, wqkv_ref[...], preferred_element_type=jnp.float32)
    qkv = qkv + bqkv_ref[...]                              # (R, 3D) f32
    # T % 8 == 0 keeps this row split sublane-tile aligned (free); otherwise it is a
    # (correct) in-VMEM relayout copy.
    qkv3 = qkv.reshape(G, seq_len, 3 * D).astype(mm)       # (G, T, 3D) matmul dtype

    # ---- head-batched attention ----------------------------------------------
    # Single batch dim b = h*G + g: one batched score matmul and one batched
    # context matmul on the MXU instead of H small ones.
    q_b = jnp.concatenate(
        [qkv3[:, :, h * d_k:(h + 1) * d_k] for h in range(H)], axis=0)          # (HG,T,dk)
    k_b = jnp.concatenate(
        [qkv3[:, :, D + h * d_k:D + (h + 1) * d_k] for h in range(H)], axis=0)  # (HG,T,dk)
    v_b = jnp.concatenate(
        [qkv3[:, :, 2 * D + h * d_k:2 * D + (h + 1) * d_k] for h in range(H)], axis=0)

    scale = 1.0 / math.sqrt(d_k)
    s = jnp.einsum('bqd,bkd->bqk', q_b, k_b,
                   preferred_element_type=jnp.float32) * scale                  # (HG,T,T) f32
    s = s - jnp.max(s, axis=-1, keepdims=True)
    e = jnp.exp(s)
    denom = jnp.sum(e, axis=-1, keepdims=True)
    p = e * pl.reciprocal(denom, approx=True)      # EUP reciprocal, VALU stays free

    ctx_b = jnp.einsum('bqk,bkd->bqd', p.astype(mm), v_b,
                       preferred_element_type=jnp.float32)                      # (HG,T,dk) f32
    # Reassemble the head-concat layout: lanes [h*dk:(h+1)*dk] <- head h.
    ctx = jnp.concatenate(
        [ctx_b[h * G:(h + 1) * G].reshape(R, d_k) for h in range(H)], axis=-1)  # (R, D)

    # Single full-width output projection: (R, D) @ (D, D), K = D on the MXU.
    attn = jnp.dot(ctx.astype(mm), wo_ref[...],
                   preferred_element_type=jnp.float32) + bo_ref[...]

    # ---- residual + LayerNorm 1 ----------------------------------------------
    src1 = _layer_norm(x_f32 + attn, g1_ref[...], be1_ref[...])

    # ---- position-wise feed-forward, chunked over d_ff ------------------------
    d_ff = w1_ref.shape[1]
    src1_mm = src1.astype(mm)
    ffn = jnp.zeros((R, D), jnp.float32) + bf2_ref[...]
    for c0 in range(0, d_ff, ff_chunk):                    # static chunk loop
        c1 = min(c0 + ff_chunk, d_ff)
        h1 = jnp.dot(src1_mm, w1_ref[:, c0:c1],
                     preferred_element_type=jnp.float32) + bf1_ref[:, c0:c1]
        h1 = jnp.maximum(h1, 0.0).astype(mm)
        ffn = ffn + jnp.dot(h1, w2_ref[c0:c1, :],
                            preferred_element_type=jnp.float32)

    # ---- residual + LayerNorm 2 ----------------------------------------------
    out = _layer_norm(src1 + ffn, g2_ref[...], be2_ref[...])
    o_ref[...] = out.astype(o_ref.dtype)


def _round_up(x, m):
    return ((x + m - 1) // m) * m


def _round_down(x, m):
    return (x // m) * m


def transformer_encoder_layer_4d(src, params, num_heads, *,
                                 matmul_dtype=jnp.float32,
                                 target_rows=1024,
                                 ff_chunk=2048,
                                 single_buffer_weights=None):
    B, N, T, D = src.shape
    assert D % num_heads == 0
    BN = B * N
    d_ff = params["w1"].shape[1]
    d_k = D // num_heads
    mm = matmul_dtype
    ff_chunk = max(128, _round_down(int(ff_chunk), 128))

    # Fuse Q/K/V weights into one (D, 3D) projection; Wo stays a single (D, D) matrix.
    wqkv = jnp.concatenate([params["wq"], params["wk"], params["wv"]], axis=1)
    bqkv = jnp.concatenate([params["bq"], params["bk"], params["bv"]], axis=1)

    weights = (
        wqkv.astype(mm), bqkv.astype(jnp.float32),
        params["wo"].astype(mm), params["bo"].astype(jnp.float32),
        params["gamma1"].astype(jnp.float32), params["beta1"].astype(jnp.float32),
        params["w1"].astype(mm), params["bf1"].astype(jnp.float32),
        params["w2"].astype(mm), params["bf2"].astype(jnp.float32),
        params["gamma2"].astype(jnp.float32), params["beta2"].astype(jnp.float32),
    )
    weight_bytes = sum(int(w.size) * w.dtype.itemsize for w in weights)
    if single_buffer_weights is None:
        # Only worth it (and only needed) once weights are large; keeps the tiny-demo
        # compile path identical to the known-good default.
        single_buffer_weights = weight_bytes > (8 << 20)
    weight_buf_factor = 1 if single_buffer_weights else 2

    # ---- VMEM budget → row tile R and vmem_limit_bytes ------------------------
    try:
        vmem_cap = int(pltpu.get_tpu_info().vmem_capacity_bytes)
    except Exception:
        vmem_cap = 64 << 20                    # conservative (v7x per-core VMEM)
    budget = (vmem_cap * 3) // 4               # v5e/v6e ≈ 96 MiB, v7x ≈ 48 MiB

    mm_b = jnp.dtype(mm).itemsize
    x_b = src.dtype.itemsize
    ffc = min(ff_chunk, d_ff)
    # Conservative estimate of live VMEM bytes per row of the block (f32 unless noted).
    per_row = (2 * 2 * D * x_b                 # input + output blocks, double-buffered
               + 4 * 3 * D                     # qkv f32
               + mm_b * 3 * D                  # qkv in matmul dtype (q_b/k_b/v_b)
               + 4 * 2 * num_heads * T         # scores + probs f32
               + mm_b * num_heads * T          # probs in matmul dtype
               + 4 * 4 * D                     # ctx, attn, src1, ffn accumulator
               + mm_b * 2 * D                  # matmul-dtype copies of src1 / ctx
               + (4 + mm_b) * ffc              # FFN hidden chunk
               + 4 * D)                        # output cast / misc headroom
    avail = budget - weight_buf_factor * weight_bytes

    unit = (T * 8) // math.gcd(T, 8)           # R must be a multiple of T and of 8
    r_fit = max(unit, _round_down(max(avail, unit * per_row) // per_row, unit))

    total_rows = BN * T
    R = _round_up(total_rows, unit)
    R = min(R, max(unit, _round_down(int(target_rows), unit)))
    R = min(R, r_fit)
    if total_rows > unit:
        # Guarantee >= 2 grid steps: keeps both v7x TensorCores busy and restores
        # the input/output DMA pipeline.
        R = min(R, _round_up((total_rows + 1) // 2, unit))
    R = max(R, unit)
    padded_rows = _round_up(total_rows, R)
    grid = (padded_rows // R,)

    x2 = src.reshape(total_rows, D)
    if padded_rows != total_rows:
        x2 = jnp.pad(x2, ((0, padded_rows - total_rows), (0, 0)))

    def const_spec(a):
        zeros = (0,) * a.ndim
        if single_buffer_weights:
            return pl.BlockSpec(a.shape, lambda i, z=zeros: z,
                                pipeline_mode=pl.Buffered(1))
        return pl.BlockSpec(a.shape, lambda i, z=zeros: z)

    weight_specs = [const_spec(w) for w in weights]

    # Advisory cost estimate for the XLA scheduler.
    rows = padded_rows
    flops = int(2 * rows * D * 3 * D                  # fused QKV
                + 4 * rows * T * D                    # scores + context (per-row)
                + 2 * rows * D * D                    # output projection
                + 4 * rows * D * d_ff)                # FFN (two matmuls)
    transcendentals = int(rows * num_heads * T + 4 * rows)
    bytes_accessed = int(x2.size * x2.dtype.itemsize
                         + rows * D * src.dtype.itemsize
                         + weight_buf_factor * weight_bytes)

    kernel = functools.partial(_encoder_kernel, num_heads, d_k, T, ff_chunk)

    out = pl.pallas_call(
        kernel,
        out_shape=jax.ShapeDtypeStruct((padded_rows, D), src.dtype),
        grid_spec=pltpu.PrefetchScalarGridSpec(
            num_scalar_prefetch=0,
            grid=grid,
            in_specs=[pl.BlockSpec((R, D), lambda i: (i, 0))] + weight_specs,
            out_specs=pl.BlockSpec((R, D), lambda i: (i, 0)),
        ),
        compiler_params=pltpu.CompilerParams(
            dimension_semantics=("parallel",),
            vmem_limit_bytes=int(budget),
        ),
        cost_estimate=pl.CostEstimate(
            flops=flops,
            transcendentals=transcendentals,
            bytes_accessed=bytes_accessed),
    )(x2, *weights)

    return out[:total_rows].reshape(B, N, T, D)


def init_params(key, d_model, num_heads, d_ff):
    # Deterministic synthetic weights.  Linear weights are stored as
    # (in_features, out_features) and applied as x @ W + b.
    ks = jax.random.split(key, 12)
    s = 0.1

    def w(k, shape):
        return jax.random.normal(k, shape, jnp.float32) * s

    params = {
        "wq": w(ks[0], (d_model, d_model)),
        "bq": w(ks[1], (1, d_model)),
        "wk": w(ks[2], (d_model, d_model)),
        "bk": w(ks[3], (1, d_model)),
        "wv": w(ks[4], (d_model, d_model)),
        "bv": w(ks[5], (1, d_model)),
        "wo": w(ks[6], (d_model, d_model)),
        "bo": w(ks[7], (1, d_model)),
        "gamma1": jnp.ones((1, d_model), jnp.float32),
        "beta1": jnp.zeros((1, d_model), jnp.float32),
        "w1": w(ks[8], (d_model, d_ff)),
        "bf1": w(ks[9], (1, d_ff)),
        "w2": w(ks[10], (d_ff, d_model)),
        "bf2": w(ks[11], (1, d_model)),
        "gamma2": jnp.ones((1, d_model), jnp.float32),
        "beta2": jnp.zeros((1, d_model), jnp.float32),
    }
    return params


def _reference(src, params, num_heads):
    # Pure-JAX reference of the PyTorch forward (eval mode, no dropout).
    B, N, T, D = src.shape
    d_k = D // num_heads

    def proj(x, w, b):
        return jnp.einsum("bntd,de->bnte", x, w) + b[0]

    q = proj(src, params["wq"], params["bq"])
    k = proj(src, params["wk"], params["bk"])
    v = proj(src, params["wv"], params["bv"])

    def split(x):
        return x.reshape(B, N, T, num_heads, d_k).transpose(0, 1, 3, 2, 4)

    qh, kh, vh = split(q), split(k), split(v)
    scores = jnp.einsum("bnhqd,bnhkd->bnhqk", qh, kh) / math.sqrt(d_k)
    probs = jax.nn.softmax(scores, axis=-1)
    ctx = jnp.einsum("bnhqk,bnhkd->bnhqd", probs, vh)
    ctx = ctx.transpose(0, 1, 3, 2, 4).reshape(B, N, T, D)
    attn_out = proj(ctx, params["wo"], params["bo"])

    def ln(x, g, b):
        m = jnp.mean(x, axis=-1, keepdims=True)
        var = jnp.mean((x - m) ** 2, axis=-1, keepdims=True)
        return (x - m) / jnp.sqrt(var + LN_EPS) * g[0] + b[0]

    x1 = ln(src + attn_out, params["gamma1"], params["beta1"])
    hmid = jnp.maximum(proj(x1, params["w1"], params["bf1"]), 0.0)
    ffn = proj(hmid, params["w2"], params["bf2"])
    return ln(x1 + ffn, params["gamma2"], params["beta2"])


if __name__ == "__main__":
    B, N, T, D = 2, 4, 8, 32
    num_heads, d_ff = 4, 64

    key = jax.random.PRNGKey(0)
    k_in, k_par = jax.random.split(key)
    src = jax.random.normal(k_in, (B, N, T, D), jnp.float32)
    params = init_params(k_par, D, num_heads, d_ff)

    ref = _reference(src, params, num_heads)

    # f32 MXU operands: tight check (only the approx softmax reciprocal differs).
    out_f32 = jax.block_until_ready(
        transformer_encoder_layer_4d(src, params, num_heads,
                                     matmul_dtype=jnp.float32))
    assert out_f32.shape == (B, N, T, D)
    err32 = float(jnp.max(jnp.abs(out_f32 - ref)))
    assert err32 < 5e-3, f"f32 mismatch vs reference: {err32}"

    # bf16 MXU operands (production path on v6e/v7x): f32 accumulation & f32
    # residual/LayerNorm path, looser tolerance.
    out_bf16 = jax.block_until_ready(
        transformer_encoder_layer_4d(src, params, num_heads,
                                     matmul_dtype=jnp.bfloat16))
    errbf = float(jnp.max(jnp.abs(out_bf16 - ref)))
    assert errbf < 7e-2, f"bf16 mismatch vs reference: {errbf}"

    print("KERNEL_OK")
</pallas_src>

<mosaic_0001>
module attributes {stable_mosaic.version = 11 : i64} {
  func.func @_encoder_kernel(%arg0: i32, %arg1: memref<32x32xf32, #tpu.memory_space<vmem>>, %arg2: memref<32x96xf32, #tpu.memory_space<vmem>>, %arg3: memref<1x96xf32, #tpu.memory_space<vmem>>, %arg4: memref<32x32xf32, #tpu.memory_space<vmem>>, %arg5: memref<1x32xf32, #tpu.memory_space<vmem>>, %arg6: memref<1x32xf32, #tpu.memory_space<vmem>>, %arg7: memref<1x32xf32, #tpu.memory_space<vmem>>, %arg8: memref<32x64xf32, #tpu.memory_space<vmem>>, %arg9: memref<1x64xf32, #tpu.memory_space<vmem>>, %arg10: memref<64x32xf32, #tpu.memory_space<vmem>>, %arg11: memref<1x32xf32, #tpu.memory_space<vmem>>, %arg12: memref<1x32xf32, #tpu.memory_space<vmem>>, %arg13: memref<1x32xf32, #tpu.memory_space<vmem>>, %arg14: memref<32x32xf32, #tpu.memory_space<vmem>>) attributes {dimension_semantics = [#tpu.dimension_semantics<parallel>], iteration_bounds = array<i64: 2>, scalar_prefetch = 0 : i64, scratch_operands = 0 : i64, tpu.core_type = #tpu.core_type<tc>, window_params = [{transform_indices = @transform_0, window_bounds = array<i64: 32, 32>}, {pipeline_mode = #tpu.pipeline_mode<synchronous>, transform_indices = @transform_1, window_bounds = array<i64: 32, 96>}, {pipeline_mode = #tpu.pipeline_mode<synchronous>, transform_indices = @transform_2, window_bounds = array<i64: 1, 96>}, {pipeline_mode = #tpu.pipeline_mode<synchronous>, transform_indices = @transform_3, window_bounds = array<i64: 32, 32>}, {pipeline_mode = #tpu.pipeline_mode<synchronous>, transform_indices = @transform_4, window_bounds = array<i64: 1, 32>}, {pipeline_mode = #tpu.pipeline_mode<synchronous>, transform_indices = @transform_5, window_bounds = array<i64: 1, 32>}, {pipeline_mode = #tpu.pipeline_mode<synchronous>, transform_indices = @transform_6, window_bounds = array<i64: 1, 32>}, {pipeline_mode = #tpu.pipeline_mode<synchronous>, transform_indices = @transform_7, window_bounds = array<i64: 32, 64>}, {pipeline_mode = #tpu.pipeline_mode<synchronous>, transform_indices = @transform_8, window_bounds = array<i64: 1, 64>}, {pipeline_mode = #tpu.pipeline_mode<synchronous>, transform_indices = @transform_9, window_bounds = array<i64: 64, 32>}, {pipeline_mode = #tpu.pipeline_mode<synchronous>, transform_indices = @transform_10, window_bounds = array<i64: 1, 32>}, {pipeline_mode = #tpu.pipeline_mode<synchronous>, transform_indices = @transform_11, window_bounds = array<i64: 1, 32>}, {pipeline_mode = #tpu.pipeline_mode<synchronous>, transform_indices = @transform_12, window_bounds = array<i64: 1, 32>}, {transform_indices = @transform_13, window_bounds = array<i64: 32, 32>}]} {
    %c0 = arith.constant 0 : index
    %c0_0 = arith.constant 0 : index
    %0 = vector.load %arg1[%c0, %c0_0] : memref<32x32xf32, #tpu.memory_space<vmem>>, vector<32x32xf32>
    %c0_1 = arith.constant 0 : index
    %c0_2 = arith.constant 0 : index
    %1 = vector.load %arg2[%c0_1, %c0_2] : memref<32x96xf32, #tpu.memory_space<vmem>>, vector<32x96xf32>
    %cst = arith.constant dense<0.000000e+00> : vector<32x96xf32>
    %2 = tpu.matmul %0, %1, %cst {dimension_numbers = #tpu.dot_dimension_numbers<[1], [0], [0], [1], [0, 0, 1, 1], [], []>} : vector<32x32xf32>, vector<32x96xf32>, vector<32x96xf32> -> vector<32x96xf32>
    %c0_3 = arith.constant 0 : index
    %c0_4 = arith.constant 0 : index
    %3 = vector.load %arg3[%c0_3, %c0_4] : memref<1x96xf32, #tpu.memory_space<vmem>>, vector<1x96xf32>
    %4 = vector.broadcast %3 : vector<1x96xf32> to vector<32x96xf32>
    %5 = arith.addf %2, %4 : vector<32x96xf32>
    %6 = vector.shape_cast %5 : vector<32x96xf32> to vector<4x8x96xf32>
    %7 = vector.extract_strided_slice %6 {offsets = [0, 0, 0], sizes = [4, 8, 8], strides = [1, 1, 1]} : vector<4x8x96xf32> to vector<4x8x8xf32>
    %8 = vector.extract_strided_slice %6 {offsets = [0, 0, 8], sizes = [4, 8, 8], strides = [1, 1, 1]} : vector<4x8x96xf32> to vector<4x8x8xf32>
    %9 = vector.extract_strided_slice %6 {offsets = [0, 0, 16], sizes = [4, 8, 8], strides = [1, 1, 1]} : vector<4x8x96xf32> to vector<4x8x8xf32>
    %10 = vector.extract_strided_slice %6 {offsets = [0, 0, 24], sizes = [4, 8, 8], strides = [1, 1, 1]} : vector<4x8x96xf32> to vector<4x8x8xf32>
    %11 = tpu.concatenate %7, %8, %9, %10 in 0 : vector<4x8x8xf32>, vector<4x8x8xf32>, vector<4x8x8xf32>, vector<4x8x8xf32> -> vector<16x8x8xf32>
    %12 = vector.extract_strided_slice %6 {offsets = [0, 0, 32], sizes = [4, 8, 8], strides = [1, 1, 1]} : vector<4x8x96xf32> to vector<4x8x8xf32>
    %13 = vector.extract_strided_slice %6 {offsets = [0, 0, 40], sizes = [4, 8, 8], strides = [1, 1, 1]} : vector<4x8x96xf32> to vector<4x8x8xf32>
    %14 = vector.extract_strided_slice %6 {offsets = [0, 0, 48], sizes = [4, 8, 8], strides = [1, 1, 1]} : vector<4x8x96xf32> to vector<4x8x8xf32>
    %15 = vector.extract_strided_slice %6 {offsets = [0, 0, 56], sizes = [4, 8, 8], strides = [1, 1, 1]} : vector<4x8x96xf32> to vector<4x8x8xf32>
    %16 = tpu.concatenate %12, %13, %14, %15 in 0 : vector<4x8x8xf32>, vector<4x8x8xf32>, vector<4x8x8xf32>, vector<4x8x8xf32> -> vector<16x8x8xf32>
    %17 = vector.extract_strided_slice %6 {offsets = [0, 0, 64], sizes = [4, 8, 8], strides = [1, 1, 1]} : vector<4x8x96xf32> to vector<4x8x8xf32>
    %18 = vector.extract_strided_slice %6 {offsets = [0, 0, 72], sizes = [4, 8, 8], strides = [1, 1, 1]} : vector<4x8x96xf32> to vector<4x8x8xf32>
    %19 = vector.extract_strided_slice %6 {offsets = [0, 0, 80], sizes = [4, 8, 8], strides = [1, 1, 1]} : vector<4x8x96xf32> to vector<4x8x8xf32>
    %20 = vector.extract_strided_slice %6 {offsets = [0, 0, 88], sizes = [4, 8, 8], strides = [1, 1, 1]} : vector<4x8x96xf32> to vector<4x8x8xf32>
    %21 = tpu.concatenate %17, %18, %19, %20 in 0 : vector<4x8x8xf32>, vector<4x8x8xf32>, vector<4x8x8xf32>, vector<4x8x8xf32> -> vector<16x8x8xf32>
    "tpu.trace_start"() <{level = 10 : i32, message = "bqd,bkd->bqk"}> : () -> ()
    %cst_5 = arith.constant dense<0.000000e+00> : vector<16x8x8xf32>
    %22 = tpu.matmul %11, %16, %cst_5 {dimension_numbers = #tpu.dot_dimension_numbers<[2], [2], [1], [1], [0, 0, 0, 1, 1, 1], [0], [0]>} : vector<16x8x8xf32>, vector<16x8x8xf32>, vector<16x8x8xf32> -> vector<16x8x8xf32>
    "tpu.trace_stop"() : () -> ()
    %cst_6 = arith.constant 0.353553385 : f32
    %23 = vector.broadcast %cst_6 : f32 to vector<16x8x8xf32>
    %24 = arith.mulf %22, %23 : vector<16x8x8xf32>
    %cst_7 = arith.constant dense<0xFF800000> : vector<16x8xf32>
    %25 = vector.multi_reduction <maximumf>, %24, %cst_7 [2] : vector<16x8x8xf32> to vector<16x8xf32>
    %26 = vector.shape_cast %25 : vector<16x8xf32> to vector<16x8x1xf32>
    %27 = vector.broadcast %26 : vector<16x8x1xf32> to vector<16x8x8xf32>
    %28 = arith.subf %24, %27 : vector<16x8x8xf32>
    %29 = math.exp %28 : vector<16x8x8xf32>
    %cst_8 = arith.constant dense<0.000000e+00> : vector<16x8xf32>
    %30 = vector.multi_reduction <add>, %29, %cst_8 [2] : vector<16x8x8xf32> to vector<16x8xf32>
    %31 = vector.shape_cast %30 : vector<16x8xf32> to vector<16x8x1xf32>
    %32 = tpu.reciprocal %31 {approx = true} : vector<16x8x1xf32> -> vector<16x8x1xf32>
    %33 = vector.broadcast %32 : vector<16x8x1xf32> to vector<16x8x8xf32>
    %34 = arith.mulf %29, %33 : vector<16x8x8xf32>
    "tpu.trace_start"() <{level = 10 : i32, message = "bqk,bkd->bqd"}> : () -> ()
    %cst_9 = arith.constant dense<0.000000e+00> : vector<16x8x8xf32>
    %35 = tpu.matmul %34, %21, %cst_9 {dimension_numbers = #tpu.dot_dimension_numbers<[2], [1], [1], [2], [0, 0, 0, 1, 1, 2], [0], [0]>} : vector<16x8x8xf32>, vector<16x8x8xf32>, vector<16x8x8xf32> -> vector<16x8x8xf32>
    "tpu.trace_stop"() : () -> ()
    %36 = vector.extract_strided_slice %35 {offsets = [0, 0, 0], sizes = [4, 8, 8], strides = [1, 1, 1]} : vector<16x8x8xf32> to vector<4x8x8xf32>
    %37 = vector.shape_cast %36 : vector<4x8x8xf32> to vector<32x8xf32>
    %38 = vector.extract_strided_slice %35 {offsets = [4, 0, 0], sizes = [4, 8, 8], strides = [1, 1, 1]} : vector<16x8x8xf32> to vector<4x8x8xf32>
    %39 = vector.shape_cast %38 : vector<4x8x8xf32> to vector<32x8xf32>
    %40 = vector.extract_strided_slice %35 {offsets = [8, 0, 0], sizes = [4, 8, 8], strides = [1, 1, 1]} : vector<16x8x8xf32> to vector<4x8x8xf32>
    %41 = vector.shape_cast %40 : vector<4x8x8xf32> to vector<32x8xf32>
    %42 = vector.extract_strided_slice %35 {offsets = [12, 0, 0], sizes = [4, 8, 8], strides = [1, 1, 1]} : vector<16x8x8xf32> to vector<4x8x8xf32>
    %43 = vector.shape_cast %42 : vector<4x8x8xf32> to vector<32x8xf32>
    %44 = tpu.concatenate %37, %39, %41, %43 in 1 : vector<32x8xf32>, vector<32x8xf32>, vector<32x8xf32>, vector<32x8xf32> -> vector<32x32xf32>
    %c0_10 = arith.constant 0 : index
    %c0_11 = arith.constant 0 : index
    %45 = vector.load %arg4[%c0_10, %c0_11] : memref<32x32xf32, #tpu.memory_space<vmem>>, vector<32x32xf32>
    %cst_12 = arith.constant dense<0.000000e+00> : vector<32x32xf32>
    %46 = tpu.matmul %44, %45, %cst_12 {dimension_numbers = #tpu.dot_dimension_numbers<[1], [0], [0], [1], [0, 0, 1, 1], [], []>} : vector<32x32xf32>, vector<32x32xf32>, vector<32x32xf32> -> vector<32x32xf32>
    %c0_13 = arith.constant 0 : index
    %c0_14 = arith.constant 0 : index
    %47 = vector.load %arg5[%c0_13, %c0_14] : memref<1x32xf32, #tpu.memory_space<vmem>>, vector<1x32xf32>
    %48 = vector.broadcast %47 : vector<1x32xf32> to vector<32x32xf32>
    %49 = arith.addf %46, %48 : vector<32x32xf32>
    %50 = arith.addf %0, %49 : vector<32x32xf32>
    %c0_15 = arith.constant 0 : index
    %c0_16 = arith.constant 0 : index
    %51 = vector.load %arg6[%c0_15, %c0_16] : memref<1x32xf32, #tpu.memory_space<vmem>>, vector<1x32xf32>
    %c0_17 = arith.constant 0 : index
    %c0_18 = arith.constant 0 : index
    %52 = vector.load %arg7[%c0_17, %c0_18] : memref<1x32xf32, #tpu.memory_space<vmem>>, vector<1x32xf32>
    %cst_19 = arith.constant dense<0.000000e+00> : vector<32xf32>
    %53 = vector.multi_reduction <add>, %50, %cst_19 [1] : vector<32x32xf32> to vector<32xf32>
    %54 = vector.shape_cast %53 : vector<32xf32> to vector<32x1xf32>
    %cst_20 = arith.constant 3.200000e+01 : f32
    %55 = vector.broadcast %cst_20 : f32 to vector<32x1xf32>
    %56 = arith.divf %54, %55 : vector<32x1xf32>
    %57 = vector.broadcast %56 : vector<32x1xf32> to vector<32x32xf32>
    %58 = arith.subf %50, %57 : vector<32x32xf32>
    %59 = arith.mulf %58, %58 : vector<32x32xf32>
    %cst_21 = arith.constant dense<0.000000e+00> : vector<32xf32>
    %60 = vector.multi_reduction <add>, %59, %cst_21 [1] : vector<32x32xf32> to vector<32xf32>
    %61 = vector.shape_cast %60 : vector<32xf32> to vector<32x1xf32>
    %cst_22 = arith.constant 3.200000e+01 : f32
    %62 = vector.broadcast %cst_22 : f32 to vector<32x1xf32>
    %63 = arith.divf %61, %62 : vector<32x1xf32>
    %cst_23 = arith.constant 9.99999974E-6 : f32
    %64 = vector.broadcast %cst_23 : f32 to vector<32x1xf32>
    %65 = arith.addf %63, %64 : vector<32x1xf32>
    %66 = math.rsqrt %65 : vector<32x1xf32>
    %67 = vector.broadcast %66 : vector<32x1xf32> to vector<32x32xf32>
    %68 = arith.mulf %58, %67 : vector<32x32xf32>
    %69 = vector.broadcast %51 : vector<1x32xf32> to vector<32x32xf32>
    %70 = arith.mulf %68, %69 : vector<32x32xf32>
    %71 = vector.broadcast %52 : vector<1x32xf32> to vector<32x32xf32>
    %72 = arith.addf %70, %71 : vector<32x32xf32>
    %cst_24 = arith.constant 0.000000e+00 : f32
    %73 = vector.broadcast %cst_24 : f32 to vector<32x32xf32>
    %c0_25 = arith.constant 0 : index
    %c0_26 = arith.constant 0 : index
    %74 = vector.load %arg11[%c0_25, %c0_26] : memref<1x32xf32, #tpu.memory_space<vmem>>, vector<1x32xf32>
    %75 = vector.broadcast %74 : vector<1x32xf32> to vector<32x32xf32>
    %76 = arith.addf %73, %75 : vector<32x32xf32>
    %c0_27 = arith.constant 0 : index
    %c0_28 = arith.constant 0 : index
    %77 = vector.load %arg8[%c0_27, %c0_28] : memref<32x64xf32, #tpu.memory_space<vmem>>, vector<32x64xf32>
    %cst_29 = arith.constant dense<0.000000e+00> : vector<32x64xf32>
    %78 = tpu.matmul %72, %77, %cst_29 {dimension_numbers = #tpu.dot_dimension_numbers<[1], [0], [0], [1], [0, 0, 1, 1], [], []>} : vector<32x32xf32>, vector<32x64xf32>, vector<32x64xf32> -> vector<32x64xf32>
    %c0_30 = arith.constant 0 : index
    %c0_31 = arith.constant 0 : index
    %79 = vector.load %arg9[%c0_30, %c0_31] : memref<1x64xf32, #tpu.memory_space<vmem>>, vector<1x64xf32>
    %80 = vector.broadcast %79 : vector<1x64xf32> to vector<32x64xf32>
    %81 = arith.addf %78, %80 : vector<32x64xf32>
    %cst_32 = arith.constant 0.000000e+00 : f32
    %82 = vector.broadcast %cst_32 : f32 to vector<32x64xf32>
    %83 = arith.maximumf %81, %82 : vector<32x64xf32>
    %c0_33 = arith.constant 0 : index
    %c0_34 = arith.constant 0 : index
    %84 = vector.load %arg10[%c0_33, %c0_34] : memref<64x32xf32, #tpu.memory_space<vmem>>, vector<64x32xf32>
    %cst_35 = arith.constant dense<0.000000e+00> : vector<32x32xf32>
    %85 = tpu.matmul %83, %84, %cst_35 {dimension_numbers = #tpu.dot_dimension_numbers<[1], [0], [0], [1], [0, 0, 1, 1], [], []>} : vector<32x64xf32>, vector<64x32xf32>, vector<32x32xf32> -> vector<32x32xf32>
    %86 = arith.addf %76, %85 : vector<32x32xf32>
    %87 = arith.addf %72, %86 : vector<32x32xf32>
    %c0_36 = arith.constant 0 : index
    %c0_37 = arith.constant 0 : index
    %88 = vector.load %arg12[%c0_36, %c0_37] : memref<1x32xf32, #tpu.memory_space<vmem>>, vector<1x32xf32>
    %c0_38 = arith.constant 0 : index
    %c0_39 = arith.constant 0 : index
    %89 = vector.load %arg13[%c0_38, %c0_39] : memref<1x32xf32, #tpu.memory_space<vmem>>, vector<1x32xf32>
    %cst_40 = arith.constant dense<0.000000e+00> : vector<32xf32>
    %90 = vector.multi_reduction <add>, %87, %cst_40 [1] : vector<32x32xf32> to vector<32xf32>
    %91 = vector.shape_cast %90 : vector<32xf32> to vector<32x1xf32>
    %cst_41 = arith.constant 3.200000e+01 : f32
    %92 = vector.broadcast %cst_41 : f32 to vector<32x1xf32>
    %93 = arith.divf %91, %92 : vector<32x1xf32>
    %94 = vector.broadcast %93 : vector<32x1xf32> to vector<32x32xf32>
    %95 = arith.subf %87, %94 : vector<32x32xf32>
    %96 = arith.mulf %95, %95 : vector<32x32xf32>
    %cst_42 = arith.constant dense<0.000000e+00> : vector<32xf32>
    %97 = vector.multi_reduction <add>, %96, %cst_42 [1] : vector<32x32xf32> to vector<32xf32>
    %98 = vector.shape_cast %97 : vector<32xf32> to vector<32x1xf32>
    %cst_43 = arith.constant 3.200000e+01 : f32
    %99 = vector.broadcast %cst_43 : f32 to vector<32x1xf32>
    %100 = arith.divf %98, %99 : vector<32x1xf32>
    %cst_44 = arith.constant 9.99999974E-6 : f32
    %101 = vector.broadcast %cst_44 : f32 to vector<32x1xf32>
    %102 = arith.addf %100, %101 : vector<32x1xf32>
    %103 = math.rsqrt %102 : vector<32x1xf32>
    %104 = vector.broadcast %103 : vector<32x1xf32> to vector<32x32xf32>
    %105 = arith.mulf %95, %104 : vector<32x32xf32>
    %106 = vector.broadcast %88 : vector<1x32xf32> to vector<32x32xf32>
    %107 = arith.mulf %105, %106 : vector<32x32xf32>
    %108 = vector.broadcast %89 : vector<1x32xf32> to vector<32x32xf32>
    %109 = arith.addf %107, %108 : vector<32x32xf32>
    %c0_45 = arith.constant 0 : index
    %c0_46 = arith.constant 0 : index
    %110 = vector.load %arg14[%c0_45, %c0_46] : memref<32x32xf32, #tpu.memory_space<vmem>>, vector<32x32xf32>
    tpu.vector_store %arg14[%c0_45, %c0_46], %109 {strides = array<i32>} : memref<32x32xf32, #tpu.memory_space<vmem>>, vector<32x32xf32>,
    return
  }
  func.func @transform_0(%arg0: i32) -> (i32, i32) {
    %c0_i32 = arith.constant 0 : i32
    %c0_i32_0 = arith.constant 0 : i32
    return %arg0, %c0_i32 : i32, i32
  }
  func.func @transform_1(%arg0: i32) -> (i32, i32) {
    %c0_i32 = arith.constant 0 : i32
    %c0_i32_0 = arith.constant 0 : i32
    %c0_i32_1 = arith.constant 0 : i32
    return %c0_i32, %c0_i32_0 : i32, i32
  }
  func.func @transform_2(%arg0: i32) -> (i32, i32) {
    %c0_i32 = arith.constant 0 : i32
    %c0_i32_0 = arith.constant 0 : i32
    %c0_i32_1 = arith.constant 0 : i32
    return %c0_i32, %c0_i32_0 : i32, i32
  }
  func.func @transform_3(%arg0: i32) -> (i32, i32) {
    %c0_i32 = arith.constant 0 : i32
    %c0_i32_0 = arith.constant 0 : i32
    %c0_i32_1 = arith.constant 0 : i32
    return %c0_i32, %c0_i32_0 : i32, i32
  }
  func.func @transform_4(%arg0: i32) -> (i32, i32) {
    %c0_i32 = arith.constant 0 : i32
    %c0_i32_0 = arith.constant 0 : i32
    %c0_i32_1 = arith.constant 0 : i32
    return %c0_i32, %c0_i32_0 : i32, i32
  }
  func.func @transform_5(%arg0: i32) -> (i32, i32) {
    %c0_i32 = arith.constant 0 : i32
    %c0_i32_0 = arith.constant 0 : i32
    %c0_i32_1 = arith.constant 0 : i32
    return %c0_i32, %c0_i32_0 : i32, i32
  }
  func.func @transform_6(%arg0: i32) -> (i32, i32) {
    %c0_i32 = arith.constant 0 : i32
    %c0_i32_0 = arith.constant 0 : i32
    %c0_i32_1 = arith.constant 0 : i32
    return %c0_i32, %c0_i32_0 : i32, i32
  }
  func.func @transform_7(%arg0: i32) -> (i32, i32) {
    %c0_i32 = arith.constant 0 : i32
    %c0_i32_0 = arith.constant 0 : i32
    %c0_i32_1 = arith.constant 0 : i32
    return %c0_i32, %c0_i32_0 : i32, i32
  }
  func.func @transform_8(%arg0: i32) -> (i32, i32) {
    %c0_i32 = arith.constant 0 : i32
    %c0_i32_0 = arith.constant 0 : i32
    %c0_i32_1 = arith.constant 0 : i32
    return %c0_i32, %c0_i32_0 : i32, i32
  }
  func.func @transform_9(%arg0: i32) -> (i32, i32) {
    %c0_i32 = arith.constant 0 : i32
    %c0_i32_0 = arith.constant 0 : i32
    %c0_i32_1 = arith.constant 0 : i32
    return %c0_i32, %c0_i32_0 : i32, i32
  }
  func.func @transform_10(%arg0: i32) -> (i32, i32) {
    %c0_i32 = arith.constant 0 : i32
    %c0_i32_0 = arith.constant 0 : i32
    %c0_i32_1 = arith.constant 0 : i32
    return %c0_i32, %c0_i32_0 : i32, i32
  }
  func.func @transform_11(%arg0: i32) -> (i32, i32) {
    %c0_i32 = arith.constant 0 : i32
    %c0_i32_0 = arith.constant 0 : i32
    %c0_i32_1 = arith.constant 0 : i32
    return %c0_i32, %c0_i32_0 : i32, i32
  }
  func.func @transform_12(%arg0: i32) -> (i32, i32) {
    %c0_i32 = arith.constant 0 : i32
    %c0_i32_0 = arith.constant 0 : i32
    %c0_i32_1 = arith.constant 0 : i32
    return %c0_i32, %c0_i32_0 : i32, i32
  }
  func.func @transform_13(%arg0: i32) -> (i32, i32) {
    %c0_i32 = arith.constant 0 : i32
    %c0_i32_0 = arith.constant 0 : i32
    return %arg0, %c0_i32 : i32, i32
  }
}

</mosaic_0001>

<llo_original>
// kernel: tpu_custom_call.1
$region0: #{tpu_custom_call.1}
  #allocation0 [shape = 'u32[]', space=smem, size = 0x4, offset = 0x4, fixed_abs, tag = 'smem constant byte address 0x4 - core index']
  #allocation1 [shape = 'u32[144,128]{1,0:T(1,128)}', space=vmem, size = 0x12000, scoped, tag = 'internal scratch']
  %s0 = inlined_call_operand.vmem [shape: f32[64,32], index: 0, kind: input, shape index: {}]
  %s1 = inlined_call_operand.vmem [shape: f32[32,96], index: 1, kind: input, shape index: {}]
  %s2 = inlined_call_operand.vmem [shape: f32[1,96], index: 2, kind: input, shape index: {}]
  %s3 = inlined_call_operand.vmem [shape: f32[32,32], index: 3, kind: input, shape index: {}]
  %s4 = inlined_call_operand.vmem [shape: f32[1,32], index: 4, kind: input, shape index: {}]
  %s5 = inlined_call_operand.vmem [shape: f32[1,32], index: 5, kind: input, shape index: {}]
  %s6 = inlined_call_operand.vmem [shape: f32[1,32], index: 6, kind: input, shape index: {}]
  %s7 = inlined_call_operand.vmem [shape: f32[32,64], index: 7, kind: input, shape index: {}]
  %s8 = inlined_call_operand.vmem [shape: f32[1,64], index: 8, kind: input, shape index: {}]
  %s9 = inlined_call_operand.vmem [shape: f32[64,32], index: 9, kind: input, shape index: {}]
  %s10 = inlined_call_operand.vmem [shape: f32[1,32], index: 10, kind: input, shape index: {}]
  %s11 = inlined_call_operand.vmem [shape: f32[1,32], index: 11, kind: input, shape index: {}]
  %s12 = inlined_call_operand.vmem [shape: f32[1,32], index: 12, kind: input, shape index: {}]
  %s13 = inlined_call_operand.vmem [shape: f32[64,32], index: 13, kind: output, shape index: {}]
  %s14 = sld [smem:[#allocation0]]
  $region85: #{tpu_custom_call.1} parent=0
    _
  %s16 = ssub.s32 1, %s14
  %s17 = scalar_select 0, %s16, %s14
  loop: start=0, step=1, limit=4
  $region2: #{tpu_custom_call.1} parent=0 // loop_pre_header
    _
  $region3: #{tpu_custom_call.1} parent=0 // loop_header
    %s19 = sphi 0, %s23
    %p20 = scmp.ge.s32.totalorder %s19, 4
    %s29 = sphi 0, %s31
    %s32 = sphi 0, %s29
    %s33 = sphi 0, %s32
    %s49 = sphi 0, %s33
    %s53 = sphi 0, %s53
    %s55 = sphi 0, %s53
    %s56 = sphi 0, %s55
    %s70 = sphi 0, %s56
    %s74 = sphi 0, %s74
    %s76 = sphi 0, %s74
    %s77 = sphi 0, %s76
    %s91 = sphi 0, %s77
    %s95 = sphi 0, %s95
    %s97 = sphi 0, %s95
    %s98 = sphi 0, %s97
    %s112 = sphi 0, %s98
    %s116 = sphi 0, %s116
    %s118 = sphi 0, %s116
    %s119 = sphi 0, %s118
    %s133 = sphi 0, %s119
    %s137 = sphi 0, %s137
    %s139 = sphi 0, %s137
    %s140 = sphi 0, %s139
    %s154 = sphi 0, %s140
    %s158 = sphi 0, %s158
    %s160 = sphi 0, %s158
    %s161 = sphi 0, %s160
    %s175 = sphi 0, %s161
    %s179 = sphi 0, %s179
    %s181 = sphi 0, %s179
    %s182 = sphi 0, %s181
    %s196 = sphi 0, %s182
    %s200 = sphi 0, %s200
    %s202 = sphi 0, %s200
    %s203 = sphi 0, %s202
    %s217 = sphi 0, %s203
    %s221 = sphi 0, %s221
    %s223 = sphi 0, %s221
    %s224 = sphi 0, %s223
    %s238 = sphi 0, %s224
    %s242 = sphi 0, %s242
    %s244 = sphi 0, %s242
    %s245 = sphi 0, %s244
    %s259 = sphi 0, %s245
    %s263 = sphi 0, %s263
    %s265 = sphi 0, %s263
    %s266 = sphi 0, %s265
    %s280 = sphi 0, %s266
    %s284 = sphi 0, %s284
    %s286 = sphi 0, %s284
    %s287 = sphi 0, %s286
    %s301 = sphi 0, %s287
    %s307 = sphi 0, %s309
    %s310 = sphi 0, %s307
    %s311 = sphi 0, %s310
    %s327 = sphi 0, %s311
  $region4: #{tpu_custom_call.1} parent=0 // loop_header_branch
    %22 = sbr.rel (%p20) target = $region8
  $region5: #{tpu_custom_call.1} parent=0 // loop_body
    %s24 = ssub.s32 %s19, 1
    %s25 = ssub.s32 %s19, 2
    %s26 = sadd.s32 %s19, 1
    %s27 = ssub.s32 %s19, %s26
    %p28 = scmp.eq.s32.totalorder %s27, 0
    %s30 = sadd.s32 %s29, 1
    %s31 = scalar_select %p28, %s29, %s30
    %p34 = pneg %p28
    %p35 = scmp.eq.s32.totalorder %s19, 1
    %p36 = por %p34, %p35
    %p37 = scmp.ne.s32.totalorder %s29, %s32
    %p38 = scmp.eq.s32.totalorder %s19, 0
    %p39 = por %p37, %p38
    %p40 = scmp.ne.s32.totalorder %s29, %s32
    %p41 = scmp.eq.s32.totalorder %s24, 1
    %p42 = por %p40, %p41
    %p43 = scmp.ne.s32.totalorder %s32, %s33
    %p44 = scmp.eq.s32.totalorder %s24, 0
    %p45 = por %p43, %p44
    %p46 = scmp.ne.s32.totalorder %s32, %s33
    %p47 = scmp.eq.s32.totalorder %s25, 1
    %p48 = por %p46, %p47
    %p50 = scmp.ne.s32.totalorder %s33, %s49
    %p51 = scmp.eq.s32.totalorder %s25, 0
    %p52 = por %p50, %p51
    %s54 = sadd.s32 %s53, 1
    %p57 = scmp.eq.s32.totalorder %s19, 1
    %p58 = scmp.ne.s32.totalorder %s53, %s55
    %p59 = scmp.eq.s32.totalorder %s19, 0
    %p60 = por %p58, %p59
    %p61 = scmp.ne.s32.totalorder %s53, %s55
    %p62 = scmp.eq.s32.totalorder %s24, 1
    %p63 = por %p61, %p62
    %p64 = scmp.ne.s32.totalorder %s55, %s56
    %p65 = scmp.eq.s32.totalorder %s24, 0
    %p66 = por %p64, %p65
    %p67 = scmp.ne.s32.totalorder %s55, %s56
    %p68 = scmp.eq.s32.totalorder %s25, 1
    %p69 = por %p67, %p68
    %p71 = scmp.ne.s32.totalorder %s56, %s70
    %p72 = scmp.eq.s32.totalorder %s25, 0
    %p73 = por %p71, %p72
    %s75 = sadd.s32 %s74, 1
    %p78 = scmp.eq.s32.totalorder %s19, 1
    %p79 = scmp.ne.s32.totalorder %s74, %s76
    %p80 = scmp.eq.s32.totalorder %s19, 0
    %p81 = por %p79, %p80
    %p82 = scmp.ne.s32.totalorder %s74, %s76
    %p83 = scmp.eq.s32.totalorder %s24, 1
    %p84 = por %p82, %p83
    %p85 = scmp.ne.s32.totalorder %s76, %s77
    %p86 = scmp.eq.s32.totalorder %s24, 0
    %p87 = por %p85, %p86
    %p88 = scmp.ne.s32.totalorder %s76, %s77
    %p89 = scmp.eq.s32.totalorder %s25, 1
    %p90 = por %p88, %p89
    %p92 = scmp.ne.s32.totalorder %s77, %s91
    %p93 = scmp.eq.s32.totalorder %s25, 0
    %p94 = por %p92, %p93
    %s96 = sadd.s32 %s95, 1
    %p99 = scmp.eq.s32.totalorder %s19, 1
    %p100 = scmp.ne.s32.totalorder %s95, %s97
    %p101 = scmp.eq.s32.totalorder %s19, 0
    %p102 = por %p100, %p101
    %p103 = scmp.ne.s32.totalorder %s95, %s97
    %p104 = scmp.eq.s32.totalorder %s24, 1
    %p105 = por %p103, %p104
    %p106 = scmp.ne.s32.totalorder %s97, %s98
    %p107 = scmp.eq.s32.totalorder %s24, 0
    %p108 = por %p106, %p107
    %p109 = scmp.ne.s32.totalorder %s97, %s98
    %p110 = scmp.eq.s32.totalorder %s25, 1
    %p111 = por %p109, %p110
    %p113 = scmp.ne.s32.totalorder %s98, %s112
    %p114 = scmp.eq.s32.totalorder %s25, 0
    %p115 = por %p113, %p114
    %s117 = sadd.s32 %s116, 1
    %p120 = scmp.eq.s32.totalorder %s19, 1
    %p121 = scmp.ne.s32.totalorder %s116, %s118
    %p122 = scmp.eq.s32.totalorder %s19, 0
    %p123 = por %p121, %p122
    %p124 = scmp.ne.s32.totalorder %s116, %s118
    %p125 = scmp.eq.s32.totalorder %s24, 1
    %p126 = por %p124, %p125
    %p127 = scmp.ne.s32.totalorder %s118, %s119
    %p128 = scmp.eq.s32.totalorder %s24, 0
    %p129 = por %p127, %p128
    %p130 = scmp.ne.s32.totalorder %s118, %s119
    %p131 = scmp.eq.s32.totalorder %s25, 1
    %p132 = por %p130, %p131
    %p134 = scmp.ne.s32.totalorder %s119, %s133
    %p135 = scmp.eq.s32.totalorder %s25, 0
    %p136 = por %p134, %p135
    %s138 = sadd.s32 %s137, 1
    %p141 = scmp.eq.s32.totalorder %s19, 1
    %p142 = scmp.ne.s32.totalorder %s137, %s139
    %p143 = scmp.eq.s32.totalorder %s19, 0
    %p144 = por %p142, %p143
    %p145 = scmp.ne.s32.totalorder %s137, %s139
    %p146 = scmp.eq.s32.totalorder %s24, 1
    %p147 = por %p145, %p146
    %p148 = scmp.ne.s32.totalorder %s139, %s140
    %p149 = scmp.eq.s32.totalorder %s24, 0
    %p150 = por %p148, %p149
    %p151 = scmp.ne.s32.totalorder %s139, %s140
    %p152 = scmp.eq.s32.totalorder %s25, 1
    %p153 = por %p151, %p152
    %p155 = scmp.ne.s32.totalorder %s140, %s154
    %p156 = scmp.eq.s32.totalorder %s25, 0
    %p157 = por %p155, %p156
    %s159 = sadd.s32 %s158, 1
    %p162 = scmp.eq.s32.totalorder %s19, 1
    %p163 = scmp.ne.s32.totalorder %s158, %s160
    %p164 = scmp.eq.s32.totalorder %s19, 0
    %p165 = por %p163, %p164
    %p166 = scmp.ne.s32.totalorder %s158, %s160
    %p167 = scmp.eq.s32.totalorder %s24, 1
    %p168 = por %p166, %p167
    %p169 = scmp.ne.s32.totalorder %s160, %s161
    %p170 = scmp.eq.s32.totalorder %s24, 0
    %p171 = por %p169, %p170
    %p172 = scmp.ne.s32.totalorder %s160, %s161
    %p173 = scmp.eq.s32.totalorder %s25, 1
    %p174 = por %p172, %p173
    %p176 = scmp.ne.s32.totalorder %s161, %s175
    %p177 = scmp.eq.s32.totalorder %s25, 0
    %p178 = por %p176, %p177
    %s180 = sadd.s32 %s179, 1
    %p183 = scmp.eq.s32.totalorder %s19, 1
    %p184 = scmp.ne.s32.totalorder %s179, %s181
    %p185 = scmp.eq.s32.totalorder %s19, 0
    %p186 = por %p184, %p185
    %p187 = scmp.ne.s32.totalorder %s179, %s181
    %p188 = scmp.eq.s32.totalorder %s24, 1
    %p189 = por %p187, %p188
    %p190 = scmp.ne.s32.totalorder %s181, %s182
    %p191 = scmp.eq.s32.totalorder %s24, 0
    %p192 = por %p190, %p191
    %p193 = scmp.ne.s32.totalorder %s181, %s182
    %p194 = scmp.eq.s32.totalorder %s25, 1
    %p195 = por %p193, %p194
    %p197 = scmp.ne.s32.totalorder %s182, %s196
    %p198 = scmp.eq.s32.totalorder %s25, 0
    %p199 = por %p197, %p198
    %s201 = sadd.s32 %s200, 1
    %p204 = scmp.eq.s32.totalorder %s19, 1
    %p205 = scmp.ne.s32.totalorder %s200, %s202
    %p206 = scmp.eq.s32.totalorder %s19, 0
    %p207 = por %p205, %p206
    %p208 = scmp.ne.s32.totalorder %s200, %s202
    %p209 = scmp.eq.s32.totalorder %s24, 1
    %p210 = por %p208, %p209
    %p211 = scmp.ne.s32.totalorder %s202, %s203
    %p212 = scmp.eq.s32.totalorder %s24, 0
    %p213 = por %p211, %p212
    %p214 = scmp.ne.s32.totalorder %s202, %s203
    %p215 = scmp.eq.s32.totalorder %s25, 1
    %p216 = por %p214, %p215
    %p218 = scmp.ne.s32.totalorder %s203, %s217
    %p219 = scmp.eq.s32.totalorder %s25, 0
    %p220 = por %p218, %p219
    %s222 = sadd.s32 %s221, 1
    %p225 = scmp.eq.s32.totalorder %s19, 1
    %p226 = scmp.ne.s32.totalorder %s221, %s223
    %p227 = scmp.eq.s32.totalorder %s19, 0
    %p228 = por %p226, %p227
    %p229 = scmp.ne.s32.totalorder %s221, %s223
    %p230 = scmp.eq.s32.totalorder %s24, 1
    %p231 = por %p229, %p230
    %p232 = scmp.ne.s32.totalorder %s223, %s224
    %p233 = scmp.eq.s32.totalorder %s24, 0
    %p234 = por %p232, %p233
    %p235 = scmp.ne.s32.totalorder %s223, %s224
    %p236 = scmp.eq.s32.totalorder %s25, 1
    %p237 = por %p235, %p236
    %p239 = scmp.ne.s32.totalorder %s224, %s238
    %p240 = scmp.eq.s32.totalorder %s25, 0
    %p241 = por %p239, %p240
    %s243 = sadd.s32 %s242, 1
    %p246 = scmp.eq.s32.totalorder %s19, 1
    %p247 = scmp.ne.s32.totalorder %s242, %s244
    %p248 = scmp.eq.s32.totalorder %s19, 0
    %p249 = por %p247, %p248
    %p250 = scmp.ne.s32.totalorder %s242, %s244
    %p251 = scmp.eq.s32.totalorder %s24, 1
    %p252 = por %p250, %p251
    %p253 = scmp.ne.s32.totalorder %s244, %s245
    %p254 = scmp.eq.s32.totalorder %s24, 0
    %p255 = por %p253, %p254
    %p256 = scmp.ne.s32.totalorder %s244, %s245
    %p257 = scmp.eq.s32.totalorder %s25, 1
    %p258 = por %p256, %p257
    %p260 = scmp.ne.s32.totalorder %s245, %s259
    %p261 = scmp.eq.s32.totalorder %s25, 0
    %p262 = por %p260, %p261
    %s264 = sadd.s32 %s263, 1
    %p267 = scmp.eq.s32.totalorder %s19, 1
    %p268 = scmp.ne.s32.totalorder %s263, %s265
    %p269 = scmp.eq.s32.totalorder %s19, 0
    %p270 = por %p268, %p269
    %p271 = scmp.ne.s32.totalorder %s263, %s265
    %p272 = scmp.eq.s32.totalorder %s24, 1
    %p273 = por %p271, %p272
    %p274 = scmp.ne.s32.totalorder %s265, %s266
    %p275 = scmp.eq.s32.totalorder %s24, 0
    %p276 = por %p274, %p275
    %p277 = scmp.ne.s32.totalorder %s265, %s266
    %p278 = scmp.eq.s32.totalorder %s25, 1
    %p279 = por %p277, %p278
    %p281 = scmp.ne.s32.totalorder %s266, %s280
    %p282 = scmp.eq.s32.totalorder %s25, 0
    %p283 = por %p281, %p282
    %s285 = sadd.s32 %s284, 1
    %p288 = scmp.eq.s32.totalorder %s19, 1
    %p289 = scmp.ne.s32.totalorder %s284, %s286
    %p290 = scmp.eq.s32.totalorder %s19, 0
    %p291 = por %p289, %p290
    %p292 = scmp.ne.s32.totalorder %s284, %s286
    %p293 = scmp.eq.s32.totalorder %s24, 1
    %p294 = por %p292, %p293
    %p295 = scmp.ne.s32.totalorder %s286, %s287
    %p296 = scmp.eq.s32.totalorder %s24, 0
    %p297 = por %p295, %p296
    %p298 = scmp.ne.s32.totalorder %s286, %s287
    %p299 = scmp.eq.s32.totalorder %s25, 1
    %p300 = por %p298, %p299
    %p302 = scmp.ne.s32.totalorder %s287, %s301
    %p303 = scmp.eq.s32.totalorder %s25, 0
    %p304 = por %p302, %p303
    %s305 = ssub.s32 %s19, %s26
    %p306 = scmp.eq.s32.totalorder %s305, 0
    %s308 = sadd.s32 %s307, 1
    %s309 = scalar_select %p306, %s307, %s308
    %p312 = pneg %p306
    %p313 = scmp.eq.s32.totalorder %s19, 1
    %p314 = por %p312, %p313
    %p315 = scmp.ne.s32.totalorder %s307, %s310
    %p316 = scmp.eq.s32.totalorder %s19, 0
    %p317 = por %p315, %p316
    %p318 = scmp.ne.s32.totalorder %s307, %s310
    %p319 = scmp.eq.s32.totalorder %s24, 1
    %p320 = por %p318, %p319
    %p321 = scmp.ne.s32.totalorder %s310, %s311
    %p322 = scmp.eq.s32.totalorder %s24, 0
    %p323 = por %p321, %p322
    %p324 = scmp.ne.s32.totalorder %s310, %s311
    %p325 = scmp.eq.s32.totalorder %s25, 1
    %p326 = por %p324, %p325
    %p328 = scmp.ne.s32.totalorder %s311, %s327
    %p329 = scmp.eq.s32.totalorder %s25, 0
    %p330 = por %p328, %p329
    %p331 = scmp.le.s32.totalorder 1, %s19
    %p332 = scmp.lt.s32.totalorder %s19, 3
    %p333 = pnand %p331, %p332
    %p334 = pneg %p333
    // Predicated region
    $region9: #{tpu_custom_call.1} parent=5 // pred_check
      _
    $region10: #{tpu_custom_call.1} parent=5 // pred_check_branch
      %336 = sbr.rel (%p333) target = $region12
    $region11: #{tpu_custom_call.1} parent=5 // pred_region
      %s337 = ssub.s32 %s19, 1
      // Predicated region
      $region13: #{tpu_custom_call.1} parent=11 // pred_check
        %p338 = pneg %p66
      $region14: #{tpu_custom_call.1} parent=11 // pred_check_branch
        %340 = sbr.rel (%p338) target = $region16
      $region15: #{tpu_custom_call.1} parent=11 // pred_region
        _
      $region16: #{tpu_custom_call.1} parent=11 // pred_fallthru
        _
      // Predicated region
      $region17: #{tpu_custom_call.1} parent=11 // pred_check
        %p341 = pneg %p87
      $region18: #{tpu_custom_call.1} parent=11 // pred_check_branch
        %343 = sbr.rel (%p341) target = $region20
      $region19: #{tpu_custom_call.1} parent=11 // pred_region
        _
      $region20: #{tpu_custom_call.1} parent=11 // pred_fallthru
        _
      // Predicated region
      $region21: #{tpu_custom_call.1} parent=11 // pred_check
        %p344 = pneg %p108
      $region22: #{tpu_custom_call.1} parent=11 // pred_check_branch
        %346 = sbr.rel (%p344) target = $region24
      $region23: #{tpu_custom_call.1} parent=11 // pred_region
        _
      $region24: #{tpu_custom_call.1} parent=11 // pred_fallthru
        _
      // Predicated region
      $region25: #{tpu_custom_call.1} parent=11 // pred_check
        %p347 = pneg %p129
      $region26: #{tpu_custom_call.1} parent=11 // pred_check_branch
        %349 = sbr.rel (%p347) target = $region28
      $region27: #{tpu_custom_call.1} parent=11 // pred_region
        _
      $region28: #{tpu_custom_call.1} parent=11 // pred_fallthru
        _
      // Predicated region
      $region29: #{tpu_custom_call.1} parent=11 // pred_check
        %p350 = pneg %p150
      $region30: #{tpu_custom_call.1} parent=11 // pred_check_branch
        %352 = sbr.rel (%p350) target = $region32
      $region31: #{tpu_custom_call.1} parent=11 // pred_region
        _
      $region32: #{tpu_custom_call.1} parent=11 // pred_fallthru
        _
      // Predicated region
      $region33: #{tpu_custom_call.1} parent=11 // pred_check
        %p353 = pneg %p171
      $region34: #{tpu_custom_call.1} parent=11 // pred_check_branch
        %355 = sbr.rel (%p353) target = $region36
      $region35: #{tpu_custom_call.1} parent=11 // pred_region
        _
      $region36: #{tpu_custom_call.1} parent=11 // pred_fallthru
        _
      // Predicated region
      $region37: #{tpu_custom_call.1} parent=11 // pred_check
        %p356 = pneg %p192
      $region38: #{tpu_custom_call.1} parent=11 // pred_check_branch
        %358 = sbr.rel (%p356) target = $region40
      $region39: #{tpu_custom_call.1} parent=11 // pred_region
        _
      $region40: #{tpu_custom_call.1} parent=11 // pred_fallthru
        _
      // Predicated region
      $region41: #{tpu_custom_call.1} parent=11 // pred_check
        %p359 = pneg %p213
      $region42: #{tpu_custom_call.1} parent=11 // pred_check_branch
        %361 = sbr.rel (%p359) target = $region44
      $region43: #{tpu_custom_call.1} parent=11 // pred_region
        _
      $region44: #{tpu_custom_call.1} parent=11 // pred_fallthru
        _
      // Predicated region
      $region45: #{tpu_custom_call.1} parent=11 // pred_check
        %p362 = pneg %p234
      $region46: #{tpu_custom_call.1} parent=11 // pred_check_branch
        %364 = sbr.rel (%p362) target = $region48
      $region47: #{tpu_custom_call.1} parent=11 // pred_region
        _
      $region48: #{tpu_custom_call.1} parent=11 // pred_fallthru
        _
      // Predicated region
      $region49: #{tpu_custom_call.1} parent=11 // pred_check
        %p365 = pneg %p255
      $region50: #{tpu_custom_call.1} parent=11 // pred_check_branch
        %367 = sbr.rel (%p365) target = $region52
      $region51: #{tpu_custom_call.1} parent=11 // pred_region
        _
      $region52: #{tpu_custom_call.1} parent=11 // pred_fallthru
        _
      // Predicated region
      $region53: #{tpu_custom_call.1} parent=11 // pred_check
        %p368 = pneg %p276
      $region54: #{tpu_custom_call.1} parent=11 // pred_check_branch
        %370 = sbr.rel (%p368) target = $region56
      $region55: #{tpu_custom_call.1} parent=11 // pred_region
        _
      $region56: #{tpu_custom_call.1} parent=11 // pred_fallthru
        _
      // Predicated region
      $region57: #{tpu_custom_call.1} parent=11 // pred_check
        %p371 = pneg %p297
      $region58: #{tpu_custom_call.1} parent=11 // pred_check_branch
        %373 = sbr.rel (%p371) target = $region60
      $region59: #{tpu_custom_call.1} parent=11 // pred_region
        _
      $region60: #{tpu_custom_call.1} parent=11 // pred_fallthru
        _
    $region12: #{tpu_custom_call.1} parent=5 // pred_fallthru
      _
    %p374 = scmp.lt.s32.totalorder %s19, 2
    // Predicated region
    $region61: #{tpu_custom_call.1} parent=5 // pred_check
      %p375 = pneg %p374
    $region62: #{tpu_custom_call.1} parent=5 // pred_check_branch
      %377 = sbr.rel (%p375) target = $region64
    $region63: #{tpu_custom_call.1} parent=5 // pred_region
      // Predicated region
      $region65: #{tpu_custom_call.1} parent=63 // pred_check
        %p378 = pneg %p39
      $region66: #{tpu_custom_call.1} parent=63 // pred_check_branch
        %380 = sbr.rel (%p378) target = $region68
      $region67: #{tpu_custom_call.1} parent=63 // pred_region
        %s381 = smul.u32 4, %s19
        %p382 = scmp.lt.s32.totalorder %s381, 7
        %s383 = scalar_select %p382, %s381, 7
        %s384 = smul.addr %s383, 8
        %s385 = scalar_lea.vmem %s0, %s384
        %s386 = smul.u32 4, %s19
      $region68: #{tpu_custom_call.1} parent=63 // pred_fallthru
        _
    $region64: #{tpu_custom_call.1} parent=5 // pred_fallthru
      _
    %p387 = scmp.le.s32.totalorder 1, %s19
    %p388 = scmp.lt.s32.totalorder %s19, 3
    %p389 = pnand %p387, %p388
    %p390 = pneg %p389
    // Predicated region
    $region69: #{tpu_custom_call.1} parent=5 // pred_check
      _
    $region70: #{tpu_custom_call.1} parent=5 // pred_check_branch
      %392 = sbr.rel (%p389) target = $region72
    $region71: #{tpu_custom_call.1} parent=5 // pred_region
      %s393 = ssub.s32 %s19, 1
      %s394 = smul.u32 4, %s24
      %p395 = scmp.lt.s32.totalorder %s394, 7
      %s396 = scalar_select %p395, %s394, 7
      %s397 = smul.addr %s396, 8
      %s398 = scalar_lea.vmem %s0, %s397
      %p399 = pneg %p45
      %p400 = pneg %p42
      %p401 = pneg %p66
      %p402 = pneg %p63
      %p403 = pneg %p87
      %p404 = pneg %p84
      %p405 = pneg %p108
      %p406 = pneg %p105
      %p407 = pneg %p129
      %p408 = pneg %p126
      %p409 = pneg %p150
      %p410 = pneg %p147
      %p411 = pneg %p171
      %p412 = pneg %p168
      %p413 = pneg %p192
      %p414 = pneg %p189
      %p415 = pneg %p213
      %p416 = pneg %p210
      %p417 = pneg %p234
      %p418 = pneg %p231
      %p419 = pneg %p255
      %p420 = pneg %p252
      %p421 = pneg %p276
      %p422 = pneg %p273
      %p423 = pneg %p297
      %p424 = pneg %p294
      %p425 = pneg %p323
      %p426 = pneg %p320
      %s427 = smul.u32 4, %s24
      %p428 = scmp.lt.s32.totalorder %s427, 7
      %s429 = scalar_select %p428, %s427, 7
      %s430 = smul.addr %s429, 8
      %s431 = scalar_lea.vmem %s13, %s430
      %s432 = smul.u32 4, %s24
      %p433 = scmp.lt.s32.totalorder %s432, 7
      %s434 = scalar_select %p433, %s432, 7
      %s435 = smul.addr %s434, 8
      %s436 = scalar_lea.vmem %s0, %s435
      %s437 = smul.u32 4, %s24
      %s438 = smul.u32 4, %s24
      %p439 = scmp.lt.s32.totalorder %s438, 7
      %s440 = scalar_select %p439, %s438, 7
      %s441 = smul.addr %s440, 8
      %s442 = scalar_lea.vmem %s13, %s441
      %s443 = smul.u32 4, %s24
      %v444 = vld [vmem:[%s436] sm:$0xff]
      %v445 = vld [vmem:[%s436 + $0x8] sm:$0xff]
      %v446 = vld [vmem:[%s436 + $0x10] sm:$0xff]
      %v447 = vld [vmem:[%s436 + $0x18] sm:$0xff]
      %v448 = vld [vmem:[%s1] sm:$0xff]
      %v449 = vld [vmem:[%s1 + $0x8] sm:$0xff]
      %v450 = vld [vmem:[%s1 + $0x10] sm:$0xff]
      %v451 = vld [vmem:[%s1 + $0x18] sm:$0xff]
      %v452 = vld [vmem:[%s2] sm:$0x1]
      %v454 = vlaneseq
      %v455 = vshrl.u32 %v454, 7
      %v456 = vsub.s32 0, %v455
      %v457 = vrot.slane %v452, %v456
      %vm459 = vcmask 261120
      %v461 = vsel %vm459, %v444, 0
      %v464 = vsel %vm459, %v445, 0
      %v467 = vsel %vm459, %v446, 0
      %v470 = vsel %vm459, %v447, 0
      %472 = vmatprep.subr.mxu0 0.0
      %473 = vmatpush1.msra.mxu0 %v448
      %474 = vmatprep.subr.mxu0 0.0
      %475 = vmatpush1.msra.mxu0 %v449
      %476 = vmatprep.subr.mxu0 0.0
      %477 = vmatpush1.msra.mxu0 %v450
      %478 = vmatprep.subr.mxu0 0.0
      %479 = vmatpush1.msra.mxu0 %v451
      %480 = vmatprep.subr.mxu0 0.0
      %481 = vmatpush1.msra.mxu0 0.0
      %482 = vmatprep.subr.mxu0 0.0
      %483 = vmatpush1.msra.mxu0 0.0
      %484 = vmatprep.subr.mxu0 0.0
      %485 = vmatpush1.msra.mxu0 0.0
      %486 = vmatprep.subr.mxu0 0.0
      %487 = vmatpush1.msra.mxu0 0.0
      %488 = vmatprep.subr.mxu0 0.0
      %489 = vmatpush1.msra.mxu0 0.0
      %490 = vmatprep.subr.mxu0 0.0
      %491 = vmatpush1.msra.mxu0 0.0
      %492 = vmatprep.subr.mxu0 0.0
      %493 = vmatpush1.msra.mxu0 0.0
      %494 = vmatprep.subr.mxu0 0.0
      %495 = vmatpush1.msra.mxu0 0.0
      %496 = vmatprep.subr.mxu0 0.0
      %497 = vmatpush1.msra.mxu0 0.0
      %498 = vmatprep.subr.mxu0 0.0
      %499 = vmatpush1.msra.mxu0 0.0
      %500 = vmatprep.subr.mxu0 0.0
      %501 = vmatpush1.msra.mxu0 0.0
      %502 = vmatprep.subr.mxu0 0.0
      %503 = vmatpush1.msra.mxu0 0.0
      %504 = vmatprep.subr.mxu0 0.0
      %505 = vmatpush1.msra.mxu0 0.0
      %506 = vmatprep.subr.mxu0 0.0
      %507 = vmatpush1.msra.mxu0 0.0
      %508 = vmatprep.subr.mxu0 0.0
      %509 = vmatpush1.msra.mxu0 0.0
      %510 = vmatprep.subr.mxu0 0.0
      %511 = vmatpush1.msra.mxu0 0.0
      %512 = vmatprep.subr.mxu0 0.0
      %513 = vmatpush1.msra.mxu0 0.0
      %514 = vmatprep.subr.mxu0 0.0
      %515 = vmatpush1.msra.mxu0 0.0
      %516 = vmatprep.subr.mxu0 0.0
      %517 = vmatpush1.msra.mxu0 0.0
      %518 = vmatprep.subr.mxu0 0.0
      %519 = vmatpush1.msra.mxu0 0.0
      %520 = vmatprep.subr.mxu0 0.0
      %521 = vmatpush1.msra.mxu0 0.0
      %522 = vmatprep.subr.mxu0 0.0
      %523 = vmatpush1.msra.mxu0 0.0
      %524 = vmatprep.subr.mxu0 0.0
      %525 = vmatpush1.msra.mxu0 0.0
      %526 = vmatprep.subr.mxu0 0.0
      %527 = vmatpush1.msra.mxu0 0.0
      %528 = vmatprep.subr.mxu0 0.0
      %529 = vmatpush1.msra.mxu0 0.0
      %530 = vmatprep.subr.mxu0 0.0
      %531 = vmatpush1.msra.mxu0 0.0
      %532 = vmatprep.subr.mxu0 0.0
      %533 = vmatpush1.msra.mxu0 0.0
      %534 = vmatprep.subr.mxu0 0.0
      %535 = vmatpush1.msra.mxu0 0.0
      %536 = vmatprep.mubr.f32.mxu0 0.0
      %537 = vmatmul.mubr.f32.gmra.mrb[0].mxu0 %v461
      %v538 = vpop.f32.mrb[0].mxu0
      %v539 = vadd.f32 %v457, %v538
      %v540 = vpop.f32.mrb[0].mxu0
      %541 = vmatprep.mubr.f32.mxu0 0.0
      %542 = vmatmul.mubr.f32.gmra.mrb[0].mxu0 %v464
      %v543 = vpop.f32.mrb[0].mxu0
      %v544 = vadd.f32 %v457, %v543
      %v545 = vpop.f32.mrb[0].mxu0
      %546 = vmatprep.mubr.f32.mxu0 0.0
      %547 = vmatmul.mubr.f32.gmra.mrb[0].mxu0 %v467
      %v548 = vpop.f32.mrb[0].mxu0
      %v549 = vadd.f32 %v457, %v548
      %v550 = vpop.f32.mrb[0].mxu0
      %551 = vmatprep.mubr.f32.mxu0 0.0
      %552 = vmatmul.mubr.f32.gmra.mrb[0].mxu0 %v470
      %v553 = vpop.f32.mrb[0].mxu0
      %v554 = vadd.f32 %v457, %v553
      %v555 = vpop.f32.mrb[0].mxu0
      %556 = vdwg.mxu0
      %561 = vrot.lane.b32.xlu0 %v539, 120
      %v562 = vpop.permute.xlu0 %561
      %563 = vrot.lane.b32.xlu0 %v544, 120
      %v564 = vpop.permute.xlu0 %563
      %565 = vrot.lane.b32.xlu0 %v549, 120
      %v566 = vpop.permute.xlu0 %565
      %567 = vrot.lane.b32.xlu0 %v554, 120
      %v568 = vpop.permute.xlu0 %567
      %569 = vrot.lane.b32.xlu0 %v539, 112
      %v570 = vpop.permute.xlu0 %569
      %571 = vrot.lane.b32.xlu0 %v544, 112
      %v572 = vpop.permute.xlu0 %571
      %573 = vrot.lane.b32.xlu0 %v549, 112
      %v574 = vpop.permute.xlu0 %573
      %575 = vrot.lane.b32.xlu0 %v554, 112
      %v576 = vpop.permute.xlu0 %575
      %577 = vrot.lane.b32.xlu0 %v539, 104
      %v578 = vpop.permute.xlu0 %577
      %579 = vrot.lane.b32.xlu0 %v544, 104
      %v580 = vpop.permute.xlu0 %579
      %581 = vrot.lane.b32.xlu0 %v549, 104
      %v582 = vpop.permute.xlu0 %581
      %583 = vrot.lane.b32.xlu0 %v554, 104
      %v584 = vpop.permute.xlu0 %583
      %585 = vrot.lane.b32.xlu0 %v539, 96
      %v586 = vpop.permute.xlu0 %585
      %vm587 = vcmask 64512
      %v588 = vsel %vm587, %v539, 0
      %v590 = vsel %vm587, %v586, 0
      %592 = vmatprep.subr.mxu0 0.0
      %593 = vmatpush1.xpose.msra.mxu0 %v590
      %594 = vmatprep.subr.mxu0 0.0
      %595 = vmatpush1.xpose.msra.mxu0 0.0
      %596 = vmatprep.subr.mxu0 0.0
      %597 = vmatpush1.xpose.msra.mxu0 0.0
      %598 = vmatprep.subr.mxu0 0.0
      %599 = vmatpush1.xpose.msra.mxu0 0.0
      %600 = vmatprep.subr.mxu0 0.0
      %601 = vmatpush1.xpose.msra.mxu0 0.0
      %602 = vmatprep.subr.mxu0 0.0
      %603 = vmatpush1.xpose.msra.mxu0 0.0
      %604 = vmatprep.subr.mxu0 0.0
      %605 = vmatpush1.xpose.msra.mxu0 0.0
      %606 = vmatprep.subr.mxu0 0.0
      %607 = vmatpush1.xpose.msra.mxu0 0.0
      %608 = vmatprep.subr.mxu0 0.0
      %609 = vmatpush1.xpose.msra.mxu0 0.0
      %610 = vmatprep.subr.mxu0 0.0
      %611 = vmatpush1.xpose.msra.mxu0 0.0
      %612 = vmatprep.subr.mxu0 0.0
      %613 = vmatpush1.xpose.msra.mxu0 0.0
      %614 = vmatprep.subr.mxu0 0.0
      %615 = vmatpush1.xpose.msra.mxu0 0.0
      %616 = vmatprep.subr.mxu0 0.0
      %617 = vmatpush1.xpose.msra.mxu0 0.0
      %618 = vmatprep.subr.mxu0 0.0
      %619 = vmatpush1.xpose.msra.mxu0 0.0
      %620 = vmatprep.subr.mxu0 0.0
      %621 = vmatpush1.xpose.msra.mxu0 0.0
      %622 = vmatprep.subr.mxu0 0.0
      %623 = vmatpush1.xpose.msra.mxu0 0.0
      %624 = vmatprep.subr.mxu0 0.0
      %625 = vmatpush1.xpose.msra.mxu0 0.0
      %626 = vmatprep.subr.mxu0 0.0
      %627 = vmatpush1.xpose.msra.mxu0 0.0
      %628 = vmatprep.subr.mxu0 0.0
      %629 = vmatpush1.xpose.msra.mxu0 0.0
      %630 = vmatprep.subr.mxu0 0.0
      %631 = vmatpush1.xpose.msra.mxu0 0.0
      %632 = vmatprep.subr.mxu0 0.0
      %633 = vmatpush1.xpose.msra.mxu0 0.0
      %634 = vmatprep.subr.mxu0 0.0
      %635 = vmatpush1.xpose.msra.mxu0 0.0
      %636 = vmatprep.subr.mxu0 0.0
      %637 = vmatpush1.xpose.msra.mxu0 0.0
      %638 = vmatprep.subr.mxu0 0.0
      %639 = vmatpush1.xpose.msra.mxu0 0.0
      %640 = vmatprep.subr.mxu0 0.0
      %641 = vmatpush1.xpose.msra.mxu0 0.0
      %642 = vmatprep.subr.mxu0 0.0
      %643 = vmatpush1.xpose.msra.mxu0 0.0
      %644 = vmatprep.subr.mxu0 0.0
      %645 = vmatpush1.xpose.msra.mxu0 0.0
      %646 = vmatprep.subr.mxu0 0.0
      %647 = vmatpush1.xpose.msra.mxu0 0.0
      %648 = vmatprep.subr.mxu0 0.0
      %649 = vmatpush1.xpose.msra.mxu0 0.0
      %650 = vmatprep.subr.mxu0 0.0
      %651 = vmatpush1.xpose.msra.mxu0 0.0
      %652 = vmatprep.subr.mxu0 0.0
      %653 = vmatpush1.xpose.msra.mxu0 0.0
      %654 = vmatprep.subr.mxu0 0.0
      %655 = vmatpush1.xpose.msra.mxu0 0.0
      %656 = vmatprep.mubr.f32.mxu0 0.0
      %657 = vmatmul.mubr.f32.gmra.mrb[0].mxu0 %v588
      %v658 = vpop.f32.mrb[0].mxu0
      %v659 = vadd.f32 0.0, %v658
      %v660 = vpop.f32.mrb[0].mxu0
      %661 = vdwg.mxu0
      %662 = vrot.lane.b32.xlu0 %v544, 96
      %v663 = vpop.permute.xlu0 %662
      %v664 = vsel %vm587, %v544, 0
      %v666 = vsel %vm587, %v663, 0
      %668 = vmatprep.subr.mxu0 0.0
      %669 = vmatpush1.xpose.msra.mxu0 %v666
      %670 = vmatprep.subr.mxu0 0.0
      %671 = vmatpush1.xpose.msra.mxu0 0.0
      %672 = vmatprep.subr.mxu0 0.0
      %673 = vmatpush1.xpose.msra.mxu0 0.0
      %674 = vmatprep.subr.mxu0 0.0
      %675 = vmatpush1.xpose.msra.mxu0 0.0
      %676 = vmatprep.subr.mxu0 0.0
      %677 = vmatpush1.xpose.msra.mxu0 0.0
      %678 = vmatprep.subr.mxu0 0.0
      %679 = vmatpush1.xpose.msra.mxu0 0.0
      %680 = vmatprep.subr.mxu0 0.0
      %681 = vmatpush1.xpose.msra.mxu0 0.0
      %682 = vmatprep.subr.mxu0 0.0
      %683 = vmatpush1.xpose.msra.mxu0 0.0
      %684 = vmatprep.subr.mxu0 0.0
      %685 = vmatpush1.xpose.msra.mxu0 0.0
      %686 = vmatprep.subr.mxu0 0.0
      %687 = vmatpush1.xpose.msra.mxu0 0.0
      %688 = vmatprep.subr.mxu0 0.0
      %689 = vmatpush1.xpose.msra.mxu0 0.0
      %690 = vmatprep.subr.mxu0 0.0
      %691 = vmatpush1.xpose.msra.mxu0 0.0
      %692 = vmatprep.subr.mxu0 0.0
      %693 = vmatpush1.xpose.msra.mxu0 0.0
      %694 = vmatprep.subr.mxu0 0.0
      %695 = vmatpush1.xpose.msra.mxu0 0.0
      %696 = vmatprep.subr.mxu0 0.0
      %697 = vmatpush1.xpose.msra.mxu0 0.0
      %698 = vmatprep.subr.mxu0 0.0
      %699 = vmatpush1.xpose.msra.mxu0 0.0
      %700 = vmatprep.subr.mxu0 0.0
      %701 = vmatpush1.xpose.msra.mxu0 0.0
      %702 = vmatprep.subr.mxu0 0.0
      %703 = vmatpush1.xpose.msra.mxu0 0.0
      %704 = vmatprep.subr.mxu0 0.0
      %705 = vmatpush1.xpose.msra.mxu0 0.0
      %706 = vmatprep.subr.mxu0 0.0
      %707 = vmatpush1.xpose.msra.mxu0 0.0
      %708 = vmatprep.subr.mxu0 0.0
      %709 = vmatpush1.xpose.msra.mxu0 0.0
      %710 = vmatprep.subr.mxu0 0.0
      %711 = vmatpush1.xpose.msra.mxu0 0.0
      %712 = vmatprep.subr.mxu0 0.0
      %713 = vmatpush1.xpose.msra.mxu0 0.0
      %714 = vmatprep.subr.mxu0 0.0
      %715 = vmatpush1.xpose.msra.mxu0 0.0
      %716 = vmatprep.subr.mxu0 0.0
      %717 = vmatpush1.xpose.msra.mxu0 0.0
      %718 = vmatprep.subr.mxu0 0.0
      %719 = vmatpush1.xpose.msra.mxu0 0.0
      %720 = vmatprep.subr.mxu0 0.0
      %721 = vmatpush1.xpose.msra.mxu0 0.0
      %722 = vmatprep.subr.mxu0 0.0
      %723 = vmatpush1.xpose.msra.mxu0 0.0
      %724 = vmatprep.subr.mxu0 0.0
      %725 = vmatpush1.xpose.msra.mxu0 0.0
      %726 = vmatprep.subr.mxu0 0.0
      %727 = vmatpush1.xpose.msra.mxu0 0.0
      %728 = vmatprep.subr.mxu0 0.0
      %729 = vmatpush1.xpose.msra.mxu0 0.0
      %730 = vmatprep.subr.mxu0 0.0
      %731 = vmatpush1.xpose.msra.mxu0 0.0
      %732 = vmatprep.mubr.f32.mxu0 0.0
      %733 = vmatmul.mubr.f32.gmra.mrb[0].mxu0 %v664
      %v734 = vpop.f32.mrb[0].mxu0
      %v735 = vadd.f32 0.0, %v734
      %v736 = vpop.f32.mrb[0].mxu0
      %737 = vdwg.mxu0
      %738 = vrot.lane.b32.xlu0 %v549, 96
      %v739 = vpop.permute.xlu0 %738
      %v740 = vsel %vm587, %v549, 0
      %v742 = vsel %vm587, %v739, 0
      %744 = vmatprep.subr.mxu0 0.0
      %745 = vmatpush1.xpose.msra.mxu0 %v742
      %746 = vmatprep.subr.mxu0 0.0
      %747 = vmatpush1.xpose.msra.mxu0 0.0
      %748 = vmatprep.subr.mxu0 0.0
      %749 = vmatpush1.xpose.msra.mxu0 0.0
      %750 = vmatprep.subr.mxu0 0.0
      %751 = vmatpush1.xpose.msra.mxu0 0.0
      %752 = vmatprep.subr.mxu0 0.0
      %753 = vmatpush1.xpose.msra.mxu0 0.0
      %754 = vmatprep.subr.mxu0 0.0
      %755 = vmatpush1.xpose.msra.mxu0 0.0
      %756 = vmatprep.subr.mxu0 0.0
      %757 = vmatpush1.xpose.msra.mxu0 0.0
      %758 = vmatprep.subr.mxu0 0.0
      %759 = vmatpush1.xpose.msra.mxu0 0.0
      %760 = vmatprep.subr.mxu0 0.0
      %761 = vmatpush1.xpose.msra.mxu0 0.0
      %762 = vmatprep.subr.mxu0 0.0
      %763 = vmatpush1.xpose.msra.mxu0 0.0
      %764 = vmatprep.subr.mxu0 0.0
      %765 = vmatpush1.xpose.msra.mxu0 0.0
      %766 = vmatprep.subr.mxu0 0.0
      %767 = vmatpush1.xpose.msra.mxu0 0.0
      %768 = vmatprep.subr.mxu0 0.0
      %769 = vmatpush1.xpose.msra.mxu0 0.0
      %770 = vmatprep.subr.mxu0 0.0
      %771 = vmatpush1.xpose.msra.mxu0 0.0
      %772 = vmatprep.subr.mxu0 0.0
      %773 = vmatpush1.xpose.msra.mxu0 0.0
      %774 = vmatprep.subr.mxu0 0.0
      %775 = vmatpush1.xpose.msra.mxu0 0.0
      %776 = vmatprep.subr.mxu0 0.0
      %777 = vmatpush1.xpose.msra.mxu0 0.0
      %778 = vmatprep.subr.mxu0 0.0
      %779 = vmatpush1.xpose.msra.mxu0 0.0
      %780 = vmatprep.subr.mxu0 0.0
      %781 = vmatpush1.xpose.msra.mxu0 0.0
      %782 = vmatprep.subr.mxu0 0.0
      %783 = vmatpush1.xpose.msra.mxu0 0.0
      %784 = vmatprep.subr.mxu0 0.0
      %785 = vmatpush1.xpose.msra.mxu0 0.0
      %786 = vmatprep.subr.mxu0 0.0
      %787 = vmatpush1.xpose.msra.mxu0 0.0
      %788 = vmatprep.subr.mxu0 0.0
      %789 = vmatpush1.xpose.msra.mxu0 0.0
      %790 = vmatprep.subr.mxu0 0.0
      %791 = vmatpush1.xpose.msra.mxu0 0.0
      %792 = vmatprep.subr.mxu0 0.0
      %793 = vmatpush1.xpose.msra.mxu0 0.0
      %794 = vmatprep.subr.mxu0 0.0
      %795 = vmatpush1.xpose.msra.mxu0 0.0
      %796 = vmatprep.subr.mxu0 0.0
      %797 = vmatpush1.xpose.msra.mxu0 0.0
      %798 = vmatprep.subr.mxu0 0.0
      %799 = vmatpush1.xpose.msra.mxu0 0.0
      %800 = vmatprep.subr.mxu0 0.0
      %801 = vmatpush1.xpose.msra.mxu0 0.0
      %802 = vmatprep.subr.mxu0 0.0
      %803 = vmatpush1.xpose.msra.mxu0 0.0
      %804 = vmatprep.subr.mxu0 0.0
      %805 = vmatpush1.xpose.msra.mxu0 0.0
      %806 = vmatprep.subr.mxu0 0.0
      %807 = vmatpush1.xpose.msra.mxu0 0.0
      %808 = vmatprep.mubr.f32.mxu0 0.0
      %809 = vmatmul.mubr.f32.gmra.mrb[0].mxu0 %v740
      %v810 = vpop.f32.mrb[0].mxu0
      %v811 = vadd.f32 0.0, %v810
      %v812 = vpop.f32.mrb[0].mxu0
      %813 = vdwg.mxu0
      %814 = vrot.lane.b32.xlu0 %v554, 96
      %v815 = vpop.permute.xlu0 %814
      %v816 = vsel %vm587, %v554, 0
      %v818 = vsel %vm587, %v815, 0
      %820 = vmatprep.subr.mxu0 0.0
      %821 = vmatpush1.xpose.msra.mxu0 %v818
      %822 = vmatprep.subr.mxu0 0.0
      %823 = vmatpush1.xpose.msra.mxu0 0.0
      %824 = vmatprep.subr.mxu0 0.0
      %825 = vmatpush1.xpose.msra.mxu0 0.0
      %826 = vmatprep.subr.mxu0 0.0
      %827 = vmatpush1.xpose.msra.mxu0 0.0
      %828 = vmatprep.subr.mxu0 0.0
      %829 = vmatpush1.xpose.msra.mxu0 0.0
      %830 = vmatprep.subr.mxu0 0.0
      %831 = vmatpush1.xpose.msra.mxu0 0.0
      %832 = vmatprep.subr.mxu0 0.0
      %833 = vmatpush1.xpose.msra.mxu0 0.0
      %834 = vmatprep.subr.mxu0 0.0
      %835 = vmatpush1.xpose.msra.mxu0 0.0
      %836 = vmatprep.subr.mxu0 0.0
      %837 = vmatpush1.xpose.msra.mxu0 0.0
      %838 = vmatprep.subr.mxu0 0.0
      %839 = vmatpush1.xpose.msra.mxu0 0.0
      %840 = vmatprep.subr.mxu0 0.0
      %841 = vmatpush1.xpose.msra.mxu0 0.0
      %842 = vmatprep.subr.mxu0 0.0
      %843 = vmatpush1.xpose.msra.mxu0 0.0
      %844 = vmatprep.subr.mxu0 0.0
      %845 = vmatpush1.xpose.msra.mxu0 0.0
      %846 = vmatprep.subr.mxu0 0.0
      %847 = vmatpush1.xpose.msra.mxu0 0.0
      %848 = vmatprep.subr.mxu0 0.0
      %849 = vmatpush1.xpose.msra.mxu0 0.0
      %850 = vmatprep.subr.mxu0 0.0
      %851 = vmatpush1.xpose.msra.mxu0 0.0
      %852 = vmatprep.subr.mxu0 0.0
      %853 = vmatpush1.xpose.msra.mxu0 0.0
      %854 = vmatprep.subr.mxu0 0.0
      %855 = vmatpush1.xpose.msra.mxu0 0.0
      %856 = vmatprep.subr.mxu0 0.0
      %857 = vmatpush1.xpose.msra.mxu0 0.0
      %858 = vmatprep.subr.mxu0 0.0
      %859 = vmatpush1.xpose.msra.mxu0 0.0
      %860 = vmatprep.subr.mxu0 0.0
      %861 = vmatpush1.xpose.msra.mxu0 0.0
      %862 = vmatprep.subr.mxu0 0.0
      %863 = vmatpush1.xpose.msra.mxu0 0.0
      %864 = vmatprep.subr.mxu0 0.0
      %865 = vmatpush1.xpose.msra.mxu0 0.0
      %866 = vmatprep.subr.mxu0 0.0
      %867 = vmatpush1.xpose.msra.mxu0 0.0
      %868 = vmatprep.subr.mxu0 0.0
      %869 = vmatpush1.xpose.msra.mxu0 0.0
      %870 = vmatprep.subr.mxu0 0.0
      %871 = vmatpush1.xpose.msra.mxu0 0.0
      %872 = vmatprep.subr.mxu0 0.0
      %873 = vmatpush1.xpose.msra.mxu0 0.0
      %874 = vmatprep.subr.mxu0 0.0
      %875 = vmatpush1.xpose.msra.mxu0 0.0
      %876 = vmatprep.subr.mxu0 0.0
      %877 = vmatpush1.xpose.msra.mxu0 0.0
      %878 = vmatprep.subr.mxu0 0.0
      %879 = vmatpush1.xpose.msra.mxu0 0.0
      %880 = vmatprep.subr.mxu0 0.0
      %881 = vmatpush1.xpose.msra.mxu0 0.0
      %882 = vmatprep.subr.mxu0 0.0
      %883 = vmatpush1.xpose.msra.mxu0 0.0
      %884 = vmatprep.mubr.f32.mxu0 0.0
      %885 = vmatmul.mubr.f32.gmra.mrb[0].mxu0 %v816
      %v886 = vpop.f32.mrb[0].mxu0
      %v887 = vadd.f32 0.0, %v886
      %v888 = vpop.f32.mrb[0].mxu0
      %889 = vdwg.mxu0
      %890 = vrot.lane.b32.xlu0 %v562, 96
      %v891 = vpop.permute.xlu0 %890
      %v892 = vsel %vm587, %v562, 0
      %v894 = vsel %vm587, %v891, 0
      %896 = vmatprep.subr.mxu0 0.0
      %897 = vmatpush1.xpose.msra.mxu0 %v894
      %898 = vmatprep.subr.mxu0 0.0
      %899 = vmatpush1.xpose.msra.mxu0 0.0
      %900 = vmatprep.subr.mxu0 0.0
      %901 = vmatpush1.xpose.msra.mxu0 0.0
      %902 = vmatprep.subr.mxu0 0.0
      %903 = vmatpush1.xpose.msra.mxu0 0.0
      %904 = vmatprep.subr.mxu0 0.0
      %905 = vmatpush1.xpose.msra.mxu0 0.0
      %906 = vmatprep.subr.mxu0 0.0
      %907 = vmatpush1.xpose.msra.mxu0 0.0
      %908 = vmatprep.subr.mxu0 0.0
      %909 = vmatpush1.xpose.msra.mxu0 0.0
      %910 = vmatprep.subr.mxu0 0.0
      %911 = vmatpush1.xpose.msra.mxu0 0.0
      %912 = vmatprep.subr.mxu0 0.0
      %913 = vmatpush1.xpose.msra.mxu0 0.0
      %914 = vmatprep.subr.mxu0 0.0
      %915 = vmatpush1.xpose.msra.mxu0 0.0
      %916 = vmatprep.subr.mxu0 0.0
      %917 = vmatpush1.xpose.msra.mxu0 0.0
      %918 = vmatprep.subr.mxu0 0.0
      %919 = vmatpush1.xpose.msra.mxu0 0.0
      %920 = vmatprep.subr.mxu0 0.0
      %921 = vmatpush1.xpose.msra.mxu0 0.0
      %922 = vmatprep.subr.mxu0 0.0
      %923 = vmatpush1.xpose.msra.mxu0 0.0
      %924 = vmatprep.subr.mxu0 0.0
      %925 = vmatpush1.xpose.msra.mxu0 0.0
      %926 = vmatprep.subr.mxu0 0.0
      %927 = vmatpush1.xpose.msra.mxu0 0.0
      %928 = vmatprep.subr.mxu0 0.0
      %929 = vmatpush1.xpose.msra.mxu0 0.0
      %930 = vmatprep.subr.mxu0 0.0
      %931 = vmatpush1.xpose.msra.mxu0 0.0
      %932 = vmatprep.subr.mxu0 0.0
      %933 = vmatpush1.xpose.msra.mxu0 0.0
      %934 = vmatprep.subr.mxu0 0.0
      %935 = vmatpush1.xpose.msra.mxu0 0.0
      %936 = vmatprep.subr.mxu0 0.0
      %937 = vmatpush1.xpose.msra.mxu0 0.0
      %938 = vmatprep.subr.mxu0 0.0
      %939 = vmatpush1.xpose.msra.mxu0 0.0
      %940 = vmatprep.subr.mxu0 0.0
      %941 = vmatpush1.xpose.msra.mxu0 0.0
      %942 = vmatprep.subr.mxu0 0.0
      %943 = vmatpush1.xpose.msra.mxu0 0.0
      %944 = vmatprep.subr.mxu0 0.0
      %945 = vmatpush1.xpose.msra.mxu0 0.0
      %946 = vmatprep.subr.mxu0 0.0
      %947 = vmatpush1.xpose.msra.mxu0 0.0
      %948 = vmatprep.subr.mxu0 0.0
      %949 = vmatpush1.xpose.msra.mxu0 0.0
      %950 = vmatprep.subr.mxu0 0.0
      %951 = vmatpush1.xpose.msra.mxu0 0.0
      %952 = vmatprep.subr.mxu0 0.0
      %953 = vmatpush1.xpose.msra.mxu0 0.0
      %954 = vmatprep.subr.mxu0 0.0
      %955 = vmatpush1.xpose.msra.mxu0 0.0
      %956 = vmatprep.subr.mxu0 0.0
      %957 = vmatpush1.xpose.msra.mxu0 0.0
      %958 = vmatprep.subr.mxu0 0.0
      %959 = vmatpush1.xpose.msra.mxu0 0.0
      %960 = vmatprep.mubr.f32.mxu0 0.0
      %961 = vmatmul.mubr.f32.gmra.mrb[0].mxu0 %v892
      %v962 = vpop.f32.mrb[0].mxu0
      %v963 = vadd.f32 0.0, %v962
      %v964 = vpop.f32.mrb[0].mxu0
      %965 = vdwg.mxu0
      %966 = vrot.lane.b32.xlu0 %v564, 96
      %v967 = vpop.permute.xlu0 %966
      %v968 = vsel %vm587, %v564, 0
      %v970 = vsel %vm587, %v967, 0
      %972 = vmatprep.subr.mxu0 0.0
      %973 = vmatpush1.xpose.msra.mxu0 %v970
      %974 = vmatprep.subr.mxu0 0.0
      %975 = vmatpush1.xpose.msra.mxu0 0.0
      %976 = vmatprep.subr.mxu0 0.0
      %977 = vmatpush1.xpose.msra.mxu0 0.0
      %978 = vmatprep.subr.mxu0 0.0
      %979 = vmatpush1.xpose.msra.mxu0 0.0
      %980 = vmatprep.subr.mxu0 0.0
      %981 = vmatpush1.xpose.msra.mxu0 0.0
      %982 = vmatprep.subr.mxu0 0.0
      %983 = vmatpush1.xpose.msra.mxu0 0.0
      %984 = vmatprep.subr.mxu0 0.0
      %985 = vmatpush1.xpose.msra.mxu0 0.0
      %986 = vmatprep.subr.mxu0 0.0
      %987 = vmatpush1.xpose.msra.mxu0 0.0
      %988 = vmatprep.subr.mxu0 0.0
      %989 = vmatpush1.xpose.msra.mxu0 0.0
      %990 = vmatprep.subr.mxu0 0.0
      %991 = vmatpush1.xpose.msra.mxu0 0.0
      %992 = vmatprep.subr.mxu0 0.0
      %993 = vmatpush1.xpose.msra.mxu0 0.0
      %994 = vmatprep.subr.mxu0 0.0
      %995 = vmatpush1.xpose.msra.mxu0 0.0
      %996 = vmatprep.subr.mxu0 0.0
      %997 = vmatpush1.xpose.msra.mxu0 0.0
      %998 = vmatprep.subr.mxu0 0.0
      %999 = vmatpush1.xpose.msra.mxu0 0.0
      %1000 = vmatprep.subr.mxu0 0.0
      %1001 = vmatpush1.xpose.msra.mxu0 0.0
      %1002 = vmatprep.subr.mxu0 0.0
      %1003 = vmatpush1.xpose.msra.mxu0 0.0
      %1004 = vmatprep.subr.mxu0 0.0
      %1005 = vmatpush1.xpose.msra.mxu0 0.0
      %1006 = vmatprep.subr.mxu0 0.0
      %1007 = vmatpush1.xpose.msra.mxu0 0.0
      %1008 = vmatprep.subr.mxu0 0.0
      %1009 = vmatpush1.xpose.msra.mxu0 0.0
      %1010 = vmatprep.subr.mxu0 0.0
      %1011 = vmatpush1.xpose.msra.mxu0 0.0
      %1012 = vmatprep.subr.mxu0 0.0
      %1013 = vmatpush1.xpose.msra.mxu0 0.0
      %1014 = vmatprep.subr.mxu0 0.0
      %1015 = vmatpush1.xpose.msra.mxu0 0.0
      %1016 = vmatprep.subr.mxu0 0.0
      %1017 = vmatpush1.xpose.msra.mxu0 0.0
      %1018 = vmatprep.subr.mxu0 0.0
      %1019 = vmatpush1.xpose.msra.mxu0 0.0
      %1020 = vmatprep.subr.mxu0 0.0
      %1021 = vmatpush1.xpose.msra.mxu0 0.0
      %1022 = vmatprep.subr.mxu0 0.0
      %1023 = vmatpush1.xpose.msra.mxu0 0.0
      %1024 = vmatprep.subr.mxu0 0.0
      %1025 = vmatpush1.xpose.msra.mxu0 0.0
      %1026 = vmatprep.subr.mxu0 0.0
      %1027 = vmatpush1.xpose.msra.mxu0 0.0
      %1028 = vmatprep.subr.mxu0 0.0
      %1029 = vmatpush1.xpose.msra.mxu0 0.0
      %1030 = vmatprep.subr.mxu0 0.0
      %1031 = vmatpush1.xpose.msra.mxu0 0.0
      %1032 = vmatprep.subr.mxu0 0.0
      %1033 = vmatpush1.xpose.msra.mxu0 0.0
      %1034 = vmatprep.subr.mxu0 0.0
      %1035 = vmatpush1.xpose.msra.mxu0 0.0
      %1036 = vmatprep.mubr.f32.mxu0 0.0
      %1037 = vmatmul.mubr.f32.gmra.mrb[0].mxu0 %v968
      %v1038 = vpop.f32.mrb[0].mxu0
      %v1039 = vadd.f32 0.0, %v1038
      %v1040 = vpop.f32.mrb[0].mxu0
      %1041 = vdwg.mxu0
      %1042 = vrot.lane.b32.xlu0 %v566, 96
      %v1043 = vpop.permute.xlu0 %1042
      %v1044 = vsel %vm587, %v566, 0
      %v1046 = vsel %vm587, %v1043, 0
      %1048 = vmatprep.subr.mxu0 0.0
      %1049 = vmatpush1.xpose.msra.mxu0 %v1046
      %1050 = vmatprep.subr.mxu0 0.0
      %1051 = vmatpush1.xpose.msra.mxu0 0.0
      %1052 = vmatprep.subr.mxu0 0.0
      %1053 = vmatpush1.xpose.msra.mxu0 0.0
      %1054 = vmatprep.subr.mxu0 0.0
      %1055 = vmatpush1.xpose.msra.mxu0 0.0
      %1056 = vmatprep.subr.mxu0 0.0
      %1057 = vmatpush1.xpose.msra.mxu0 0.0
      %1058 = vmatprep.subr.mxu0 0.0
      %1059 = vmatpush1.xpose.msra.mxu0 0.0
      %1060 = vmatprep.subr.mxu0 0.0
      %1061 = vmatpush1.xpose.msra.mxu0 0.0
      %1062 = vmatprep.subr.mxu0 0.0
      %1063 = vmatpush1.xpose.msra.mxu0 0.0
      %1064 = vmatprep.subr.mxu0 0.0
      %1065 = vmatpush1.xpose.msra.mxu0 0.0
      %1066 = vmatprep.subr.mxu0 0.0
      %1067 = vmatpush1.xpose.msra.mxu0 0.0
      %1068 = vmatprep.subr.mxu0 0.0
      %1069 = vmatpush1.xpose.msra.mxu0 0.0
      %1070 = vmatprep.subr.mxu0 0.0
      %1071 = vmatpush1.xpose.msra.mxu0 0.0
      %1072 = vmatprep.subr.mxu0 0.0
      %1073 = vmatpush1.xpose.msra.mxu0 0.0
      %1074 = vmatprep.subr.mxu0 0.0
      %1075 = vmatpush1.xpose.msra.mxu0 0.0
      %1076 = vmatprep.subr.mxu0 0.0
      %1077 = vmatpush1.xpose.msra.mxu0 0.0
      %1078 = vmatprep.subr.mxu0 0.0
      %1079 = vmatpush1.xpose.msra.mxu0 0.0
      %1080 = vmatprep.subr.mxu0 0.0
      %1081 = vmatpush1.xpose.msra.mxu0 0.0
      %1082 = vmatprep.subr.mxu0 0.0
      %1083 = vmatpush1.xpose.msra.mxu0 0.0
      %1084 = vmatprep.subr.mxu0 0.0
      %1085 = vmatpush1.xpose.msra.mxu0 0.0
      %1086 = vmatprep.subr.mxu0 0.0
      %1087 = vmatpush1.xpose.msra.mxu0 0.0
      %1088 = vmatprep.subr.mxu0 0.0
      %1089 = vmatpush1.xpose.msra.mxu0 0.0
      %1090 = vmatprep.subr.mxu0 0.0
      %1091 = vmatpush1.xpose.msra.mxu0 0.0
      %1092 = vmatprep.subr.mxu0 0.0
      %1093 = vmatpush1.xpose.msra.mxu0 0.0
      %1094 = vmatprep.subr.mxu0 0.0
      %1095 = vmatpush1.xpose.msra.mxu0 0.0
      %1096 = vmatprep.subr.mxu0 0.0
      %1097 = vmatpush1.xpose.msra.mxu0 0.0
      %1098 = vmatprep.subr.mxu0 0.0
      %1099 = vmatpush1.xpose.msra.mxu0 0.0
      %1100 = vmatprep.subr.mxu0 0.0
      %1101 = vmatpush1.xpose.msra.mxu0 0.0
      %1102 = vmatprep.subr.mxu0 0.0
      %1103 = vmatpush1.xpose.msra.mxu0 0.0
      %1104 = vmatprep.subr.mxu0 0.0
      %1105 = vmatpush1.xpose.msra.mxu0 0.0
      %1106 = vmatprep.subr.mxu0 0.0
      %1107 = vmatpush1.xpose.msra.mxu0 0.0
      %1108 = vmatprep.subr.mxu0 0.0
      %1109 = vmatpush1.xpose.msra.mxu0 0.0
      %1110 = vmatprep.subr.mxu0 0.0
      %1111 = vmatpush1.xpose.msra.mxu0 0.0
      %1112 = vmatprep.mubr.f32.mxu0 0.0
      %1113 = vmatmul.mubr.f32.gmra.mrb[0].mxu0 %v1044
      %v1114 = vpop.f32.mrb[0].mxu0
      %v1115 = vadd.f32 0.0, %v1114
      %v1116 = vpop.f32.mrb[0].mxu0
      %1117 = vdwg.mxu0
      %1118 = vrot.lane.b32.xlu0 %v568, 96
      %v1119 = vpop.permute.xlu0 %1118
      %v1120 = vsel %vm587, %v568, 0
      %v1122 = vsel %vm587, %v1119, 0
      %1124 = vmatprep.subr.mxu0 0.0
      %1125 = vmatpush1.xpose.msra.mxu0 %v1122
      %1126 = vmatprep.subr.mxu0 0.0
      %1127 = vmatpush1.xpose.msra.mxu0 0.0
      %1128 = vmatprep.subr.mxu0 0.0
      %1129 = vmatpush1.xpose.msra.mxu0 0.0
      %1130 = vmatprep.subr.mxu0 0.0
      %1131 = vmatpush1.xpose.msra.mxu0 0.0
      %1132 = vmatprep.subr.mxu0 0.0
      %1133 = vmatpush1.xpose.msra.mxu0 0.0
      %1134 = vmatprep.subr.mxu0 0.0
      %1135 = vmatpush1.xpose.msra.mxu0 0.0
      %1136 = vmatprep.subr.mxu0 0.0
      %1137 = vmatpush1.xpose.msra.mxu0 0.0
      %1138 = vmatprep.subr.mxu0 0.0
      %1139 = vmatpush1.xpose.msra.mxu0 0.0
      %1140 = vmatprep.subr.mxu0 0.0
      %1141 = vmatpush1.xpose.msra.mxu0 0.0
      %1142 = vmatprep.subr.mxu0 0.0
      %1143 = vmatpush1.xpose.msra.mxu0 0.0
      %1144 = vmatprep.subr.mxu0 0.0
      %1145 = vmatpush1.xpose.msra.mxu0 0.0
      %1146 = vmatprep.subr.mxu0 0.0
      %1147 = vmatpush1.xpose.msra.mxu0 0.0
      %1148 = vmatprep.subr.mxu0 0.0
      %1149 = vmatpush1.xpose.msra.mxu0 0.0
      %1150 = vmatprep.subr.mxu0 0.0
      %1151 = vmatpush1.xpose.msra.mxu0 0.0
      %1152 = vmatprep.subr.mxu0 0.0
      %1153 = vmatpush1.xpose.msra.mxu0 0.0
      %1154 = vmatprep.subr.mxu0 0.0
      %1155 = vmatpush1.xpose.msra.mxu0 0.0
      %1156 = vmatprep.subr.mxu0 0.0
      %1157 = vmatpush1.xpose.msra.mxu0 0.0
      %1158 = vmatprep.subr.mxu0 0.0
      %1159 = vmatpush1.xpose.msra.mxu0 0.0
      %1160 = vmatprep.subr.mxu0 0.0
      %1161 = vmatpush1.xpose.msra.mxu0 0.0
      %1162 = vmatprep.subr.mxu0 0.0
      %1163 = vmatpush1.xpose.msra.mxu0 0.0
      %1164 = vmatprep.subr.mxu0 0.0
      %1165 = vmatpush1.xpose.msra.mxu0 0.0
      %1166 = vmatprep.subr.mxu0 0.0
      %1167 = vmatpush1.xpose.msra.mxu0 0.0
      %1168 = vmatprep.subr.mxu0 0.0
      %1169 = vmatpush1.xpose.msra.mxu0 0.0
      %1170 = vmatprep.subr.mxu0 0.0
      %1171 = vmatpush1.xpose.msra.mxu0 0.0
      %1172 = vmatprep.subr.mxu0 0.0
      %1173 = vmatpush1.xpose.msra.mxu0 0.0
      %1174 = vmatprep.subr.mxu0 0.0
      %1175 = vmatpush1.xpose.msra.mxu0 0.0
      %1176 = vmatprep.subr.mxu0 0.0
      %1177 = vmatpush1.xpose.msra.mxu0 0.0
      %1178 = vmatprep.subr.mxu0 0.0
      %1179 = vmatpush1.xpose.msra.mxu0 0.0
      %1180 = vmatprep.subr.mxu0 0.0
      %1181 = vmatpush1.xpose.msra.mxu0 0.0
      %1182 = vmatprep.subr.mxu0 0.0
      %1183 = vmatpush1.xpose.msra.mxu0 0.0
      %1184 = vmatprep.subr.mxu0 0.0
      %1185 = vmatpush1.xpose.msra.mxu0 0.0
      %1186 = vmatprep.subr.mxu0 0.0
      %1187 = vmatpush1.xpose.msra.mxu0 0.0
      %1188 = vmatprep.mubr.f32.mxu0 0.0
      %1189 = vmatmul.mubr.f32.gmra.mrb[0].mxu0 %v1120
      %v1190 = vpop.f32.mrb[0].mxu0
      %v1191 = vadd.f32 0.0, %v1190
      %v1192 = vpop.f32.mrb[0].mxu0
      %1193 = vdwg.mxu0
      %1194 = vrot.lane.b32.xlu0 %v570, 96
      %v1195 = vpop.permute.xlu0 %1194
      %v1196 = vsel %vm587, %v570, 0
      %v1198 = vsel %vm587, %v1195, 0
      %1200 = vmatprep.subr.mxu0 0.0
      %1201 = vmatpush1.xpose.msra.mxu0 %v1198
      %1202 = vmatprep.subr.mxu0 0.0
      %1203 = vmatpush1.xpose.msra.mxu0 0.0
      %1204 = vmatprep.subr.mxu0 0.0
      %1205 = vmatpush1.xpose.msra.mxu0 0.0
      %1206 = vmatprep.subr.mxu0 0.0
      %1207 = vmatpush1.xpose.msra.mxu0 0.0
      %1208 = vmatprep.subr.mxu0 0.0
      %1209 = vmatpush1.xpose.msra.mxu0 0.0
      %1210 = vmatprep.subr.mxu0 0.0
      %1211 = vmatpush1.xpose.msra.mxu0 0.0
      %1212 = vmatprep.subr.mxu0 0.0
      %1213 = vmatpush1.xpose.msra.mxu0 0.0
      %1214 = vmatprep.subr.mxu0 0.0
      %1215 = vmatpush1.xpose.msra.mxu0 0.0
      %1216 = vmatprep.subr.mxu0 0.0
      %1217 = vmatpush1.xpose.msra.mxu0 0.0
      %1218 = vmatprep.subr.mxu0 0.0
      %1219 = vmatpush1.xpose.msra.mxu0 0.0
      %1220 = vmatprep.subr.mxu0 0.0
      %1221 = vmatpush1.xpose.msra.mxu0 0.0
      %1222 = vmatprep.subr.mxu0 0.0
      %1223 = vmatpush1.xpose.msra.mxu0 0.0
      %1224 = vmatprep.subr.mxu0 0.0
      %1225 = vmatpush1.xpose.msra.mxu0 0.0
      %1226 = vmatprep.subr.mxu0 0.0
      %1227 = vmatpush1.xpose.msra.mxu0 0.0
      %1228 = vmatprep.subr.mxu0 0.0
      %1229 = vmatpush1.xpose.msra.mxu0 0.0
      %1230 = vmatprep.subr.mxu0 0.0
      %1231 = vmatpush1.xpose.msra.mxu0 0.0
      %1232 = vmatprep.subr.mxu0 0.0
      %1233 = vmatpush1.xpose.msra.mxu0 0.0
      %1234 = vmatprep.subr.mxu0 0.0
      %1235 = vmatpush1.xpose.msra.mxu0 0.0
      %1236 = vmatprep.subr.mxu0 0.0
      %1237 = vmatpush1.xpose.msra.mxu0 0.0
      %1238 = vmatprep.subr.mxu0 0.0
      %1239 = vmatpush1.xpose.msra.mxu0 0.0
      %1240 = vmatprep.subr.mxu0 0.0
      %1241 = vmatpush1.xpose.msra.mxu0 0.0
      %1242 = vmatprep.subr.mxu0 0.0
      %1243 = vmatpush1.xpose.msra.mxu0 0.0
      %1244 = vmatprep.subr.mxu0 0.0
      %1245 = vmatpush1.xpose.msra.mxu0 0.0
      %1246 = vmatprep.subr.mxu0 0.0
      %1247 = vmatpush1.xpose.msra.mxu0 0.0
      %1248 = vmatprep.subr.mxu0 0.0
      %1249 = vmatpush1.xpose.msra.mxu0 0.0
      %1250 = vmatprep.subr.mxu0 0.0
      %1251 = vmatpush1.xpose.msra.mxu0 0.0
      %1252 = vmatprep.subr.mxu0 0.0
      %1253 = vmatpush1.xpose.msra.mxu0 0.0
      %1254 = vmatprep.subr.mxu0 0.0
      %1255 = vmatpush1.xpose.msra.mxu0 0.0
      %1256 = vmatprep.subr.mxu0 0.0
      %1257 = vmatpush1.xpose.msra.mxu0 0.0
      %1258 = vmatprep.subr.mxu0 0.0
      %1259 = vmatpush1.xpose.msra.mxu0 0.0
      %1260 = vmatprep.subr.mxu0 0.0
      %1261 = vmatpush1.xpose.msra.mxu0 0.0
      %1262 = vmatprep.subr.mxu0 0.0
      %1263 = vmatpush1.xpose.msra.mxu0 0.0
      %1264 = vmatprep.mubr.f32.mxu0 0.0
      %1265 = vmatmul.mubr.f32.gmra.mrb[0].mxu0 %v1196
      %v1266 = vpop.f32.mrb[0].mxu0
      %v1267 = vadd.f32 0.0, %v1266
      %v1268 = vpop.f32.mrb[0].mxu0
      %1269 = vdwg.mxu0
      %1270 = vrot.lane.b32.xlu0 %v572, 96
      %v1271 = vpop.permute.xlu0 %1270
      %v1272 = vsel %vm587, %v572, 0
      %v1274 = vsel %vm587, %v1271, 0
      %1276 = vmatprep.subr.mxu0 0.0
      %1277 = vmatpush1.xpose.msra.mxu0 %v1274
      %1278 = vmatprep.subr.mxu0 0.0
      %1279 = vmatpush1.xpose.msra.mxu0 0.0
      %1280 = vmatprep.subr.mxu0 0.0
      %1281 = vmatpush1.xpose.msra.mxu0 0.0
      %1282 = vmatprep.subr.mxu0 0.0
      %1283 = vmatpush1.xpose.msra.mxu0 0.0
      %1284 = vmatprep.subr.mxu0 0.0
      %1285 = vmatpush1.xpose.msra.mxu0 0.0
      %1286 = vmatprep.subr.mxu0 0.0
      %1287 = vmatpush1.xpose.msra.mxu0 0.0
      %1288 = vmatprep.subr.mxu0 0.0
      %1289 = vmatpush1.xpose.msra.mxu0 0.0
      %1290 = vmatprep.subr.mxu0 0.0
      %1291 = vmatpush1.xpose.msra.mxu0 0.0
      %1292 = vmatprep.subr.mxu0 0.0
      %1293 = vmatpush1.xpose.msra.mxu0 0.0
      %1294 = vmatprep.subr.mxu0 0.0
      %1295 = vmatpush1.xpose.msra.mxu0 0.0
      %1296 = vmatprep.subr.mxu0 0.0
      %1297 = vmatpush1.xpose.msra.mxu0 0.0
      %1298 = vmatprep.subr.mxu0 0.0
      %1299 = vmatpush1.xpose.msra.mxu0 0.0
      %1300 = vmatprep.subr.mxu0 0.0
      %1301 = vmatpush1.xpose.msra.mxu0 0.0
      %1302 = vmatprep.subr.mxu0 0.0
      %1303 = vmatpush1.xpose.msra.mxu0 0.0
      %1304 = vmatprep.subr.mxu0 0.0
      %1305 = vmatpush1.xpose.msra.mxu0 0.0
      %1306 = vmatprep.subr.mxu0 0.0
      %1307 = vmatpush1.xpose.msra.mxu0 0.0
      %1308 = vmatprep.subr.mxu0 0.0
      %1309 = vmatpush1.xpose.msra.mxu0 0.0
      %1310 = vmatprep.subr.mxu0 0.0
      %1311 = vmatpush1.xpose.msra.mxu0 0.0
      %1312 = vmatprep.subr.mxu0 0.0
      %1313 = vmatpush1.xpose.msra.mxu0 0.0
      %1314 = vmatprep.subr.mxu0 0.0
      %1315 = vmatpush1.xpose.msra.mxu0 0.0
      %1316 = vmatprep.subr.mxu0 0.0
      %1317 = vmatpush1.xpose.msra.mxu0 0.0
      %1318 = vmatprep.subr.mxu0 0.0
      %1319 = vmatpush1.xpose.msra.mxu0 0.0
      %1320 = vmatprep.subr.mxu0 0.0
      %1321 = vmatpush1.xpose.msra.mxu0 0.0
      %1322 = vmatprep.subr.mxu0 0.0
      %1323 = vmatpush1.xpose.msra.mxu0 0.0
      %1324 = vmatprep.subr.mxu0 0.0
      %1325 = vmatpush1.xpose.msra.mxu0 0.0
      %1326 = vmatprep.subr.mxu0 0.0
      %1327 = vmatpush1.xpose.msra.mxu0 0.0
      %1328 = vmatprep.subr.mxu0 0.0
      %1329 = vmatpush1.xpose.msra.mxu0 0.0
      %1330 = vmatprep.subr.mxu0 0.0
      %1331 = vmatpush1.xpose.msra.mxu0 0.0
      %1332 = vmatprep.subr.mxu0 0.0
      %1333 = vmatpush1.xpose.msra.mxu0 0.0
      %1334 = vmatprep.subr.mxu0 0.0
      %1335 = vmatpush1.xpose.msra.mxu0 0.0
      %1336 = vmatprep.subr.mxu0 0.0
      %1337 = vmatpush1.xpose.msra.mxu0 0.0
      %1338 = vmatprep.subr.mxu0 0.0
      %1339 = vmatpush1.xpose.msra.mxu0 0.0
      %1340 = vmatprep.mubr.f32.mxu0 0.0
      %1341 = vmatmul.mubr.f32.gmra.mrb[0].mxu0 %v1272
      %v1342 = vpop.f32.mrb[0].mxu0
      %v1343 = vadd.f32 0.0, %v1342
      %v1344 = vpop.f32.mrb[0].mxu0
      %1345 = vdwg.mxu0
      %1346 = vrot.lane.b32.xlu0 %v574, 96
      %v1347 = vpop.permute.xlu0 %1346
      %v1348 = vsel %vm587, %v574, 0
      %v1350 = vsel %vm587, %v1347, 0
      %1352 = vmatprep.subr.mxu0 0.0
      %1353 = vmatpush1.xpose.msra.mxu0 %v1350
      %1354 = vmatprep.subr.mxu0 0.0
      %1355 = vmatpush1.xpose.msra.mxu0 0.0
      %1356 = vmatprep.subr.mxu0 0.0
      %1357 = vmatpush1.xpose.msra.mxu0 0.0
      %1358 = vmatprep.subr.mxu0 0.0
      %1359 = vmatpush1.xpose.msra.mxu0 0.0
      %1360 = vmatprep.subr.mxu0 0.0
      %1361 = vmatpush1.xpose.msra.mxu0 0.0
      %1362 = vmatprep.subr.mxu0 0.0
      %1363 = vmatpush1.xpose.msra.mxu0 0.0
      %1364 = vmatprep.subr.mxu0 0.0
      %1365 = vmatpush1.xpose.msra.mxu0 0.0
      %1366 = vmatprep.subr.mxu0 0.0
      %1367 = vmatpush1.xpose.msra.mxu0 0.0
      %1368 = vmatprep.subr.mxu0 0.0
      %1369 = vmatpush1.xpose.msra.mxu0 0.0
      %1370 = vmatprep.subr.mxu0 0.0
      %1371 = vmatpush1.xpose.msra.mxu0 0.0
      %1372 = vmatprep.subr.mxu0 0.0
      %1373 = vmatpush1.xpose.msra.mxu0 0.0
      %1374 = vmatprep.subr.mxu0 0.0
      %1375 = vmatpush1.xpose.msra.mxu0 0.0
      %1376 = vmatprep.subr.mxu0 0.0
      %1377 = vmatpush1.xpose.msra.mxu0 0.0
      %1378 = vmatprep.subr.mxu0 0.0
      %1379 = vmatpush1.xpose.msra.mxu0 0.0
      %1380 = vmatprep.subr.mxu0 0.0
      %1381 = vmatpush1.xpose.msra.mxu0 0.0
      %1382 = vmatprep.subr.mxu0 0.0
      %1383 = vmatpush1.xpose.msra.mxu0 0.0
      %1384 = vmatprep.subr.mxu0 0.0
      %1385 = vmatpush1.xpose.msra.mxu0 0.0
      %1386 = vmatprep.subr.mxu0 0.0
      %1387 = vmatpush1.xpose.msra.mxu0 0.0
      %1388 = vmatprep.subr.mxu0 0.0
      %1389 = vmatpush1.xpose.msra.mxu0 0.0
      %1390 = vmatprep.subr.mxu0 0.0
      %1391 = vmatpush1.xpose.msra.mxu0 0.0
      %1392 = vmatprep.subr.mxu0 0.0
      %1393 = vmatpush1.xpose.msra.mxu0 0.0
      %1394 = vmatprep.subr.mxu0 0.0
      %1395 = vmatpush1.xpose.msra.mxu0 0.0
      %1396 = vmatprep.subr.mxu0 0.0
      %1397 = vmatpush1.xpose.msra.mxu0 0.0
      %1398 = vmatprep.subr.mxu0 0.0
      %1399 = vmatpush1.xpose.msra.mxu0 0.0
      %1400 = vmatprep.subr.mxu0 0.0
      %1401 = vmatpush1.xpose.msra.mxu0 0.0
      %1402 = vmatprep.subr.mxu0 0.0
      %1403 = vmatpush1.xpose.msra.mxu0 0.0
      %1404 = vmatprep.subr.mxu0 0.0
      %1405 = vmatpush1.xpose.msra.mxu0 0.0
      %1406 = vmatprep.subr.mxu0 0.0
      %1407 = vmatpush1.xpose.msra.mxu0 0.0
      %1408 = vmatprep.subr.mxu0 0.0
      %1409 = vmatpush1.xpose.msra.mxu0 0.0
      %1410 = vmatprep.subr.mxu0 0.0
      %1411 = vmatpush1.xpose.msra.mxu0 0.0
      %1412 = vmatprep.subr.mxu0 0.0
      %1413 = vmatpush1.xpose.msra.mxu0 0.0
      %1414 = vmatprep.subr.mxu0 0.0
      %1415 = vmatpush1.xpose.msra.mxu0 0.0
      %1416 = vmatprep.mubr.f32.mxu0 0.0
      %1417 = vmatmul.mubr.f32.gmra.mrb[0].mxu0 %v1348
      %v1418 = vpop.f32.mrb[0].mxu0
      %v1419 = vadd.f32 0.0, %v1418
      %v1420 = vpop.f32.mrb[0].mxu0
      %1421 = vdwg.mxu0
      %1422 = vrot.lane.b32.xlu0 %v576, 96
      %v1423 = vpop.permute.xlu0 %1422
      %v1424 = vsel %vm587, %v576, 0
      %v1426 = vsel %vm587, %v1423, 0
      %1428 = vmatprep.subr.mxu0 0.0
      %1429 = vmatpush1.xpose.msra.mxu0 %v1426
      %1430 = vmatprep.subr.mxu0 0.0
      %1431 = vmatpush1.xpose.msra.mxu0 0.0
      %1432 = vmatprep.subr.mxu0 0.0
      %1433 = vmatpush1.xpose.msra.mxu0 0.0
      %1434 = vmatprep.subr.mxu0 0.0
      %1435 = vmatpush1.xpose.msra.mxu0 0.0
      %1436 = vmatprep.subr.mxu0 0.0
      %1437 = vmatpush1.xpose.msra.mxu0 0.0
      %1438 = vmatprep.subr.mxu0 0.0
      %1439 = vmatpush1.xpose.msra.mxu0 0.0
      %1440 = vmatprep.subr.mxu0 0.0
      %1441 = vmatpush1.xpose.msra.mxu0 0.0
      %1442 = vmatprep.subr.mxu0 0.0
      %1443 = vmatpush1.xpose.msra.mxu0 0.0
      %1444 = vmatprep.subr.mxu0 0.0
      %1445 = vmatpush1.xpose.msra.mxu0 0.0
      %1446 = vmatprep.subr.mxu0 0.0
      %1447 = vmatpush1.xpose.msra.mxu0 0.0
      %1448 = vmatprep.subr.mxu0 0.0
      %1449 = vmatpush1.xpose.msra.mxu0 0.0
      %1450 = vmatprep.subr.mxu0 0.0
      %1451 = vmatpush1.xpose.msra.mxu0 0.0
      %1452 = vmatprep.subr.mxu0 0.0
      %1453 = vmatpush1.xpose.msra.mxu0 0.0
      %1454 = vmatprep.subr.mxu0 0.0
      %1455 = vmatpush1.xpose.msra.mxu0 0.0
      %1456 = vmatprep.subr.mxu0 0.0
      %1457 = vmatpush1.xpose.msra.mxu0 0.0
      %1458 = vmatprep.subr.mxu0 0.0
      %1459 = vmatpush1.xpose.msra.mxu0 0.0
      %1460 = vmatprep.subr.mxu0 0.0
      %1461 = vmatpush1.xpose.msra.mxu0 0.0
      %1462 = vmatprep.subr.mxu0 0.0
      %1463 = vmatpush1.xpose.msra.mxu0 0.0
      %1464 = vmatprep.subr.mxu0 0.0
      %1465 = vmatpush1.xpose.msra.mxu0 0.0
      %1466 = vmatprep.subr.mxu0 0.0
      %1467 = vmatpush1.xpose.msra.mxu0 0.0
      %1468 = vmatprep.subr.mxu0 0.0
      %1469 = vmatpush1.xpose.msra.mxu0 0.0
      %1470 = vmatprep.subr.mxu0 0.0
      %1471 = vmatpush1.xpose.msra.mxu0 0.0
      %1472 = vmatprep.subr.mxu0 0.0
      %1473 = vmatpush1.xpose.msra.mxu0 0.0
      %1474 = vmatprep.subr.mxu0 0.0
      %1475 = vmatpush1.xpose.msra.mxu0 0.0
      %1476 = vmatprep.subr.mxu0 0.0
      %1477 = vmatpush1.xpose.msra.mxu0 0.0
      %1478 = vmatprep.subr.mxu0 0.0
      %1479 = vmatpush1.xpose.msra.mxu0 0.0
      %1480 = vmatprep.subr.mxu0 0.0
      %1481 = vmatpush1.xpose.msra.mxu0 0.0
      %1482 = vmatprep.subr.mxu0 0.0
      %1483 = vmatpush1.xpose.msra.mxu0 0.0
      %1484 = vmatprep.subr.mxu0 0.0
      %1485 = vmatpush1.xpose.msra.mxu0 0.0
      %1486 = vmatprep.subr.mxu0 0.0
      %1487 = vmatpush1.xpose.msra.mxu0 0.0
      %1488 = vmatprep.subr.mxu0 0.0
      %1489 = vmatpush1.xpose.msra.mxu0 0.0
      %1490 = vmatprep.subr.mxu0 0.0
      %1491 = vmatpush1.xpose.msra.mxu0 0.0
      %1492 = vmatprep.mubr.f32.mxu0 0.0
      %1493 = vmatmul.mubr.f32.gmra.mrb[0].mxu0 %v1424
      %v1494 = vpop.f32.mrb[0].mxu0
      %v1495 = vadd.f32 0.0, %v1494
      %v1496 = vpop.f32.mrb[0].mxu0
      %1497 = vdwg.mxu0
      %1498 = vrot.lane.b32.xlu0 %v578, 96
      %v1499 = vpop.permute.xlu0 %1498
      %v1500 = vsel %vm587, %v578, 0
      %v1502 = vsel %vm587, %v1499, 0
      %1504 = vmatprep.subr.mxu0 0.0
      %1505 = vmatpush1.xpose.msra.mxu0 %v1502
      %1506 = vmatprep.subr.mxu0 0.0
      %1507 = vmatpush1.xpose.msra.mxu0 0.0
      %1508 = vmatprep.subr.mxu0 0.0
      %1509 = vmatpush1.xpose.msra.mxu0 0.0
      %1510 = vmatprep.subr.mxu0 0.0
      %1511 = vmatpush1.xpose.msra.mxu0 0.0
      %1512 = vmatprep.subr.mxu0 0.0
      %1513 = vmatpush1.xpose.msra.mxu0 0.0
      %1514 = vmatprep.subr.mxu0 0.0
      %1515 = vmatpush1.xpose.msra.mxu0 0.0
      %1516 = vmatprep.subr.mxu0 0.0
      %1517 = vmatpush1.xpose.msra.mxu0 0.0
      %1518 = vmatprep.subr.mxu0 0.0
      %1519 = vmatpush1.xpose.msra.mxu0 0.0
      %1520 = vmatprep.subr.mxu0 0.0
      %1521 = vmatpush1.xpose.msra.mxu0 0.0
      %1522 = vmatprep.subr.mxu0 0.0
      %1523 = vmatpush1.xpose.msra.mxu0 0.0
      %1524 = vmatprep.subr.mxu0 0.0
      %1525 = vmatpush1.xpose.msra.mxu0 0.0
      %1526 = vmatprep.subr.mxu0 0.0
      %1527 = vmatpush1.xpose.msra.mxu0 0.0
      %1528 = vmatprep.subr.mxu0 0.0
      %1529 = vmatpush1.xpose.msra.mxu0 0.0
      %1530 = vmatprep.subr.mxu0 0.0
      %1531 = vmatpush1.xpose.msra.mxu0 0.0
      %1532 = vmatprep.subr.mxu0 0.0
      %1533 = vmatpush1.xpose.msra.mxu0 0.0
      %1534 = vmatprep.subr.mxu0 0.0
      %1535 = vmatpush1.xpose.msra.mxu0 0.0
      %1536 = vmatprep.subr.mxu0 0.0
      %1537 = vmatpush1.xpose.msra.mxu0 0.0
      %1538 = vmatprep.subr.mxu0 0.0
      %1539 = vmatpush1.xpose.msra.mxu0 0.0
      %1540 = vmatprep.subr.mxu0 0.0
      %1541 = vmatpush1.xpose.msra.mxu0 0.0
      %1542 = vmatprep.subr.mxu0 0.0
      %1543 = vmatpush1.xpose.msra.mxu0 0.0
      %1544 = vmatprep.subr.mxu0 0.0
      %1545 = vmatpush1.xpose.msra.mxu0 0.0
      %1546 = vmatprep.subr.mxu0 0.0
      %1547 = vmatpush1.xpose.msra.mxu0 0.0
      %1548 = vmatprep.subr.mxu0 0.0
      %1549 = vmatpush1.xpose.msra.mxu0 0.0
      %1550 = vmatprep.subr.mxu0 0.0
      %1551 = vmatpush1.xpose.msra.mxu0 0.0
      %1552 = vmatprep.subr.mxu0 0.0
      %1553 = vmatpush1.xpose.msra.mxu0 0.0
      %1554 = vmatprep.subr.mxu0 0.0
      %1555 = vmatpush1.xpose.msra.mxu0 0.0
      %1556 = vmatprep.subr.mxu0 0.0
      %1557 = vmatpush1.xpose.msra.mxu0 0.0
      %1558 = vmatprep.subr.mxu0 0.0
      %1559 = vmatpush1.xpose.msra.mxu0 0.0
      %1560 = vmatprep.subr.mxu0 0.0
      %1561 = vmatpush1.xpose.msra.mxu0 0.0
      %1562 = vmatprep.subr.mxu0 0.0
      %1563 = vmatpush1.xpose.msra.mxu0 0.0
      %1564 = vmatprep.subr.mxu0 0.0
      %1565 = vmatpush1.xpose.msra.mxu0 0.0
      %1566 = vmatprep.subr.mxu0 0.0
      %1567 = vmatpush1.xpose.msra.mxu0 0.0
      %1568 = vmatprep.mubr.f32.mxu0 0.0
      %1569 = vmatmul.mubr.f32.gmra.mrb[0].mxu0 %v1500
      %v1570 = vpop.f32.mrb[0].mxu0
      %v1571 = vadd.f32 0.0, %v1570
      %v1572 = vpop.f32.mrb[0].mxu0
      %1573 = vdwg.mxu0
      %1574 = vrot.lane.b32.xlu0 %v580, 96
      %v1575 = vpop.permute.xlu0 %1574
      %v1576 = vsel %vm587, %v580, 0
      %v1578 = vsel %vm587, %v1575, 0
      %1580 = vmatprep.subr.mxu0 0.0
      %1581 = vmatpush1.xpose.msra.mxu0 %v1578
      %1582 = vmatprep.subr.mxu0 0.0
      %1583 = vmatpush1.xpose.msra.mxu0 0.0
      %1584 = vmatprep.subr.mxu0 0.0
      %1585 = vmatpush1.xpose.msra.mxu0 0.0
      %1586 = vmatprep.subr.mxu0 0.0
      %1587 = vmatpush1.xpose.msra.mxu0 0.0
      %1588 = vmatprep.subr.mxu0 0.0
      %1589 = vmatpush1.xpose.msra.mxu0 0.0
      %1590 = vmatprep.subr.mxu0 0.0
      %1591 = vmatpush1.xpose.msra.mxu0 0.0
      %1592 = vmatprep.subr.mxu0 0.0
      %1593 = vmatpush1.xpose.msra.mxu0 0.0
      %1594 = vmatprep.subr.mxu0 0.0
      %1595 = vmatpush1.xpose.msra.mxu0 0.0
      %1596 = vmatprep.subr.mxu0 0.0
      %1597 = vmatpush1.xpose.msra.mxu0 0.0
      %1598 = vmatprep.subr.mxu0 0.0
      %1599 = vmatpush1.xpose.msra.mxu0 0.0
      %1600 = vmatprep.subr.mxu0 0.0
      %1601 = vmatpush1.xpose.msra.mxu0 0.0
      %1602 = vmatprep.subr.mxu0 0.0
      %1603 = vmatpush1.xpose.msra.mxu0 0.0
      %1604 = vmatprep.subr.mxu0 0.0
      %1605 = vmatpush1.xpose.msra.mxu0 0.0
      %1606 = vmatprep.subr.mxu0 0.0
      %1607 = vmatpush1.xpose.msra.mxu0 0.0
      %1608 = vmatprep.subr.mxu0 0.0
      %1609 = vmatpush1.xpose.msra.mxu0 0.0
      %1610 = vmatprep.subr.mxu0 0.0
      %1611 = vmatpush1.xpose.msra.mxu0 0.0
      %1612 = vmatprep.subr.mxu0 0.0
      %1613 = vmatpush1.xpose.msra.mxu0 0.0
      %1614 = vmatprep.subr.mxu0 0.0
      %1615 = vmatpush1.xpose.msra.mxu0 0.0
      %1616 = vmatprep.subr.mxu0 0.0
      %1617 = vmatpush1.xpose.msra.mxu0 0.0
      %1618 = vmatprep.subr.mxu0 0.0
      %1619 = vmatpush1.xpose.msra.mxu0 0.0
      %1620 = vmatprep.subr.mxu0 0.0
      %1621 = vmatpush1.xpose.msra.mxu0 0.0
      %1622 = vmatprep.subr.mxu0 0.0
      %1623 = vmatpush1.xpose.msra.mxu0 0.0
      %1624 = vmatprep.subr.mxu0 0.0
      %1625 = vmatpush1.xpose.msra.mxu0 0.0
      %1626 = vmatprep.subr.mxu0 0.0
      %1627 = vmatpush1.xpose.msra.mxu0 0.0
      %1628 = vmatprep.subr.mxu0 0.0
      %1629 = vmatpush1.xpose.msra.mxu0 0.0
      %1630 = vmatprep.subr.mxu0 0.0
      %1631 = vmatpush1.xpose.msra.mxu0 0.0
      %1632 = vmatprep.subr.mxu0 0.0
      %1633 = vmatpush1.xpose.msra.mxu0 0.0
      %1634 = vmatprep.subr.mxu0 0.0
      %1635 = vmatpush1.xpose.msra.mxu0 0.0
      %1636 = vmatprep.subr.mxu0 0.0
      %1637 = vmatpush1.xpose.msra.mxu0 0.0
      %1638 = vmatprep.subr.mxu0 0.0
      %1639 = vmatpush1.xpose.msra.mxu0 0.0
      %1640 = vmatprep.subr.mxu0 0.0
      %1641 = vmatpush1.xpose.msra.mxu0 0.0
      %1642 = vmatprep.subr.mxu0 0.0
      %1643 = vmatpush1.xpose.msra.mxu0 0.0
      %1644 = vmatprep.mubr.f32.mxu0 0.0
      %1645 = vmatmul.mubr.f32.gmra.mrb[0].mxu0 %v1576
      %v1646 = vpop.f32.mrb[0].mxu0
      %v1647 = vadd.f32 0.0, %v1646
      %v1648 = vpop.f32.mrb[0].mxu0
      %1649 = vdwg.mxu0
      %1650 = vrot.lane.b32.xlu0 %v582, 96
      %v1651 = vpop.permute.xlu0 %1650
      %v1652 = vsel %vm587, %v582, 0
      %v1654 = vsel %vm587, %v1651, 0
      %1656 = vmatprep.subr.mxu0 0.0
      %1657 = vmatpush1.xpose.msra.mxu0 %v1654
      %1658 = vmatprep.subr.mxu0 0.0
      %1659 = vmatpush1.xpose.msra.mxu0 0.0
      %1660 = vmatprep.subr.mxu0 0.0
      %1661 = vmatpush1.xpose.msra.mxu0 0.0
      %1662 = vmatprep.subr.mxu0 0.0
      %1663 = vmatpush1.xpose.msra.mxu0 0.0
      %1664 = vmatprep.subr.mxu0 0.0
      %1665 = vmatpush1.xpose.msra.mxu0 0.0
      %1666 = vmatprep.subr.mxu0 0.0
      %1667 = vmatpush1.xpose.msra.mxu0 0.0
      %1668 = vmatprep.subr.mxu0 0.0
      %1669 = vmatpush1.xpose.msra.mxu0 0.0
      %1670 = vmatprep.subr.mxu0 0.0
      %1671 = vmatpush1.xpose.msra.mxu0 0.0
      %1672 = vmatprep.subr.mxu0 0.0
      %1673 = vmatpush1.xpose.msra.mxu0 0.0
      %1674 = vmatprep.subr.mxu0 0.0
      %1675 = vmatpush1.xpose.msra.mxu0 0.0
      %1676 = vmatprep.subr.mxu0 0.0
      %1677 = vmatpush1.xpose.msra.mxu0 0.0
      %1678 = vmatprep.subr.mxu0 0.0
      %1679 = vmatpush1.xpose.msra.mxu0 0.0
      %1680 = vmatprep.subr.mxu0 0.0
      %1681 = vmatpush1.xpose.msra.mxu0 0.0
      %1682 = vmatprep.subr.mxu0 0.0
      %1683 = vmatpush1.xpose.msra.mxu0 0.0
      %1684 = vmatprep.subr.mxu0 0.0
      %1685 = vmatpush1.xpose.msra.mxu0 0.0
      %1686 = vmatprep.subr.mxu0 0.0
      %1687 = vmatpush1.xpose.msra.mxu0 0.0
      %1688 = vmatprep.subr.mxu0 0.0
      %1689 = vmatpush1.xpose.msra.mxu0 0.0
      %1690 = vmatprep.subr.mxu0 0.0
      %1691 = vmatpush1.xpose.msra.mxu0 0.0
      %1692 = vmatprep.subr.mxu0 0.0
      %1693 = vmatpush1.xpose.msra.mxu0 0.0
      %1694 = vmatprep.subr.mxu0 0.0
      %1695 = vmatpush1.xpose.msra.mxu0 0.0
      %1696 = vmatprep.subr.mxu0 0.0
      %1697 = vmatpush1.xpose.msra.mxu0 0.0
      %1698 = vmatprep.subr.mxu0 0.0
      %1699 = vmatpush1.xpose.msra.mxu0 0.0
      %1700 = vmatprep.subr.mxu0 0.0
      %1701 = vmatpush1.xpose.msra.mxu0 0.0
      %1702 = vmatprep.subr.mxu0 0.0
      %1703 = vmatpush1.xpose.msra.mxu0 0.0
      %1704 = vmatprep.subr.mxu0 0.0
      %1705 = vmatpush1.xpose.msra.mxu0 0.0
      %1706 = vmatprep.subr.mxu0 0.0
      %1707 = vmatpush1.xpose.msra.mxu0 0.0
      %1708 = vmatprep.subr.mxu0 0.0
      %1709 = vmatpush1.xpose.msra.mxu0 0.0
      %1710 = vmatprep.subr.mxu0 0.0
      %1711 = vmatpush1.xpose.msra.mxu0 0.0
      %1712 = vmatprep.subr.mxu0 0.0
      %1713 = vmatpush1.xpose.msra.mxu0 0.0
      %1714 = vmatprep.subr.mxu0 0.0
      %1715 = vmatpush1.xpose.msra.mxu0 0.0
      %1716 = vmatprep.subr.mxu0 0.0
      %1717 = vmatpush1.xpose.msra.mxu0 0.0
      %1718 = vmatprep.subr.mxu0 0.0
      %1719 = vmatpush1.xpose.msra.mxu0 0.0
      %1720 = vmatprep.mubr.f32.mxu0 0.0
      %1721 = vmatmul.mubr.f32.gmra.mrb[0].mxu0 %v1652
      %v1722 = vpop.f32.mrb[0].mxu0
      %v1723 = vadd.f32 0.0, %v1722
      %v1724 = vpop.f32.mrb[0].mxu0
      %1725 = vdwg.mxu0
      %1726 = vrot.lane.b32.xlu0 %v584, 96
      %v1727 = vpop.permute.xlu0 %1726
      %v1728 = vsel %vm587, %v584, 0
      %v1730 = vsel %vm587, %v1727, 0
      %1732 = vmatprep.subr.mxu0 0.0
      %1733 = vmatpush1.xpose.msra.mxu0 %v1730
      %1734 = vmatprep.subr.mxu0 0.0
      %1735 = vmatpush1.xpose.msra.mxu0 0.0
      %1736 = vmatprep.subr.mxu0 0.0
      %1737 = vmatpush1.xpose.msra.mxu0 0.0
      %1738 = vmatprep.subr.mxu0 0.0
      %1739 = vmatpush1.xpose.msra.mxu0 0.0
      %1740 = vmatprep.subr.mxu0 0.0
      %1741 = vmatpush1.xpose.msra.mxu0 0.0
      %1742 = vmatprep.subr.mxu0 0.0
      %1743 = vmatpush1.xpose.msra.mxu0 0.0
      %1744 = vmatprep.subr.mxu0 0.0
      %1745 = vmatpush1.xpose.msra.mxu0 0.0
      %1746 = vmatprep.subr.mxu0 0.0
      %1747 = vmatpush1.xpose.msra.mxu0 0.0
      %1748 = vmatprep.subr.mxu0 0.0
      %1749 = vmatpush1.xpose.msra.mxu0 0.0
      %1750 = vmatprep.subr.mxu0 0.0
      %1751 = vmatpush1.xpose.msra.mxu0 0.0
      %1752 = vmatprep.subr.mxu0 0.0
      %1753 = vmatpush1.xpose.msra.mxu0 0.0
      %1754 = vmatprep.subr.mxu0 0.0
      %1755 = vmatpush1.xpose.msra.mxu0 0.0
      %1756 = vmatprep.subr.mxu0 0.0
      %1757 = vmatpush1.xpose.msra.mxu0 0.0
      %1758 = vmatprep.subr.mxu0 0.0
      %1759 = vmatpush1.xpose.msra.mxu0 0.0
      %1760 = vmatprep.subr.mxu0 0.0
      %1761 = vmatpush1.xpose.msra.mxu0 0.0
      %1762 = vmatprep.subr.mxu0 0.0
      %1763 = vmatpush1.xpose.msra.mxu0 0.0
      %1764 = vmatprep.subr.mxu0 0.0
      %1765 = vmatpush1.xpose.msra.mxu0 0.0
      %1766 = vmatprep.subr.mxu0 0.0
      %1767 = vmatpush1.xpose.msra.mxu0 0.0
      %1768 = vmatprep.subr.mxu0 0.0
      %1769 = vmatpush1.xpose.msra.mxu0 0.0
      %1770 = vmatprep.subr.mxu0 0.0
      %1771 = vmatpush1.xpose.msra.mxu0 0.0
      %1772 = vmatprep.subr.mxu0 0.0
      %1773 = vmatpush1.xpose.msra.mxu0 0.0
      %1774 = vmatprep.subr.mxu0 0.0
      %1775 = vmatpush1.xpose.msra.mxu0 0.0
      %1776 = vmatprep.subr.mxu0 0.0
      %1777 = vmatpush1.xpose.msra.mxu0 0.0
      %1778 = vmatprep.subr.mxu0 0.0
      %1779 = vmatpush1.xpose.msra.mxu0 0.0
      %1780 = vmatprep.subr.mxu0 0.0
      %1781 = vmatpush1.xpose.msra.mxu0 0.0
      %1782 = vmatprep.subr.mxu0 0.0
      %1783 = vmatpush1.xpose.msra.mxu0 0.0
      %1784 = vmatprep.subr.mxu0 0.0
      %1785 = vmatpush1.xpose.msra.mxu0 0.0
      %1786 = vmatprep.subr.mxu0 0.0
      %1787 = vmatpush1.xpose.msra.mxu0 0.0
      %1788 = vmatprep.subr.mxu0 0.0
      %1789 = vmatpush1.xpose.msra.mxu0 0.0
      %1790 = vmatprep.subr.mxu0 0.0
      %1791 = vmatpush1.xpose.msra.mxu0 0.0
      %1792 = vmatprep.subr.mxu0 0.0
      %1793 = vmatpush1.xpose.msra.mxu0 0.0
      %1794 = vmatprep.subr.mxu0 0.0
      %1795 = vmatpush1.xpose.msra.mxu0 0.0
      %1796 = vmatprep.mubr.f32.mxu0 0.0
      %1797 = vmatmul.mubr.f32.gmra.mrb[0].mxu0 %v1728
      %v1798 = vpop.f32.mrb[0].mxu0
      %v1799 = vadd.f32 0.0, %v1798
      %v1800 = vpop.f32.mrb[0].mxu0
      %1801 = vdwg.mxu0
      %v1802 = vmul.f32 %v659, 0.35355338
      %v1803 = vmul.f32 %v735, 0.35355338
      %v1804 = vmul.f32 %v811, 0.35355338
      %v1805 = vmul.f32 %v887, 0.35355338
      %v1806 = vmul.f32 %v963, 0.35355338
      %v1807 = vmul.f32 %v1039, 0.35355338
      %v1808 = vmul.f32 %v1115, 0.35355338
      %v1809 = vmul.f32 %v1191, 0.35355338
      %v1810 = vmul.f32 %v1267, 0.35355338
      %v1811 = vmul.f32 %v1343, 0.35355338
      %v1812 = vmul.f32 %v1419, 0.35355338
      %v1813 = vmul.f32 %v1495, 0.35355338
      %v1814 = vmul.f32 %v1571, 0.35355338
      %v1815 = vmul.f32 %v1647, 0.35355338
      %v1816 = vmul.f32 %v1723, 0.35355338
      %v1817 = vmul.f32 %v1799, 0.35355338
      %v1818 = vsel %vm587, %v1802, -inf
      %1819 = vmax.xlane.f32.xlu0 %v1818
      %v1820 = vpop.xlane.xlu0 %1819
      %v1821 = vsel %vm587, %v1803, -inf
      %1822 = vmax.xlane.f32.xlu0 %v1821
      %v1823 = vpop.xlane.xlu0 %1822
      %v1824 = vsel %vm587, %v1804, -inf
      %1825 = vmax.xlane.f32.xlu0 %v1824
      %v1826 = vpop.xlane.xlu0 %1825
      %v1827 = vsel %vm587, %v1805, -inf
      %1828 = vmax.xlane.f32.xlu0 %v1827
      %v1829 = vpop.xlane.xlu0 %1828
      %v1830 = vsel %vm587, %v1806, -inf
      %1831 = vmax.xlane.f32.xlu0 %v1830
      %v1832 = vpop.xlane.xlu0 %1831
      %v1833 = vsel %vm587, %v1807, -inf
      %1834 = vmax.xlane.f32.xlu0 %v1833
      %v1835 = vpop.xlane.xlu0 %1834
      %v1836 = vsel %vm587, %v1808, -inf
      %1837 = vmax.xlane.f32.xlu0 %v1836
      %v1838 = vpop.xlane.xlu0 %1837
      %v1839 = vsel %vm587, %v1809, -inf
      %1840 = vmax.xlane.f32.xlu0 %v1839
      %v1841 = vpop.xlane.xlu0 %1840
      %v1842 = vsel %vm587, %v1810, -inf
      %1843 = vmax.xlane.f32.xlu0 %v1842
      %v1844 = vpop.xlane.xlu0 %1843
      %v1845 = vsel %vm587, %v1811, -inf
      %1846 = vmax.xlane.f32.xlu0 %v1845
      %v1847 = vpop.xlane.xlu0 %1846
      %v1848 = vsel %vm587, %v1812, -inf
      %1849 = vmax.xlane.f32.xlu0 %v1848
      %v1850 = vpop.xlane.xlu0 %1849
      %v1851 = vsel %vm587, %v1813, -inf
      %1852 = vmax.xlane.f32.xlu0 %v1851
      %v1853 = vpop.xlane.xlu0 %1852
      %v1854 = vsel %vm587, %v1814, -inf
      %1855 = vmax.xlane.f32.xlu0 %v1854
      %v1856 = vpop.xlane.xlu0 %1855
      %v1857 = vsel %vm587, %v1815, -inf
      %1858 = vmax.xlane.f32.xlu0 %v1857
      %v1859 = vpop.xlane.xlu0 %1858
      %v1860 = vsel %vm587, %v1816, -inf
      %1861 = vmax.xlane.f32.xlu0 %v1860
      %v1862 = vpop.xlane.xlu0 %1861
      %v1863 = vsel %vm587, %v1817, -inf
      %1864 = vmax.xlane.f32.xlu0 %v1863
      %v1865 = vpop.xlane.xlu0 %1864
      %v1866 = vsub.f32 %v1802, %v1820
      %v1867 = vsub.f32 %v1803, %v1823
      %v1868 = vsub.f32 %v1804, %v1826
      %v1869 = vsub.f32 %v1805, %v1829
      %v1870 = vsub.f32 %v1806, %v1832
      %v1871 = vsub.f32 %v1807, %v1835
      %v1872 = vsub.f32 %v1808, %v1838
      %v1873 = vsub.f32 %v1809, %v1841
      %v1874 = vsub.f32 %v1810, %v1844
      %v1875 = vsub.f32 %v1811, %v1847
      %v1876 = vsub.f32 %v1812, %v1850
      %v1877 = vsub.f32 %v1813, %v1853
      %v1878 = vsub.f32 %v1814, %v1856
      %v1879 = vsub.f32 %v1815, %v1859
      %v1880 = vsub.f32 %v1816, %v1862
      %v1881 = vsub.f32 %v1817, %v1865
      %v1882 = vmul.f32 %v1866, 1.442695
      %v1883 = vpow.pop %v1882
      %v1884 = vmul.f32 %v1867, 1.442695
      %v1885 = vpow.pop %v1884
      %v1886 = vmul.f32 %v1868, 1.442695
      %v1887 = vpow.pop %v1886
      %v1888 = vmul.f32 %v1869, 1.442695
      %v1889 = vpow.pop %v1888
      %v1890 = vmul.f32 %v1870, 1.442695
      %v1891 = vpow.pop %v1890
      %v1892 = vmul.f32 %v1871, 1.442695
      %v1893 = vpow.pop %v1892
      %v1894 = vmul.f32 %v1872, 1.442695
      %v1895 = vpow.pop %v1894
      %v1896 = vmul.f32 %v1873, 1.442695
      %v1897 = vpow.pop %v1896
      %v1898 = vmul.f32 %v1874, 1.442695
      %v1899 = vpow.pop %v1898
      %v1900 = vmul.f32 %v1875, 1.442695
      %v1901 = vpow.pop %v1900
      %v1902 = vmul.f32 %v1876, 1.442695
      %v1903 = vpow.pop %v1902
      %v1904 = vmul.f32 %v1877, 1.442695
      %v1905 = vpow.pop %v1904
      %v1906 = vmul.f32 %v1878, 1.442695
      %v1907 = vpow.pop %v1906
      %v1908 = vmul.f32 %v1879, 1.442695
      %v1909 = vpow.pop %v1908
      %v1910 = vmul.f32 %v1880, 1.442695
      %v1911 = vpow.pop %v1910
      %v1912 = vmul.f32 %v1881, 1.442695
      %v1913 = vpow.pop %v1912
      %v1914 = vsel %vm587, %v1883, 0.0
      %1915 = vadd.xlane.f32.xlu0 %v1914
      %v1916 = vpop.xlane.xlu0 %1915
      %v1917 = vsel %vm587, %v1885, 0.0
      %1918 = vadd.xlane.f32.xlu0 %v1917
      %v1919 = vpop.xlane.xlu0 %1918
      %v1920 = vsel %vm587, %v1887, 0.0
      %1921 = vadd.xlane.f32.xlu0 %v1920
      %v1922 = vpop.xlane.xlu0 %1921
      %v1923 = vsel %vm587, %v1889, 0.0
      %1924 = vadd.xlane.f32.xlu0 %v1923
      %v1925 = vpop.xlane.xlu0 %1924
      %v1926 = vsel %vm587, %v1891, 0.0
      %1927 = vadd.xlane.f32.xlu0 %v1926
      %v1928 = vpop.xlane.xlu0 %1927
      %v1929 = vsel %vm587, %v1893, 0.0
      %1930 = vadd.xlane.f32.xlu0 %v1929
      %v1931 = vpop.xlane.xlu0 %1930
      %v1932 = vsel %vm587, %v1895, 0.0
      %1933 = vadd.xlane.f32.xlu0 %v1932
      %v1934 = vpop.xlane.xlu0 %1933
      %v1935 = vsel %vm587, %v1897, 0.0
      %1936 = vadd.xlane.f32.xlu0 %v1935
      %v1937 = vpop.xlane.xlu0 %1936
      %v1938 = vsel %vm587, %v1899, 0.0
      %1939 = vadd.xlane.f32.xlu0 %v1938
      %v1940 = vpop.xlane.xlu0 %1939
      %v1941 = vsel %vm587, %v1901, 0.0
      %1942 = vadd.xlane.f32.xlu0 %v1941
      %v1943 = vpop.xlane.xlu0 %1942
      %v1944 = vsel %vm587, %v1903, 0.0
      %1945 = vadd.xlane.f32.xlu0 %v1944
      %v1946 = vpop.xlane.xlu0 %1945
      %v1947 = vsel %vm587, %v1905, 0.0
      %1948 = vadd.xlane.f32.xlu0 %v1947
      %v1949 = vpop.xlane.xlu0 %1948
      %v1950 = vsel %vm587, %v1907, 0.0
      %1951 = vadd.xlane.f32.xlu0 %v1950
      %v1952 = vpop.xlane.xlu0 %1951
      %v1953 = vsel %vm587, %v1909, 0.0
      %1954 = vadd.xlane.f32.xlu0 %v1953
      %v1955 = vpop.xlane.xlu0 %1954
      %v1956 = vsel %vm587, %v1911, 0.0
      %1957 = vadd.xlane.f32.xlu0 %v1956
      %v1958 = vpop.xlane.xlu0 %1957
      %v1959 = vsel %vm587, %v1913, 0.0
      %1960 = vadd.xlane.f32.xlu0 %v1959
      %v1961 = vpop.xlane.xlu0 %1960
      %v1962 = vrcp.pop %v1916
      %v1963 = vrcp.pop %v1919
      %v1964 = vrcp.pop %v1922
      %v1965 = vrcp.pop %v1925
      %v1966 = vrcp.pop %v1928
      %v1967 = vrcp.pop %v1931
      %v1968 = vrcp.pop %v1934
      %v1969 = vrcp.pop %v1937
      %v1970 = vrcp.pop %v1940
      %v1971 = vrcp.pop %v1943
      %v1972 = vrcp.pop %v1946
      %v1973 = vrcp.pop %v1949
      %v1974 = vrcp.pop %v1952
      %v1975 = vrcp.pop %v1955
      %v1976 = vrcp.pop %v1958
      %v1977 = vrcp.pop %v1961
      %v1978 = vmul.f32 %v1883, %v1962
      %v1979 = vmul.f32 %v1885, %v1963
      %v1980 = vmul.f32 %v1887, %v1964
      %v1981 = vmul.f32 %v1889, %v1965
      %v1982 = vmul.f32 %v1891, %v1966
      %v1983 = vmul.f32 %v1893, %v1967
      %v1984 = vmul.f32 %v1895, %v1968
      %v1985 = vmul.f32 %v1897, %v1969
      %v1986 = vmul.f32 %v1899, %v1970
      %v1987 = vmul.f32 %v1901, %v1971
      %v1988 = vmul.f32 %v1903, %v1972
      %v1989 = vmul.f32 %v1905, %v1973
      %v1990 = vmul.f32 %v1907, %v1974
      %v1991 = vmul.f32 %v1909, %v1975
      %v1992 = vmul.f32 %v1911, %v1976
      %v1993 = vmul.f32 %v1913, %v1977
      %1994 = vrot.lane.b32.xlu0 %v539, 64
      %v1995 = vpop.permute.xlu0 %1994
      %v1998 = vsel %vm587, %v1978, 0
      %2000 = vmatprep.subr.mxu0 0.0
      %2001 = vmatpush1.msra.mxu0 %v1995
      %2002 = vmatprep.subr.mxu0 0.0
      %2003 = vmatpush1.msra.mxu0 0.0
      %2004 = vmatprep.subr.mxu0 0.0
      %2005 = vmatpush1.msra.mxu0 0.0
      %2006 = vmatprep.subr.mxu0 0.0
      %2007 = vmatpush1.msra.mxu0 0.0
      %2008 = vmatprep.subr.mxu0 0.0
      %2009 = vmatpush1.msra.mxu0 0.0
      %2010 = vmatprep.subr.mxu0 0.0
      %2011 = vmatpush1.msra.mxu0 0.0
      %2012 = vmatprep.subr.mxu0 0.0
      %2013 = vmatpush1.msra.mxu0 0.0
      %2014 = vmatprep.subr.mxu0 0.0
      %2015 = vmatpush1.msra.mxu0 0.0
      %2016 = vmatprep.subr.mxu0 0.0
      %2017 = vmatpush1.msra.mxu0 0.0
      %2018 = vmatprep.subr.mxu0 0.0
      %2019 = vmatpush1.msra.mxu0 0.0
      %2020 = vmatprep.subr.mxu0 0.0
      %2021 = vmatpush1.msra.mxu0 0.0
      %2022 = vmatprep.subr.mxu0 0.0
      %2023 = vmatpush1.msra.mxu0 0.0
      %2024 = vmatprep.subr.mxu0 0.0
      %2025 = vmatpush1.msra.mxu0 0.0
      %2026 = vmatprep.subr.mxu0 0.0
      %2027 = vmatpush1.msra.mxu0 0.0
      %2028 = vmatprep.subr.mxu0 0.0
      %2029 = vmatpush1.msra.mxu0 0.0
      %2030 = vmatprep.subr.mxu0 0.0
      %2031 = vmatpush1.msra.mxu0 0.0
      %2032 = vmatprep.subr.mxu0 0.0
      %2033 = vmatpush1.msra.mxu0 0.0
      %2034 = vmatprep.subr.mxu0 0.0
      %2035 = vmatpush1.msra.mxu0 0.0
      %2036 = vmatprep.subr.mxu0 0.0
      %2037 = vmatpush1.msra.mxu0 0.0
      %2038 = vmatprep.subr.mxu0 0.0
      %2039 = vmatpush1.msra.mxu0 0.0
      %2040 = vmatprep.subr.mxu0 0.0
      %2041 = vmatpush1.msra.mxu0 0.0
      %2042 = vmatprep.subr.mxu0 0.0
      %2043 = vmatpush1.msra.mxu0 0.0
      %2044 = vmatprep.subr.mxu0 0.0
      %2045 = vmatpush1.msra.mxu0 0.0
      %2046 = vmatprep.subr.mxu0 0.0
      %2047 = vmatpush1.msra.mxu0 0.0
      %2048 = vmatprep.subr.mxu0 0.0
      %2049 = vmatpush1.msra.mxu0 0.0
      %2050 = vmatprep.subr.mxu0 0.0
      %2051 = vmatpush1.msra.mxu0 0.0
      %2052 = vmatprep.subr.mxu0 0.0
      %2053 = vmatpush1.msra.mxu0 0.0
      %2054 = vmatprep.subr.mxu0 0.0
      %2055 = vmatpush1.msra.mxu0 0.0
      %2056 = vmatprep.subr.mxu0 0.0
      %2057 = vmatpush1.msra.mxu0 0.0
      %2058 = vmatprep.subr.mxu0 0.0
      %2059 = vmatpush1.msra.mxu0 0.0
      %2060 = vmatprep.subr.mxu0 0.0
      %2061 = vmatpush1.msra.mxu0 0.0
      %2062 = vmatprep.subr.mxu0 0.0
      %2063 = vmatpush1.msra.mxu0 0.0
      %2064 = vmatprep.mubr.f32.mxu0 0.0
      %2065 = vmatmul.mubr.f32.gmra.mrb[0].mxu0 %v1998
      %v2066 = vpop.f32.mrb[0].mxu0
      %v2067 = vadd.f32 0.0, %v2066
      %v2068 = vpop.f32.mrb[0].mxu0
      %2069 = vdwg.mxu0
      %2070 = vrot.lane.b32.xlu0 %v544, 64
      %v2071 = vpop.permute.xlu0 %2070
      %v2074 = vsel %vm587, %v1979, 0
      %2076 = vmatprep.subr.mxu0 0.0
      %2077 = vmatpush1.msra.mxu0 %v2071
      %2078 = vmatprep.subr.mxu0 0.0
      %2079 = vmatpush1.msra.mxu0 0.0
      %2080 = vmatprep.subr.mxu0 0.0
      %2081 = vmatpush1.msra.mxu0 0.0
      %2082 = vmatprep.subr.mxu0 0.0
      %2083 = vmatpush1.msra.mxu0 0.0
      %2084 = vmatprep.subr.mxu0 0.0
      %2085 = vmatpush1.msra.mxu0 0.0
      %2086 = vmatprep.subr.mxu0 0.0
      %2087 = vmatpush1.msra.mxu0 0.0
      %2088 = vmatprep.subr.mxu0 0.0
      %2089 = vmatpush1.msra.mxu0 0.0
      %2090 = vmatprep.subr.mxu0 0.0
      %2091 = vmatpush1.msra.mxu0 0.0
      %2092 = vmatprep.subr.mxu0 0.0
      %2093 = vmatpush1.msra.mxu0 0.0
      %2094 = vmatprep.subr.mxu0 0.0
      %2095 = vmatpush1.msra.mxu0 0.0
      %2096 = vmatprep.subr.mxu0 0.0
      %2097 = vmatpush1.msra.mxu0 0.0
      %2098 = vmatprep.subr.mxu0 0.0
      %2099 = vmatpush1.msra.mxu0 0.0
      %2100 = vmatprep.subr.mxu0 0.0
      %2101 = vmatpush1.msra.mxu0 0.0
      %2102 = vmatprep.subr.mxu0 0.0
      %2103 = vmatpush1.msra.mxu0 0.0
      %2104 = vmatprep.subr.mxu0 0.0
      %2105 = vmatpush1.msra.mxu0 0.0
      %2106 = vmatprep.subr.mxu0 0.0
      %2107 = vmatpush1.msra.mxu0 0.0
      %2108 = vmatprep.subr.mxu0 0.0
      %2109 = vmatpush1.msra.mxu0 0.0
      %2110 = vmatprep.subr.mxu0 0.0
      %2111 = vmatpush1.msra.mxu0 0.0
      %2112 = vmatprep.subr.mxu0 0.0
      %2113 = vmatpush1.msra.mxu0 0.0
      %2114 = vmatprep.subr.mxu0 0.0
      %2115 = vmatpush1.msra.mxu0 0.0
      %2116 = vmatprep.subr.mxu0 0.0
      %2117 = vmatpush1.msra.mxu0 0.0
      %2118 = vmatprep.subr.mxu0 0.0
      %2119 = vmatpush1.msra.mxu0 0.0
      %2120 = vmatprep.subr.mxu0 0.0
      %2121 = vmatpush1.msra.mxu0 0.0
      %2122 = vmatprep.subr.mxu0 0.0
      %2123 = vmatpush1.msra.mxu0 0.0
      %2124 = vmatprep.subr.mxu0 0.0
      %2125 = vmatpush1.msra.mxu0 0.0
      %2126 = vmatprep.subr.mxu0 0.0
      %2127 = vmatpush1.msra.mxu0 0.0
      %2128 = vmatprep.subr.mxu0 0.0
      %2129 = vmatpush1.msra.mxu0 0.0
      %2130 = vmatprep.subr.mxu0 0.0
      %2131 = vmatpush1.msra.mxu0 0.0
      %2132 = vmatprep.subr.mxu0 0.0
      %2133 = vmatpush1.msra.mxu0 0.0
      %2134 = vmatprep.subr.mxu0 0.0
      %2135 = vmatpush1.msra.mxu0 0.0
      %2136 = vmatprep.subr.mxu0 0.0
      %2137 = vmatpush1.msra.mxu0 0.0
      %2138 = vmatprep.subr.mxu0 0.0
      %2139 = vmatpush1.msra.mxu0 0.0
      %2140 = vmatprep.mubr.f32.mxu0 0.0
      %2141 = vmatmul.mubr.f32.gmra.mrb[0].mxu0 %v2074
      %v2142 = vpop.f32.mrb[0].mxu0
      %v2143 = vadd.f32 0.0, %v2142
      %v2144 = vpop.f32.mrb[0].mxu0
      %2145 = vdwg.mxu0
      %2146 = vrot.lane.b32.xlu0 %v549, 64
      %v2147 = vpop.permute.xlu0 %2146
      %v2150 = vsel %vm587, %v1980, 0
      %2152 = vmatprep.subr.mxu0 0.0
      %2153 = vmatpush1.msra.mxu0 %v2147
      %2154 = vmatprep.subr.mxu0 0.0
      %2155 = vmatpush1.msra.mxu0 0.0
      %2156 = vmatprep.subr.mxu0 0.0
      %2157 = vmatpush1.msra.mxu0 0.0
      %2158 = vmatprep.subr.mxu0 0.0
      %2159 = vmatpush1.msra.mxu0 0.0
      %2160 = vmatprep.subr.mxu0 0.0
      %2161 = vmatpush1.msra.mxu0 0.0
      %2162 = vmatprep.subr.mxu0 0.0
      %2163 = vmatpush1.msra.mxu0 0.0
      %2164 = vmatprep.subr.mxu0 0.0
      %2165 = vmatpush1.msra.mxu0 0.0
      %2166 = vmatprep.subr.mxu0 0.0
      %2167 = vmatpush1.msra.mxu0 0.0
      %2168 = vmatprep.subr.mxu0 0.0
      %2169 = vmatpush1.msra.mxu0 0.0
      %2170 = vmatprep.subr.mxu0 0.0
      %2171 = vmatpush1.msra.mxu0 0.0
      %2172 = vmatprep.subr.mxu0 0.0
      %2173 = vmatpush1.msra.mxu0 0.0
      %2174 = vmatprep.subr.mxu0 0.0
      %2175 = vmatpush1.msra.mxu0 0.0
      %2176 = vmatprep.subr.mxu0 0.0
      %2177 = vmatpush1.msra.mxu0 0.0
      %2178 = vmatprep.subr.mxu0 0.0
      %2179 = vmatpush1.msra.mxu0 0.0
      %2180 = vmatprep.subr.mxu0 0.0
      %2181 = vmatpush1.msra.mxu0 0.0
      %2182 = vmatprep.subr.mxu0 0.0
      %2183 = vmatpush1.msra.mxu0 0.0
      %2184 = vmatprep.subr.mxu0 0.0
      %2185 = vmatpush1.msra.mxu0 0.0
      %2186 = vmatprep.subr.mxu0 0.0
      %2187 = vmatpush1.msra.mxu0 0.0
      %2188 = vmatprep.subr.mxu0 0.0
      %2189 = vmatpush1.msra.mxu0 0.0
      %2190 = vmatprep.subr.mxu0 0.0
      %2191 = vmatpush1.msra.mxu0 0.0
      %2192 = vmatprep.subr.mxu0 0.0
      %2193 = vmatpush1.msra.mxu0 0.0
      %2194 = vmatprep.subr.mxu0 0.0
      %2195 = vmatpush1.msra.mxu0 0.0
      %2196 = vmatprep.subr.mxu0 0.0
      %2197 = vmatpush1.msra.mxu0 0.0
      %2198 = vmatprep.subr.mxu0 0.0
      %2199 = vmatpush1.msra.mxu0 0.0
      %2200 = vmatprep.subr.mxu0 0.0
      %2201 = vmatpush1.msra.mxu0 0.0
      %2202 = vmatprep.subr.mxu0 0.0
      %2203 = vmatpush1.msra.mxu0 0.0
      %2204 = vmatprep.subr.mxu0 0.0
      %2205 = vmatpush1.msra.mxu0 0.0
      %2206 = vmatprep.subr.mxu0 0.0
      %2207 = vmatpush1.msra.mxu0 0.0
      %2208 = vmatprep.subr.mxu0 0.0
      %2209 = vmatpush1.msra.mxu0 0.0
      %2210 = vmatprep.subr.mxu0 0.0
      %2211 = vmatpush1.msra.mxu0 0.0
      %2212 = vmatprep.subr.mxu0 0.0
      %2213 = vmatpush1.msra.mxu0 0.0
      %2214 = vmatprep.subr.mxu0 0.0
      %2215 = vmatpush1.msra.mxu0 0.0
      %2216 = vmatprep.mubr.f32.mxu0 0.0
      %2217 = vmatmul.mubr.f32.gmra.mrb[0].mxu0 %v2150
      %v2218 = vpop.f32.mrb[0].mxu0
      %v2219 = vadd.f32 0.0, %v2218
      %v2220 = vpop.f32.mrb[0].mxu0
      %2221 = vdwg.mxu0
      %2222 = vrot.lane.b32.xlu0 %v554, 64
      %v2223 = vpop.permute.xlu0 %2222
      %v2226 = vsel %vm587, %v1981, 0
      %2228 = vmatprep.subr.mxu0 0.0
      %2229 = vmatpush1.msra.mxu0 %v2223
      %2230 = vmatprep.subr.mxu0 0.0
      %2231 = vmatpush1.msra.mxu0 0.0
      %2232 = vmatprep.subr.mxu0 0.0
      %2233 = vmatpush1.msra.mxu0 0.0
      %2234 = vmatprep.subr.mxu0 0.0
      %2235 = vmatpush1.msra.mxu0 0.0
      %2236 = vmatprep.subr.mxu0 0.0
      %2237 = vmatpush1.msra.mxu0 0.0
      %2238 = vmatprep.subr.mxu0 0.0
      %2239 = vmatpush1.msra.mxu0 0.0
      %2240 = vmatprep.subr.mxu0 0.0
      %2241 = vmatpush1.msra.mxu0 0.0
      %2242 = vmatprep.subr.mxu0 0.0
      %2243 = vmatpush1.msra.mxu0 0.0
      %2244 = vmatprep.subr.mxu0 0.0
      %2245 = vmatpush1.msra.mxu0 0.0
      %2246 = vmatprep.subr.mxu0 0.0
      %2247 = vmatpush1.msra.mxu0 0.0
      %2248 = vmatprep.subr.mxu0 0.0
      %2249 = vmatpush1.msra.mxu0 0.0
      %2250 = vmatprep.subr.mxu0 0.0
      %2251 = vmatpush1.msra.mxu0 0.0
      %2252 = vmatprep.subr.mxu0 0.0
      %2253 = vmatpush1.msra.mxu0 0.0
      %2254 = vmatprep.subr.mxu0 0.0
      %2255 = vmatpush1.msra.mxu0 0.0
      %2256 = vmatprep.subr.mxu0 0.0
      %2257 = vmatpush1.msra.mxu0 0.0
      %2258 = vmatprep.subr.mxu0 0.0
      %2259 = vmatpush1.msra.mxu0 0.0
      %2260 = vmatprep.subr.mxu0 0.0
      %2261 = vmatpush1.msra.mxu0 0.0
      %2262 = vmatprep.subr.mxu0 0.0
      %2263 = vmatpush1.msra.mxu0 0.0
      %2264 = vmatprep.subr.mxu0 0.0
      %2265 = vmatpush1.msra.mxu0 0.0
      %2266 = vmatprep.subr.mxu0 0.0
      %2267 = vmatpush1.msra.mxu0 0.0
      %2268 = vmatprep.subr.mxu0 0.0
      %2269 = vmatpush1.msra.mxu0 0.0
      %2270 = vmatprep.subr.mxu0 0.0
      %2271 = vmatpush1.msra.mxu0 0.0
      %2272 = vmatprep.subr.mxu0 0.0
      %2273 = vmatpush1.msra.mxu0 0.0
      %2274 = vmatprep.subr.mxu0 0.0
      %2275 = vmatpush1.msra.mxu0 0.0
      %2276 = vmatprep.subr.mxu0 0.0
      %2277 = vmatpush1.msra.mxu0 0.0
      %2278 = vmatprep.subr.mxu0 0.0
      %2279 = vmatpush1.msra.mxu0 0.0
      %2280 = vmatprep.subr.mxu0 0.0
      %2281 = vmatpush1.msra.mxu0 0.0
      %2282 = vmatprep.subr.mxu0 0.0
      %2283 = vmatpush1.msra.mxu0 0.0
      %2284 = vmatprep.subr.mxu0 0.0
      %2285 = vmatpush1.msra.mxu0 0.0
      %2286 = vmatprep.subr.mxu0 0.0
      %2287 = vmatpush1.msra.mxu0 0.0
      %2288 = vmatprep.subr.mxu0 0.0
      %2289 = vmatpush1.msra.mxu0 0.0
      %2290 = vmatprep.subr.mxu0 0.0
      %2291 = vmatpush1.msra.mxu0 0.0
      %2292 = vmatprep.mubr.f32.mxu0 0.0
      %2293 = vmatmul.mubr.f32.gmra.mrb[0].mxu0 %v2226
      %v2294 = vpop.f32.mrb[0].mxu0
      %v2295 = vadd.f32 0.0, %v2294
      %v2296 = vpop.f32.mrb[0].mxu0
      %2297 = vdwg.mxu0
      %2298 = vrot.lane.b32.xlu0 %v562, 64
      %v2299 = vpop.permute.xlu0 %2298
      %v2302 = vsel %vm587, %v1982, 0
      %2304 = vmatprep.subr.mxu0 0.0
      %2305 = vmatpush1.msra.mxu0 %v2299
      %2306 = vmatprep.subr.mxu0 0.0
      %2307 = vmatpush1.msra.mxu0 0.0
      %2308 = vmatprep.subr.mxu0 0.0
      %2309 = vmatpush1.msra.mxu0 0.0
      %2310 = vmatprep.subr.mxu0 0.0
      %2311 = vmatpush1.msra.mxu0 0.0
      %2312 = vmatprep.subr.mxu0 0.0
      %2313 = vmatpush1.msra.mxu0 0.0
      %2314 = vmatprep.subr.mxu0 0.0
      %2315 = vmatpush1.msra.mxu0 0.0
      %2316 = vmatprep.subr.mxu0 0.0
      %2317 = vmatpush1.msra.mxu0 0.0
      %2318 = vmatprep.subr.mxu0 0.0
      %2319 = vmatpush1.msra.mxu0 0.0
      %2320 = vmatprep.subr.mxu0 0.0
      %2321 = vmatpush1.msra.mxu0 0.0
      %2322 = vmatprep.subr.mxu0 0.0
      %2323 = vmatpush1.msra.mxu0 0.0
      %2324 = vmatprep.subr.mxu0 0.0
      %2325 = vmatpush1.msra.mxu0 0.0
      %2326 = vmatprep.subr.mxu0 0.0
      %2327 = vmatpush1.msra.mxu0 0.0
      %2328 = vmatprep.subr.mxu0 0.0
      %2329 = vmatpush1.msra.mxu0 0.0
      %2330 = vmatprep.subr.mxu0 0.0
      %2331 = vmatpush1.msra.mxu0 0.0
      %2332 = vmatprep.subr.mxu0 0.0
      %2333 = vmatpush1.msra.mxu0 0.0
      %2334 = vmatprep.subr.mxu0 0.0
      %2335 = vmatpush1.msra.mxu0 0.0
      %2336 = vmatprep.subr.mxu0 0.0
      %2337 = vmatpush1.msra.mxu0 0.0
      %2338 = vmatprep.subr.mxu0 0.0
      %2339 = vmatpush1.msra.mxu0 0.0
      %2340 = vmatprep.subr.mxu0 0.0
      %2341 = vmatpush1.msra.mxu0 0.0
      %2342 = vmatprep.subr.mxu0 0.0
      %2343 = vmatpush1.msra.mxu0 0.0
      %2344 = vmatprep.subr.mxu0 0.0
      %2345 = vmatpush1.msra.mxu0 0.0
      %2346 = vmatprep.subr.mxu0 0.0
      %2347 = vmatpush1.msra.mxu0 0.0
      %2348 = vmatprep.subr.mxu0 0.0
      %2349 = vmatpush1.msra.mxu0 0.0
      %2350 = vmatprep.subr.mxu0 0.0
      %2351 = vmatpush1.msra.mxu0 0.0
      %2352 = vmatprep.subr.mxu0 0.0
      %2353 = vmatpush1.msra.mxu0 0.0
      %2354 = vmatprep.subr.mxu0 0.0
      %2355 = vmatpush1.msra.mxu0 0.0
      %2356 = vmatprep.subr.mxu0 0.0
      %2357 = vmatpush1.msra.mxu0 0.0
      %2358 = vmatprep.subr.mxu0 0.0
      %2359 = vmatpush1.msra.mxu0 0.0
      %2360 = vmatprep.subr.mxu0 0.0
      %2361 = vmatpush1.msra.mxu0 0.0
      %2362 = vmatprep.subr.mxu0 0.0
      %2363 = vmatpush1.msra.mxu0 0.0
      %2364 = vmatprep.subr.mxu0 0.0
      %2365 = vmatpush1.msra.mxu0 0.0
      %2366 = vmatprep.subr.mxu0 0.0
      %2367 = vmatpush1.msra.mxu0 0.0
      %2368 = vmatprep.mubr.f32.mxu0 0.0
      %2369 = vmatmul.mubr.f32.gmra.mrb[0].mxu0 %v2302
      %v2370 = vpop.f32.mrb[0].mxu0
      %v2371 = vadd.f32 0.0, %v2370
      %v2372 = vpop.f32.mrb[0].mxu0
      %2373 = vdwg.mxu0
      %2374 = vrot.lane.b32.xlu0 %v564, 64
      %v2375 = vpop.permute.xlu0 %2374
      %v2378 = vsel %vm587, %v1983, 0
      %2380 = vmatprep.subr.mxu0 0.0
      %2381 = vmatpush1.msra.mxu0 %v2375
      %2382 = vmatprep.subr.mxu0 0.0
      %2383 = vmatpush1.msra.mxu0 0.0
      %2384 = vmatprep.subr.mxu0 0.0
      %2385 = vmatpush1.msra.mxu0 0.0
      %2386 = vmatprep.subr.mxu0 0.0
      %2387 = vmatpush1.msra.mxu0 0.0
      %2388 = vmatprep.subr.mxu0 0.0
      %2389 = vmatpush1.msra.mxu0 0.0
      %2390 = vmatprep.subr.mxu0 0.0
      %2391 = vmatpush1.msra.mxu0 0.0
      %2392 = vmatprep.subr.mxu0 0.0
      %2393 = vmatpush1.msra.mxu0 0.0
      %2394 = vmatprep.subr.mxu0 0.0
      %2395 = vmatpush1.msra.mxu0 0.0
      %2396 = vmatprep.subr.mxu0 0.0
      %2397 = vmatpush1.msra.mxu0 0.0
      %2398 = vmatprep.subr.mxu0 0.0
      %2399 = vmatpush1.msra.mxu0 0.0
      %2400 = vmatprep.subr.mxu0 0.0
      %2401 = vmatpush1.msra.mxu0 0.0
      %2402 = vmatprep.subr.mxu0 0.0
      %2403 = vmatpush1.msra.mxu0 0.0
      %2404 = vmatprep.subr.mxu0 0.0
      %2405 = vmatpush1.msra.mxu0 0.0
      %2406 = vmatprep.subr.mxu0 0.0
      %2407 = vmatpush1.msra.mxu0 0.0
      %2408 = vmatprep.subr.mxu0 0.0
      %2409 = vmatpush1.msra.mxu0 0.0
      %2410 = vmatprep.subr.mxu0 0.0
      %2411 = vmatpush1.msra.mxu0 0.0
      %2412 = vmatprep.subr.mxu0 0.0
      %2413 = vmatpush1.msra.mxu0 0.0
      %2414 = vmatprep.subr.mxu0 0.0
      %2415 = vmatpush1.msra.mxu0 0.0
      %2416 = vmatprep.subr.mxu0 0.0
      %2417 = vmatpush1.msra.mxu0 0.0
      %2418 = vmatprep.subr.mxu0 0.0
      %2419 = vmatpush1.msra.mxu0 0.0
      %2420 = vmatprep.subr.mxu0 0.0
      %2421 = vmatpush1.msra.mxu0 0.0
      %2422 = vmatprep.subr.mxu0 0.0
      %2423 = vmatpush1.msra.mxu0 0.0
      %2424 = vmatprep.subr.mxu0 0.0
      %2425 = vmatpush1.msra.mxu0 0.0
      %2426 = vmatprep.subr.mxu0 0.0
      %2427 = vmatpush1.msra.mxu0 0.0
      %2428 = vmatprep.subr.mxu0 0.0
      %2429 = vmatpush1.msra.mxu0 0.0
      %2430 = vmatprep.subr.mxu0 0.0
      %2431 = vmatpush1.msra.mxu0 0.0
      %2432 = vmatprep.subr.mxu0 0.0
      %2433 = vmatpush1.msra.mxu0 0.0
      %2434 = vmatprep.subr.mxu0 0.0
      %2435 = vmatpush1.msra.mxu0 0.0
      %2436 = vmatprep.subr.mxu0 0.0
      %2437 = vmatpush1.msra.mxu0 0.0
      %2438 = vmatprep.subr.mxu0 0.0
      %2439 = vmatpush1.msra.mxu0 0.0
      %2440 = vmatprep.subr.mxu0 0.0
      %2441 = vmatpush1.msra.mxu0 0.0
      %2442 = vmatprep.subr.mxu0 0.0
      %2443 = vmatpush1.msra.mxu0 0.0
      %2444 = vmatprep.mubr.f32.mxu0 0.0
      %2445 = vmatmul.mubr.f32.gmra.mrb[0].mxu0 %v2378
      %v2446 = vpop.f32.mrb[0].mxu0
      %v2447 = vadd.f32 0.0, %v2446
      %v2448 = vpop.f32.mrb[0].mxu0
      %2449 = vdwg.mxu0
      %2450 = vrot.lane.b32.xlu0 %v566, 64
      %v2451 = vpop.permute.xlu0 %2450
      %v2454 = vsel %vm587, %v1984, 0
      %2456 = vmatprep.subr.mxu0 0.0
      %2457 = vmatpush1.msra.mxu0 %v2451
      %2458 = vmatprep.subr.mxu0 0.0
      %2459 = vmatpush1.msra.mxu0 0.0
      %2460 = vmatprep.subr.mxu0 0.0
      %2461 = vmatpush1.msra.mxu0 0.0
      %2462 = vmatprep.subr.mxu0 0.0
      %2463 = vmatpush1.msra.mxu0 0.0
      %2464 = vmatprep.subr.mxu0 0.0
      %2465 = vmatpush1.msra.mxu0 0.0
      %2466 = vmatprep.subr.mxu0 0.0
      %2467 = vmatpush1.msra.mxu0 0.0
      %2468 = vmatprep.subr.mxu0 0.0
      %2469 = vmatpush1.msra.mxu0 0.0
      %2470 = vmatprep.subr.mxu0 0.0
      %2471 = vmatpush1.msra.mxu0 0.0
      %2472 = vmatprep.subr.mxu0 0.0
      %2473 = vmatpush1.msra.mxu0 0.0
      %2474 = vmatprep.subr.mxu0 0.0
      %2475 = vmatpush1.msra.mxu0 0.0
      %2476 = vmatprep.subr.mxu0 0.0
      %2477 = vmatpush1.msra.mxu0 0.0
      %2478 = vmatprep.subr.mxu0 0.0
      %2479 = vmatpush1.msra.mxu0 0.0
      %2480 = vmatprep.subr.mxu0 0.0
      %2481 = vmatpush1.msra.mxu0 0.0
      %2482 = vmatprep.subr.mxu0 0.0
      %2483 = vmatpush1.msra.mxu0 0.0
      %2484 = vmatprep.subr.mxu0 0.0
      %2485 = vmatpush1.msra.mxu0 0.0
      %2486 = vmatprep.subr.mxu0 0.0
      %2487 = vmatpush1.msra.mxu0 0.0
      %2488 = vmatprep.subr.mxu0 0.0
      %2489 = vmatpush1.msra.mxu0 0.0
      %2490 = vmatprep.subr.mxu0 0.0
      %2491 = vmatpush1.msra.mxu0 0.0
      %2492 = vmatprep.subr.mxu0 0.0
      %2493 = vmatpush1.msra.mxu0 0.0
      %2494 = vmatprep.subr.mxu0 0.0
      %2495 = vmatpush1.msra.mxu0 0.0
      %2496 = vmatprep.subr.mxu0 0.0
      %2497 = vmatpush1.msra.mxu0 0.0
      %2498 = vmatprep.subr.mxu0 0.0
      %2499 = vmatpush1.msra.mxu0 0.0
      %2500 = vmatprep.subr.mxu0 0.0
      %2501 = vmatpush1.msra.mxu0 0.0
      %2502 = vmatprep.subr.mxu0 0.0
      %2503 = vmatpush1.msra.mxu0 0.0
      %2504 = vmatprep.subr.mxu0 0.0
      %2505 = vmatpush1.msra.mxu0 0.0
      %2506 = vmatprep.subr.mxu0 0.0
      %2507 = vmatpush1.msra.mxu0 0.0
      %2508 = vmatprep.subr.mxu0 0.0
      %2509 = vmatpush1.msra.mxu0 0.0
      %2510 = vmatprep.subr.mxu0 0.0
      %2511 = vmatpush1.msra.mxu0 0.0
      %2512 = vmatprep.subr.mxu0 0.0
      %2513 = vmatpush1.msra.mxu0 0.0
      %2514 = vmatprep.subr.mxu0 0.0
      %2515 = vmatpush1.msra.mxu0 0.0
      %2516 = vmatprep.subr.mxu0 0.0
      %2517 = vmatpush1.msra.mxu0 0.0
      %2518 = vmatprep.subr.mxu0 0.0
      %2519 = vmatpush1.msra.mxu0 0.0
      %2520 = vmatprep.mubr.f32.mxu0 0.0
      %2521 = vmatmul.mubr.f32.gmra.mrb[0].mxu0 %v2454
      %v2522 = vpop.f32.mrb[0].mxu0
      %v2523 = vadd.f32 0.0, %v2522
      %v2524 = vpop.f32.mrb[0].mxu0
      %2525 = vdwg.mxu0
      %2526 = vrot.lane.b32.xlu0 %v568, 64
      %v2527 = vpop.permute.xlu0 %2526
      %v2530 = vsel %vm587, %v1985, 0
      %2532 = vmatprep.subr.mxu0 0.0
      %2533 = vmatpush1.msra.mxu0 %v2527
      %2534 = vmatprep.subr.mxu0 0.0
      %2535 = vmatpush1.msra.mxu0 0.0
      %2536 = vmatprep.subr.mxu0 0.0
      %2537 = vmatpush1.msra.mxu0 0.0
      %2538 = vmatprep.subr.mxu0 0.0
      %2539 = vmatpush1.msra.mxu0 0.0
      %2540 = vmatprep.subr.mxu0 0.0
      %2541 = vmatpush1.msra.mxu0 0.0
      %2542 = vmatprep.subr.mxu0 0.0
      %2543 = vmatpush1.msra.mxu0 0.0
      %2544 = vmatprep.subr.mxu0 0.0
      %2545 = vmatpush1.msra.mxu0 0.0
      %2546 = vmatprep.subr.mxu0 0.0
      %2547 = vmatpush1.msra.mxu0 0.0
      %2548 = vmatprep.subr.mxu0 0.0
      %2549 = vmatpush1.msra.mxu0 0.0
      %2550 = vmatprep.subr.mxu0 0.0
      %2551 = vmatpush1.msra.mxu0 0.0
      %2552 = vmatprep.subr.mxu0 0.0
      %2553 = vmatpush1.msra.mxu0 0.0
      %2554 = vmatprep.subr.mxu0 0.0
      %2555 = vmatpush1.msra.mxu0 0.0
      %2556 = vmatprep.subr.mxu0 0.0
      %2557 = vmatpush1.msra.mxu0 0.0
      %2558 = vmatprep.subr.mxu0 0.0
      %2559 = vmatpush1.msra.mxu0 0.0
      %2560 = vmatprep.subr.mxu0 0.0
      %2561 = vmatpush1.msra.mxu0 0.0
      %2562 = vmatprep.subr.mxu0 0.0
      %2563 = vmatpush1.msra.mxu0 0.0
      %2564 = vmatprep.subr.mxu0 0.0
      %2565 = vmatpush1.msra.mxu0 0.0
      %2566 = vmatprep.subr.mxu0 0.0
      %2567 = vmatpush1.msra.mxu0 0.0
      %2568 = vmatprep.subr.mxu0 0.0
      %2569 = vmatpush1.msra.mxu0 0.0
      %2570 = vmatprep.subr.mxu0 0.0
      %2571 = vmatpush1.msra.mxu0 0.0
      %2572 = vmatprep.subr.mxu0 0.0
      %2573 = vmatpush1.msra.mxu0 0.0
      %2574 = vmatprep.subr.mxu0 0.0
      %2575 = vmatpush1.msra.mxu0 0.0
      %2576 = vmatprep.subr.mxu0 0.0
      %2577 = vmatpush1.msra.mxu0 0.0
      %2578 = vmatprep.subr.mxu0 0.0
      %2579 = vmatpush1.msra.mxu0 0.0
      %2580 = vmatprep.subr.mxu0 0.0
      %2581 = vmatpush1.msra.mxu0 0.0
      %2582 = vmatprep.subr.mxu0 0.0
      %2583 = vmatpush1.msra.mxu0 0.0
      %2584 = vmatprep.subr.mxu0 0.0
      %2585 = vmatpush1.msra.mxu0 0.0
      %2586 = vmatprep.subr.mxu0 0.0
      %2587 = vmatpush1.msra.mxu0 0.0
      %2588 = vmatprep.subr.mxu0 0.0
      %2589 = vmatpush1.msra.mxu0 0.0
      %2590 = vmatprep.subr.mxu0 0.0
      %2591 = vmatpush1.msra.mxu0 0.0
      %2592 = vmatprep.subr.mxu0 0.0
      %2593 = vmatpush1.msra.mxu0 0.0
      %2594 = vmatprep.subr.mxu0 0.0
      %2595 = vmatpush1.msra.mxu0 0.0
      %2596 = vmatprep.mubr.f32.mxu0 0.0
      %2597 = vmatmul.mubr.f32.gmra.mrb[0].mxu0 %v2530
      %v2598 = vpop.f32.mrb[0].mxu0
      %v2599 = vadd.f32 0.0, %v2598
      %v2600 = vpop.f32.mrb[0].mxu0
      %2601 = vdwg.mxu0
      %2602 = vrot.lane.b32.xlu0 %v570, 64
      %v2603 = vpop.permute.xlu0 %2602
      %v2606 = vsel %vm587, %v1986, 0
      %2608 = vmatprep.subr.mxu0 0.0
      %2609 = vmatpush1.msra.mxu0 %v2603
      %2610 = vmatprep.subr.mxu0 0.0
      %2611 = vmatpush1.msra.mxu0 0.0
      %2612 = vmatprep.subr.mxu0 0.0
      %2613 = vmatpush1.msra.mxu0 0.0
      %2614 = vmatprep.subr.mxu0 0.0
      %2615 = vmatpush1.msra.mxu0 0.0
      %2616 = vmatprep.subr.mxu0 0.0
      %2617 = vmatpush1.msra.mxu0 0.0
      %2618 = vmatprep.subr.mxu0 0.0
      %2619 = vmatpush1.msra.mxu0 0.0
      %2620 = vmatprep.subr.mxu0 0.0
      %2621 = vmatpush1.msra.mxu0 0.0
      %2622 = vmatprep.subr.mxu0 0.0
      %2623 = vmatpush1.msra.mxu0 0.0
      %2624 = vmatprep.subr.mxu0 0.0
      %2625 = vmatpush1.msra.mxu0 0.0
      %2626 = vmatprep.subr.mxu0 0.0
      %2627 = vmatpush1.msra.mxu0 0.0
      %2628 = vmatprep.subr.mxu0 0.0
      %2629 = vmatpush1.msra.mxu0 0.0
      %2630 = vmatprep.subr.mxu0 0.0
      %2631 = vmatpush1.msra.mxu0 0.0
      %2632 = vmatprep.subr.mxu0 0.0
      %2633 = vmatpush1.msra.mxu0 0.0
      %2634 = vmatprep.subr.mxu0 0.0
      %2635 = vmatpush1.msra.mxu0 0.0
      %2636 = vmatprep.subr.mxu0 0.0
      %2637 = vmatpush1.msra.mxu0 0.0
      %2638 = vmatprep.subr.mxu0 0.0
      %2639 = vmatpush1.msra.mxu0 0.0
      %2640 = vmatprep.subr.mxu0 0.0
      %2641 = vmatpush1.msra.mxu0 0.0
      %2642 = vmatprep.subr.mxu0 0.0
      %2643 = vmatpush1.msra.mxu0 0.0
      %2644 = vmatprep.subr.mxu0 0.0
      %2645 = vmatpush1.msra.mxu0 0.0
      %2646 = vmatprep.subr.mxu0 0.0
      %2647 = vmatpush1.msra.mxu0 0.0
      %2648 = vmatprep.subr.mxu0 0.0
      %2649 = vmatpush1.msra.mxu0 0.0
      %2650 = vmatprep.subr.mxu0 0.0
      %2651 = vmatpush1.msra.mxu0 0.0
      %2652 = vmatprep.subr.mxu0 0.0
      %2653 = vmatpush1.msra.mxu0 0.0
      %2654 = vmatprep.subr.mxu0 0.0
      %2655 = vmatpush1.msra.mxu0 0.0
      %2656 = vmatprep.subr.mxu0 0.0
      %2657 = vmatpush1.msra.mxu0 0.0
      %2658 = vmatprep.subr.mxu0 0.0
      %2659 = vmatpush1.msra.mxu0 0.0
      %2660 = vmatprep.subr.mxu0 0.0
      %2661 = vmatpush1.msra.mxu0 0.0
      %2662 = vmatprep.subr.mxu0 0.0
      %2663 = vmatpush1.msra.mxu0 0.0
      %2664 = vmatprep.subr.mxu0 0.0
      %2665 = vmatpush1.msra.mxu0 0.0
      %2666 = vmatprep.subr.mxu0 0.0
      %2667 = vmatpush1.msra.mxu0 0.0
      %2668 = vmatprep.subr.mxu0 0.0
      %2669 = vmatpush1.msra.mxu0 0.0
      %2670 = vmatprep.subr.mxu0 0.0
      %2671 = vmatpush1.msra.mxu0 0.0
      %2672 = vmatprep.mubr.f32.mxu0 0.0
      %2673 = vmatmul.mubr.f32.gmra.mrb[0].mxu0 %v2606
      %v2674 = vpop.f32.mrb[0].mxu0
      %v2675 = vadd.f32 0.0, %v2674
      %v2676 = vpop.f32.mrb[0].mxu0
      %2677 = vdwg.mxu0
      %2678 = vrot.lane.b32.xlu0 %v572, 64
      %v2679 = vpop.permute.xlu0 %2678
      %v2682 = vsel %vm587, %v1987, 0
      %2684 = vmatprep.subr.mxu0 0.0
      %2685 = vmatpush1.msra.mxu0 %v2679
      %2686 = vmatprep.subr.mxu0 0.0
      %2687 = vmatpush1.msra.mxu0 0.0
      %2688 = vmatprep.subr.mxu0 0.0
      %2689 = vmatpush1.msra.mxu0 0.0
      %2690 = vmatprep.subr.mxu0 0.0
      %2691 = vmatpush1.msra.mxu0 0.0
      %2692 = vmatprep.subr.mxu0 0.0
      %2693 = vmatpush1.msra.mxu0 0.0
      %2694 = vmatprep.subr.mxu0 0.0
      %2695 = vmatpush1.msra.mxu0 0.0
      %2696 = vmatprep.subr.mxu0 0.0
      %2697 = vmatpush1.msra.mxu0 0.0
      %2698 = vmatprep.subr.mxu0 0.0
      %2699 = vmatpush1.msra.mxu0 0.0
      %2700 = vmatprep.subr.mxu0 0.0
      %2701 = vmatpush1.msra.mxu0 0.0
      %2702 = vmatprep.subr.mxu0 0.0
      %2703 = vmatpush1.msra.mxu0 0.0
      %2704 = vmatprep.subr.mxu0 0.0
      %2705 = vmatpush1.msra.mxu0 0.0
      %2706 = vmatprep.subr.mxu0 0.0
      %2707 = vmatpush1.msra.mxu0 0.0
      %2708 = vmatprep.subr.mxu0 0.0
      %2709 = vmatpush1.msra.mxu0 0.0
      %2710 = vmatprep.subr.mxu0 0.0
      %2711 = vmatpush1.msra.mxu0 0.0
      %2712 = vmatprep.subr.mxu0 0.0
      %2713 = vmatpush1.msra.mxu0 0.0
      %2714 = vmatprep.subr.mxu0 0.0
      %2715 = vmatpush1.msra.mxu0 0.0
      %2716 = vmatprep.subr.mxu0 0.0
      %2717 = vmatpush1.msra.mxu0 0.0
      %2718 = vmatprep.subr.mxu0 0.0
      %2719 = vmatpush1.msra.mxu0 0.0
      %2720 = vmatprep.subr.mxu0 0.0
      %2721 = vmatpush1.msra.mxu0 0.0
      %2722 = vmatprep.subr.mxu0 0.0
      %2723 = vmatpush1.msra.mxu0 0.0
      %2724 = vmatprep.subr.mxu0 0.0
      %2725 = vmatpush1.msra.mxu0 0.0
      %2726 = vmatprep.subr.mxu0 0.0
      %2727 = vmatpush1.msra.mxu0 0.0
      %2728 = vmatprep.subr.mxu0 0.0
      %2729 = vmatpush1.msra.mxu0 0.0
      %2730 = vmatprep.subr.mxu0 0.0
      %2731 = vmatpush1.msra.mxu0 0.0
      %2732 = vmatprep.subr.mxu0 0.0
      %2733 = vmatpush1.msra.mxu0 0.0
      %2734 = vmatprep.subr.mxu0 0.0
      %2735 = vmatpush1.msra.mxu0 0.0
      %2736 = vmatprep.subr.mxu0 0.0
      %2737 = vmatpush1.msra.mxu0 0.0
      %2738 = vmatprep.subr.mxu0 0.0
      %2739 = vmatpush1.msra.mxu0 0.0
      %2740 = vmatprep.subr.mxu0 0.0
      %2741 = vmatpush1.msra.mxu0 0.0
      %2742 = vmatprep.subr.mxu0 0.0
      %2743 = vmatpush1.msra.mxu0 0.0
      %2744 = vmatprep.subr.mxu0 0.0
      %2745 = vmatpush1.msra.mxu0 0.0
      %2746 = vmatprep.subr.mxu0 0.0
      %2747 = vmatpush1.msra.mxu0 0.0
      %2748 = vmatprep.mubr.f32.mxu0 0.0
      %2749 = vmatmul.mubr.f32.gmra.mrb[0].mxu0 %v2682
      %v2750 = vpop.f32.mrb[0].mxu0
      %v2751 = vadd.f32 0.0, %v2750
      %v2752 = vpop.f32.mrb[0].mxu0
      %2753 = vdwg.mxu0
      %2754 = vrot.lane.b32.xlu0 %v574, 64
      %v2755 = vpop.permute.xlu0 %2754
      %v2758 = vsel %vm587, %v1988, 0
      %2760 = vmatprep.subr.mxu0 0.0
      %2761 = vmatpush1.msra.mxu0 %v2755
      %2762 = vmatprep.subr.mxu0 0.0
      %2763 = vmatpush1.msra.mxu0 0.0
      %2764 = vmatprep.subr.mxu0 0.0
      %2765 = vmatpush1.msra.mxu0 0.0
      %2766 = vmatprep.subr.mxu0 0.0
      %2767 = vmatpush1.msra.mxu0 0.0
      %2768 = vmatprep.subr.mxu0 0.0
      %2769 = vmatpush1.msra.mxu0 0.0
      %2770 = vmatprep.subr.mxu0 0.0
      %2771 = vmatpush1.msra.mxu0 0.0
      %2772 = vmatprep.subr.mxu0 0.0
      %2773 = vmatpush1.msra.mxu0 0.0
      %2774 = vmatprep.subr.mxu0 0.0
      %2775 = vmatpush1.msra.mxu0 0.0
      %2776 = vmatprep.subr.mxu0 0.0
      %2777 = vmatpush1.msra.mxu0 0.0
      %2778 = vmatprep.subr.mxu0 0.0
      %2779 = vmatpush1.msra.mxu0 0.0
      %2780 = vmatprep.subr.mxu0 0.0
      %2781 = vmatpush1.msra.mxu0 0.0
      %2782 = vmatprep.subr.mxu0 0.0
      %2783 = vmatpush1.msra.mxu0 0.0
      %2784 = vmatprep.subr.mxu0 0.0
      %2785 = vmatpush1.msra.mxu0 0.0
      %2786 = vmatprep.subr.mxu0 0.0
      %2787 = vmatpush1.msra.mxu0 0.0
      %2788 = vmatprep.subr.mxu0 0.0
      %2789 = vmatpush1.msra.mxu0 0.0
      %2790 = vmatprep.subr.mxu0 0.0
      %2791 = vmatpush1.msra.mxu0 0.0
      %2792 = vmatprep.subr.mxu0 0.0
      %2793 = vmatpush1.msra.mxu0 0.0
      %2794 = vmatprep.subr.mxu0 0.0
      %2795 = vmatpush1.msra.mxu0 0.0
      %2796 = vmatprep.subr.mxu0 0.0
      %2797 = vmatpush1.msra.mxu0 0.0
      %2798 = vmatprep.subr.mxu0 0.0
      %2799 = vmatpush1.msra.mxu0 0.0
      %2800 = vmatprep.subr.mxu0 0.0
      %2801 = vmatpush1.msra.mxu0 0.0
      %2802 = vmatprep.subr.mxu0 0.0
      %2803 = vmatpush1.msra.mxu0 0.0
      %2804 = vmatprep.subr.mxu0 0.0
      %2805 = vmatpush1.msra.mxu0 0.0
      %2806 = vmatprep.subr.mxu0 0.0
      %2807 = vmatpush1.msra.mxu0 0.0
      %2808 = vmatprep.subr.mxu0 0.0
      %2809 = vmatpush1.msra.mxu0 0.0
      %2810 = vmatprep.subr.mxu0 0.0
      %2811 = vmatpush1.msra.mxu0 0.0
      %2812 = vmatprep.subr.mxu0 0.0
      %2813 = vmatpush1.msra.mxu0 0.0
      %2814 = vmatprep.subr.mxu0 0.0
      %2815 = vmatpush1.msra.mxu0 0.0
      %2816 = vmatprep.subr.mxu0 0.0
      %2817 = vmatpush1.msra.mxu0 0.0
      %2818 = vmatprep.subr.mxu0 0.0
      %2819 = vmatpush1.msra.mxu0 0.0
      %2820 = vmatprep.subr.mxu0 0.0
      %2821 = vmatpush1.msra.mxu0 0.0
      %2822 = vmatprep.subr.mxu0 0.0
      %2823 = vmatpush1.msra.mxu0 0.0
      %2824 = vmatprep.mubr.f32.mxu0 0.0
      %2825 = vmatmul.mubr.f32.gmra.mrb[0].mxu0 %v2758
      %v2826 = vpop.f32.mrb[0].mxu0
      %v2827 = vadd.f32 0.0, %v2826
      %v2828 = vpop.f32.mrb[0].mxu0
      %2829 = vdwg.mxu0
      %2830 = vrot.lane.b32.xlu0 %v576, 64
      %v2831 = vpop.permute.xlu0 %2830
      %v2834 = vsel %vm587, %v1989, 0
      %2836 = vmatprep.subr.mxu0 0.0
      %2837 = vmatpush1.msra.mxu0 %v2831
      %2838 = vmatprep.subr.mxu0 0.0
      %2839 = vmatpush1.msra.mxu0 0.0
      %2840 = vmatprep.subr.mxu0 0.0
      %2841 = vmatpush1.msra.mxu0 0.0
      %2842 = vmatprep.subr.mxu0 0.0
      %2843 = vmatpush1.msra.mxu0 0.0
      %2844 = vmatprep.subr.mxu0 0.0
      %2845 = vmatpush1.msra.mxu0 0.0
      %2846 = vmatprep.subr.mxu0 0.0
      %2847 = vmatpush1.msra.mxu0 0.0
      %2848 = vmatprep.subr.mxu0 0.0
      %2849 = vmatpush1.msra.mxu0 0.0
      %2850 = vmatprep.subr.mxu0 0.0
      %2851 = vmatpush1.msra.mxu0 0.0
      %2852 = vmatprep.subr.mxu0 0.0
      %2853 = vmatpush1.msra.mxu0 0.0
      %2854 = vmatprep.subr.mxu0 0.0
      %2855 = vmatpush1.msra.mxu0 0.0
      %2856 = vmatprep.subr.mxu0 0.0
      %2857 = vmatpush1.msra.mxu0 0.0
      %2858 = vmatprep.subr.mxu0 0.0
      %2859 = vmatpush1.msra.mxu0 0.0
      %2860 = vmatprep.subr.mxu0 0.0
      %2861 = vmatpush1.msra.mxu0 0.0
      %2862 = vmatprep.subr.mxu0 0.0
      %2863 = vmatpush1.msra.mxu0 0.0
      %2864 = vmatprep.subr.mxu0 0.0
      %2865 = vmatpush1.msra.mxu0 0.0
      %2866 = vmatprep.subr.mxu0 0.0
      %2867 = vmatpush1.msra.mxu0 0.0
      %2868 = vmatprep.subr.mxu0 0.0
      %2869 = vmatpush1.msra.mxu0 0.0
      %2870 = vmatprep.subr.mxu0 0.0
      %2871 = vmatpush1.msra.mxu0 0.0
      %2872 = vmatprep.subr.mxu0 0.0
      %2873 = vmatpush1.msra.mxu0 0.0
      %2874 = vmatprep.subr.mxu0 0.0
      %2875 = vmatpush1.msra.mxu0 0.0
      %2876 = vmatprep.subr.mxu0 0.0
      %2877 = vmatpush1.msra.mxu0 0.0
      %2878 = vmatprep.subr.mxu0 0.0
      %2879 = vmatpush1.msra.mxu0 0.0
      %2880 = vmatprep.subr.mxu0 0.0
      %2881 = vmatpush1.msra.mxu0 0.0
      %2882 = vmatprep.subr.mxu0 0.0
      %2883 = vmatpush1.msra.mxu0 0.0
      %2884 = vmatprep.subr.mxu0 0.0
      %2885 = vmatpush1.msra.mxu0 0.0
      %2886 = vmatprep.subr.mxu0 0.0
      %2887 = vmatpush1.msra.mxu0 0.0
      %2888 = vmatprep.subr.mxu0 0.0
      %2889 = vmatpush1.msra.mxu0 0.0
      %2890 = vmatprep.subr.mxu0 0.0
      %2891 = vmatpush1.msra.mxu0 0.0
      %2892 = vmatprep.subr.mxu0 0.0
      %2893 = vmatpush1.msra.mxu0 0.0
      %2894 = vmatprep.subr.mxu0 0.0
      %2895 = vmatpush1.msra.mxu0 0.0
      %2896 = vmatprep.subr.mxu0 0.0
      %2897 = vmatpush1.msra.mxu0 0.0
      %2898 = vmatprep.subr.mxu0 0.0
      %2899 = vmatpush1.msra.mxu0 0.0
      %2900 = vmatprep.mubr.f32.mxu0 0.0
      %2901 = vmatmul.mubr.f32.gmra.mrb[0].mxu0 %v2834
      %v2902 = vpop.f32.mrb[0].mxu0
      %v2903 = vadd.f32 0.0, %v2902
      %v2904 = vpop.f32.mrb[0].mxu0
      %2905 = vdwg.mxu0
      %2906 = vrot.lane.b32.xlu0 %v578, 64
      %v2907 = vpop.permute.xlu0 %2906
      %v2910 = vsel %vm587, %v1990, 0
      %2912 = vmatprep.subr.mxu0 0.0
      %2913 = vmatpush1.msra.mxu0 %v2907
      %2914 = vmatprep.subr.mxu0 0.0
      %2915 = vmatpush1.msra.mxu0 0.0
      %2916 = vmatprep.subr.mxu0 0.0
      %2917 = vmatpush1.msra.mxu0 0.0
      %2918 = vmatprep.subr.mxu0 0.0
      %2919 = vmatpush1.msra.mxu0 0.0
      %2920 = vmatprep.subr.mxu0 0.0
      %2921 = vmatpush1.msra.mxu0 0.0
      %2922 = vmatprep.subr.mxu0 0.0
      %2923 = vmatpush1.msra.mxu0 0.0
      %2924 = vmatprep.subr.mxu0 0.0
      %2925 = vmatpush1.msra.mxu0 0.0
      %2926 = vmatprep.subr.mxu0 0.0
      %2927 = vmatpush1.msra.mxu0 0.0
      %2928 = vmatprep.subr.mxu0 0.0
      %2929 = vmatpush1.msra.mxu0 0.0
      %2930 = vmatprep.subr.mxu0 0.0
      %2931 = vmatpush1.msra.mxu0 0.0
      %2932 = vmatprep.subr.mxu0 0.0
      %2933 = vmatpush1.msra.mxu0 0.0
      %2934 = vmatprep.subr.mxu0 0.0
      %2935 = vmatpush1.msra.mxu0 0.0
      %2936 = vmatprep.subr.mxu0 0.0
      %2937 = vmatpush1.msra.mxu0 0.0
      %2938 = vmatprep.subr.mxu0 0.0
      %2939 = vmatpush1.msra.mxu0 0.0
      %2940 = vmatprep.subr.mxu0 0.0
      %2941 = vmatpush1.msra.mxu0 0.0
      %2942 = vmatprep.subr.mxu0 0.0
      %2943 = vmatpush1.msra.mxu0 0.0
      %2944 = vmatprep.subr.mxu0 0.0
      %2945 = vmatpush1.msra.mxu0 0.0
      %2946 = vmatprep.subr.mxu0 0.0
      %2947 = vmatpush1.msra.mxu0 0.0
      %2948 = vmatprep.subr.mxu0 0.0
      %2949 = vmatpush1.msra.mxu0 0.0
      %2950 = vmatprep.subr.mxu0 0.0
      %2951 = vmatpush1.msra.mxu0 0.0
      %2952 = vmatprep.subr.mxu0 0.0
      %2953 = vmatpush1.msra.mxu0 0.0
      %2954 = vmatprep.subr.mxu0 0.0
      %2955 = vmatpush1.msra.mxu0 0.0
      %2956 = vmatprep.subr.mxu0 0.0
      %2957 = vmatpush1.msra.mxu0 0.0
      %2958 = vmatprep.subr.mxu0 0.0
      %2959 = vmatpush1.msra.mxu0 0.0
      %2960 = vmatprep.subr.mxu0 0.0
      %2961 = vmatpush1.msra.mxu0 0.0
      %2962 = vmatprep.subr.mxu0 0.0
      %2963 = vmatpush1.msra.mxu0 0.0
      %2964 = vmatprep.subr.mxu0 0.0
      %2965 = vmatpush1.msra.mxu0 0.0
      %2966 = vmatprep.subr.mxu0 0.0
      %2967 = vmatpush1.msra.mxu0 0.0
      %2968 = vmatprep.subr.mxu0 0.0
      %2969 = vmatpush1.msra.mxu0 0.0
      %2970 = vmatprep.subr.mxu0 0.0
      %2971 = vmatpush1.msra.mxu0 0.0
      %2972 = vmatprep.subr.mxu0 0.0
      %2973 = vmatpush1.msra.mxu0 0.0
      %2974 = vmatprep.subr.mxu0 0.0
      %2975 = vmatpush1.msra.mxu0 0.0
      %2976 = vmatprep.mubr.f32.mxu0 0.0
      %2977 = vmatmul.mubr.f32.gmra.mrb[0].mxu0 %v2910
      %v2978 = vpop.f32.mrb[0].mxu0
      %v2979 = vadd.f32 0.0, %v2978
      %v2980 = vpop.f32.mrb[0].mxu0
      %2981 = vdwg.mxu0
      %2982 = vrot.lane.b32.xlu0 %v580, 64
      %v2983 = vpop.permute.xlu0 %2982
      %v2986 = vsel %vm587, %v1991, 0
      %2988 = vmatprep.subr.mxu0 0.0
      %2989 = vmatpush1.msra.mxu0 %v2983
      %2990 = vmatprep.subr.mxu0 0.0
      %2991 = vmatpush1.msra.mxu0 0.0
      %2992 = vmatprep.subr.mxu0 0.0
      %2993 = vmatpush1.msra.mxu0 0.0
      %2994 = vmatprep.subr.mxu0 0.0
      %2995 = vmatpush1.msra.mxu0 0.0
      %2996 = vmatprep.subr.mxu0 0.0
      %2997 = vmatpush1.msra.mxu0 0.0
      %2998 = vmatprep.subr.mxu0 0.0
      %2999 = vmatpush1.msra.mxu0 0.0
      %3000 = vmatprep.subr.mxu0 0.0
      %3001 = vmatpush1.msra.mxu0 0.0
      %3002 = vmatprep.subr.mxu0 0.0
      %3003 = vmatpush1.msra.mxu0 0.0
      %3004 = vmatprep.subr.mxu0 0.0
      %3005 = vmatpush1.msra.mxu0 0.0
      %3006 = vmatprep.subr.mxu0 0.0
      %3007 = vmatpush1.msra.mxu0 0.0
      %3008 = vmatprep.subr.mxu0 0.0
      %3009 = vmatpush1.msra.mxu0 0.0
      %3010 = vmatprep.subr.mxu0 0.0
      %3011 = vmatpush1.msra.mxu0 0.0
      %3012 = vmatprep.subr.mxu0 0.0
      %3013 = vmatpush1.msra.mxu0 0.0
      %3014 = vmatprep.subr.mxu0 0.0
      %3015 = vmatpush1.msra.mxu0 0.0
      %3016 = vmatprep.subr.mxu0 0.0
      %3017 = vmatpush1.msra.mxu0 0.0
      %3018 = vmatprep.subr.mxu0 0.0
      %3019 = vmatpush1.msra.mxu0 0.0
      %3020 = vmatprep.subr.mxu0 0.0
      %3021 = vmatpush1.msra.mxu0 0.0
      %3022 = vmatprep.subr.mxu0 0.0
      %3023 = vmatpush1.msra.mxu0 0.0
      %3024 = vmatprep.subr.mxu0 0.0
      %3025 = vmatpush1.msra.mxu0 0.0
      %3026 = vmatprep.subr.mxu0 0.0
      %3027 = vmatpush1.msra.mxu0 0.0
      %3028 = vmatprep.subr.mxu0 0.0
      %3029 = vmatpush1.msra.mxu0 0.0
      %3030 = vmatprep.subr.mxu0 0.0
      %3031 = vmatpush1.msra.mxu0 0.0
      %3032 = vmatprep.subr.mxu0 0.0
      %3033 = vmatpush1.msra.mxu0 0.0
      %3034 = vmatprep.subr.mxu0 0.0
      %3035 = vmatpush1.msra.mxu0 0.0
      %3036 = vmatprep.subr.mxu0 0.0
      %3037 = vmatpush1.msra.mxu0 0.0
      %3038 = vmatprep.subr.mxu0 0.0
      %3039 = vmatpush1.msra.mxu0 0.0
      %3040 = vmatprep.subr.mxu0 0.0
      %3041 = vmatpush1.msra.mxu0 0.0
      %3042 = vmatprep.subr.mxu0 0.0
      %3043 = vmatpush1.msra.mxu0 0.0
      %3044 = vmatprep.subr.mxu0 0.0
      %3045 = vmatpush1.msra.mxu0 0.0
      %3046 = vmatprep.subr.mxu0 0.0
      %3047 = vmatpush1.msra.mxu0 0.0
      %3048 = vmatprep.subr.mxu0 0.0
      %3049 = vmatpush1.msra.mxu0 0.0
      %3050 = vmatprep.subr.mxu0 0.0
      %3051 = vmatpush1.msra.mxu0 0.0
      %3052 = vmatprep.mubr.f32.mxu0 0.0
      %3053 = vmatmul.mubr.f32.gmra.mrb[0].mxu0 %v2986
      %v3054 = vpop.f32.mrb[0].mxu0
      %v3055 = vadd.f32 0.0, %v3054
      %v3056 = vpop.f32.mrb[0].mxu0
      %3057 = vdwg.mxu0
      %3058 = vrot.lane.b32.xlu0 %v582, 64
      %v3059 = vpop.permute.xlu0 %3058
      %v3062 = vsel %vm587, %v1992, 0
      %3064 = vmatprep.subr.mxu0 0.0
      %3065 = vmatpush1.msra.mxu0 %v3059
      %3066 = vmatprep.subr.mxu0 0.0
      %3067 = vmatpush1.msra.mxu0 0.0
      %3068 = vmatprep.subr.mxu0 0.0
      %3069 = vmatpush1.msra.mxu0 0.0
      %3070 = vmatprep.subr.mxu0 0.0
      %3071 = vmatpush1.msra.mxu0 0.0
      %3072 = vmatprep.subr.mxu0 0.0
      %3073 = vmatpush1.msra.mxu0 0.0
      %3074 = vmatprep.subr.mxu0 0.0
      %3075 = vmatpush1.msra.mxu0 0.0
      %3076 = vmatprep.subr.mxu0 0.0
      %3077 = vmatpush1.msra.mxu0 0.0
      %3078 = vmatprep.subr.mxu0 0.0
      %3079 = vmatpush1.msra.mxu0 0.0
      %3080 = vmatprep.subr.mxu0 0.0
      %3081 = vmatpush1.msra.mxu0 0.0
      %3082 = vmatprep.subr.mxu0 0.0
      %3083 = vmatpush1.msra.mxu0 0.0
      %3084 = vmatprep.subr.mxu0 0.0
      %3085 = vmatpush1.msra.mxu0 0.0
      %3086 = vmatprep.subr.mxu0 0.0
      %3087 = vmatpush1.msra.mxu0 0.0
      %3088 = vmatprep.subr.mxu0 0.0
      %3089 = vmatpush1.msra.mxu0 0.0
      %3090 = vmatprep.subr.mxu0 0.0
      %3091 = vmatpush1.msra.mxu0 0.0
      %3092 = vmatprep.subr.mxu0 0.0
      %3093 = vmatpush1.msra.mxu0 0.0
      %3094 = vmatprep.subr.mxu0 0.0
      %3095 = vmatpush1.msra.mxu0 0.0
      %3096 = vmatprep.subr.mxu0 0.0
      %3097 = vmatpush1.msra.mxu0 0.0
      %3098 = vmatprep.subr.mxu0 0.0
      %3099 = vmatpush1.msra.mxu0 0.0
      %3100 = vmatprep.subr.mxu0 0.0
      %3101 = vmatpush1.msra.mxu0 0.0
      %3102 = vmatprep.subr.mxu0 0.0
      %3103 = vmatpush1.msra.mxu0 0.0
      %3104 = vmatprep.subr.mxu0 0.0
      %3105 = vmatpush1.msra.mxu0 0.0
      %3106 = vmatprep.subr.mxu0 0.0
      %3107 = vmatpush1.msra.mxu0 0.0
      %3108 = vmatprep.subr.mxu0 0.0
      %3109 = vmatpush1.msra.mxu0 0.0
      %3110 = vmatprep.subr.mxu0 0.0
      %3111 = vmatpush1.msra.mxu0 0.0
      %3112 = vmatprep.subr.mxu0 0.0
      %3113 = vmatpush1.msra.mxu0 0.0
      %3114 = vmatprep.subr.mxu0 0.0
      %3115 = vmatpush1.msra.mxu0 0.0
      %3116 = vmatprep.subr.mxu0 0.0
      %3117 = vmatpush1.msra.mxu0 0.0
      %3118 = vmatprep.subr.mxu0 0.0
      %3119 = vmatpush1.msra.mxu0 0.0
      %3120 = vmatprep.subr.mxu0 0.0
      %3121 = vmatpush1.msra.mxu0 0.0
      %3122 = vmatprep.subr.mxu0 0.0
      %3123 = vmatpush1.msra.mxu0 0.0
      %3124 = vmatprep.subr.mxu0 0.0
      %3125 = vmatpush1.msra.mxu0 0.0
      %3126 = vmatprep.subr.mxu0 0.0
      %3127 = vmatpush1.msra.mxu0 0.0
      %3128 = vmatprep.mubr.f32.mxu0 0.0
      %3129 = vmatmul.mubr.f32.gmra.mrb[0].mxu0 %v3062
      %v3130 = vpop.f32.mrb[0].mxu0
      %v3131 = vadd.f32 0.0, %v3130
      %v3132 = vpop.f32.mrb[0].mxu0
      %3133 = vdwg.mxu0
      %3134 = vrot.lane.b32.xlu0 %v584, 64
      %v3135 = vpop.permute.xlu0 %3134
      %v3138 = vsel %vm587, %v1993, 0
      %3140 = vmatprep.subr.mxu0 0.0
      %3141 = vmatpush1.msra.mxu0 %v3135
      %3142 = vmatprep.subr.mxu0 0.0
      %3143 = vmatpush1.msra.mxu0 0.0
      %3144 = vmatprep.subr.mxu0 0.0
      %3145 = vmatpush1.msra.mxu0 0.0
      %3146 = vmatprep.subr.mxu0 0.0
      %3147 = vmatpush1.msra.mxu0 0.0
      %3148 = vmatprep.subr.mxu0 0.0
      %3149 = vmatpush1.msra.mxu0 0.0
      %3150 = vmatprep.subr.mxu0 0.0
      %3151 = vmatpush1.msra.mxu0 0.0
      %3152 = vmatprep.subr.mxu0 0.0
      %3153 = vmatpush1.msra.mxu0 0.0
      %3154 = vmatprep.subr.mxu0 0.0
      %3155 = vmatpush1.msra.mxu0 0.0
      %3156 = vmatprep.subr.mxu0 0.0
      %3157 = vmatpush1.msra.mxu0 0.0
      %3158 = vmatprep.subr.mxu0 0.0
      %3159 = vmatpush1.msra.mxu0 0.0
      %3160 = vmatprep.subr.mxu0 0.0
      %3161 = vmatpush1.msra.mxu0 0.0
      %3162 = vmatprep.subr.mxu0 0.0
      %3163 = vmatpush1.msra.mxu0 0.0
      %3164 = vmatprep.subr.mxu0 0.0
      %3165 = vmatpush1.msra.mxu0 0.0
      %3166 = vmatprep.subr.mxu0 0.0
      %3167 = vmatpush1.msra.mxu0 0.0
      %3168 = vmatprep.subr.mxu0 0.0
      %3169 = vmatpush1.msra.mxu0 0.0
      %3170 = vmatprep.subr.mxu0 0.0
      %3171 = vmatpush1.msra.mxu0 0.0
      %3172 = vmatprep.subr.mxu0 0.0
      %3173 = vmatpush1.msra.mxu0 0.0
      %3174 = vmatprep.subr.mxu0 0.0
      %3175 = vmatpush1.msra.mxu0 0.0
      %3176 = vmatprep.subr.mxu0 0.0
      %3177 = vmatpush1.msra.mxu0 0.0
      %3178 = vmatprep.subr.mxu0 0.0
      %3179 = vmatpush1.msra.mxu0 0.0
      %3180 = vmatprep.subr.mxu0 0.0
      %3181 = vmatpush1.msra.mxu0 0.0
      %3182 = vmatprep.subr.mxu0 0.0
      %3183 = vmatpush1.msra.mxu0 0.0
      %3184 = vmatprep.subr.mxu0 0.0
      %3185 = vmatpush1.msra.mxu0 0.0
      %3186 = vmatprep.subr.mxu0 0.0
      %3187 = vmatpush1.msra.mxu0 0.0
      %3188 = vmatprep.subr.mxu0 0.0
      %3189 = vmatpush1.msra.mxu0 0.0
      %3190 = vmatprep.subr.mxu0 0.0
      %3191 = vmatpush1.msra.mxu0 0.0
      %3192 = vmatprep.subr.mxu0 0.0
      %3193 = vmatpush1.msra.mxu0 0.0
      %3194 = vmatprep.subr.mxu0 0.0
      %3195 = vmatpush1.msra.mxu0 0.0
      %3196 = vmatprep.subr.mxu0 0.0
      %3197 = vmatpush1.msra.mxu0 0.0
      %3198 = vmatprep.subr.mxu0 0.0
      %3199 = vmatpush1.msra.mxu0 0.0
      %3200 = vmatprep.subr.mxu0 0.0
      %3201 = vmatpush1.msra.mxu0 0.0
      %3202 = vmatprep.subr.mxu0 0.0
      %3203 = vmatpush1.msra.mxu0 0.0
      %3204 = vmatprep.mubr.f32.mxu0 0.0
      %3205 = vmatmul.mubr.f32.gmra.mrb[0].mxu0 %v3138
      %v3206 = vpop.f32.mrb[0].mxu0
      %v3207 = vadd.f32 0.0, %v3206
      %v3208 = vpop.f32.mrb[0].mxu0
      %3209 = vdwg.mxu0
      %3214 = vrot.lane.b32.xlu0 %v2371, 8
      %v3215 = vpop.permute.xlu0 %3214
      %3216 = vrot.lane.b32.xlu0 %v2447, 8
      %v3217 = vpop.permute.xlu0 %3216
      %3218 = vrot.lane.b32.xlu0 %v2523, 8
      %v3219 = vpop.permute.xlu0 %3218
      %3220 = vrot.lane.b32.xlu0 %v2599, 8
      %v3221 = vpop.permute.xlu0 %3220
      %3230 = vrot.lane.b32.xlu0 %v2675, 16
      %v3231 = vpop.permute.xlu0 %3230
      %3232 = vrot.lane.b32.xlu0 %v2751, 16
      %v3233 = vpop.permute.xlu0 %3232
      %3234 = vrot.lane.b32.xlu0 %v2827, 16
      %v3235 = vpop.permute.xlu0 %3234
      %3236 = vrot.lane.b32.xlu0 %v2903, 16
      %v3237 = vpop.permute.xlu0 %3236
      %3246 = vrot.lane.b32.xlu0 %v2979, 24
      %v3247 = vpop.permute.xlu0 %3246
      %3248 = vrot.lane.b32.xlu0 %v3055, 24
      %v3249 = vpop.permute.xlu0 %3248
      %3250 = vrot.lane.b32.xlu0 %v3131, 24
      %v3251 = vpop.permute.xlu0 %3250
      %3252 = vrot.lane.b32.xlu0 %v3207, 24
      %v3253 = vpop.permute.xlu0 %3252
      %v3258 = vsel %vm587, %v2067, %v3215
      %v3259 = vsel %vm587, %v2143, %v3217
      %v3260 = vsel %vm587, %v2219, %v3219
      %v3261 = vsel %vm587, %v2295, %v3221
      %vm3262 = vcmask 130048
      %v3263 = vsel %vm3262, %v3258, %v3231
      %v3264 = vsel %vm3262, %v3259, %v3233
      %v3265 = vsel %vm3262, %v3260, %v3235
      %v3266 = vsel %vm3262, %v3261, %v3237
      %vm3267 = vcmask 195584
      %v3268 = vsel %vm3267, %v3263, %v3247
      %v3269 = vsel %vm3267, %v3264, %v3249
      %v3270 = vsel %vm3267, %v3265, %v3251
      %v3271 = vsel %vm3267, %v3266, %v3253
      %v3272 = vld [vmem:[%s3] sm:$0xff]
      %v3273 = vld [vmem:[%s3 + $0x8] sm:$0xff]
      %v3274 = vld [vmem:[%s3 + $0x10] sm:$0xff]
      %v3275 = vld [vmem:[%s3 + $0x18] sm:$0xff]
      %v3276 = vld [vmem:[%s4] sm:$0x1]
      %v3278 = vlaneseq
      %v3279 = vshrl.u32 %v3278, 7
      %v3280 = vsub.s32 0, %v3279
      %v3281 = vrot.slane %v3276, %v3280
      %v3284 = vsel %vm459, %v3268, 0
      %v3287 = vsel %vm459, %v3269, 0
      %v3290 = vsel %vm459, %v3270, 0
      %v3293 = vsel %vm459, %v3271, 0
      %3295 = vmatprep.subr.mxu0 0.0
      %3296 = vmatpush1.msra.mxu0 %v3272
      %3297 = vmatprep.subr.mxu0 0.0
      %3298 = vmatpush1.msra.mxu0 %v3273
      %3299 = vmatprep.subr.mxu0 0.0
      %3300 = vmatpush1.msra.mxu0 %v3274
      %3301 = vmatprep.subr.mxu0 0.0
      %3302 = vmatpush1.msra.mxu0 %v3275
      %3303 = vmatprep.subr.mxu0 0.0
      %3304 = vmatpush1.msra.mxu0 0.0
      %3305 = vmatprep.subr.mxu0 0.0
      %3306 = vmatpush1.msra.mxu0 0.0
      %3307 = vmatprep.subr.mxu0 0.0
      %3308 = vmatpush1.msra.mxu0 0.0
      %3309 = vmatprep.subr.mxu0 0.0
      %3310 = vmatpush1.msra.mxu0 0.0
      %3311 = vmatprep.subr.mxu0 0.0
      %3312 = vmatpush1.msra.mxu0 0.0
      %3313 = vmatprep.subr.mxu0 0.0
      %3314 = vmatpush1.msra.mxu0 0.0
      %3315 = vmatprep.subr.mxu0 0.0
      %3316 = vmatpush1.msra.mxu0 0.0
      %3317 = vmatprep.subr.mxu0 0.0
      %3318 = vmatpush1.msra.mxu0 0.0
      %3319 = vmatprep.subr.mxu0 0.0
      %3320 = vmatpush1.msra.mxu0 0.0
      %3321 = vmatprep.subr.mxu0 0.0
      %3322 = vmatpush1.msra.mxu0 0.0
      %3323 = vmatprep.subr.mxu0 0.0
      %3324 = vmatpush1.msra.mxu0 0.0
      %3325 = vmatprep.subr.mxu0 0.0
      %3326 = vmatpush1.msra.mxu0 0.0
      %3327 = vmatprep.subr.mxu0 0.0
      %3328 = vmatpush1.msra.mxu0 0.0
      %3329 = vmatprep.subr.mxu0 0.0
      %3330 = vmatpush1.msra.mxu0 0.0
      %3331 = vmatprep.subr.mxu0 0.0
      %3332 = vmatpush1.msra.mxu0 0.0
      %3333 = vmatprep.subr.mxu0 0.0
      %3334 = vmatpush1.msra.mxu0 0.0
      %3335 = vmatprep.subr.mxu0 0.0
      %3336 = vmatpush1.msra.mxu0 0.0
      %3337 = vmatprep.subr.mxu0 0.0
      %3338 = vmatpush1.msra.mxu0 0.0
      %3339 = vmatprep.subr.mxu0 0.0
      %3340 = vmatpush1.msra.mxu0 0.0
      %3341 = vmatprep.subr.mxu0 0.0
      %3342 = vmatpush1.msra.mxu0 0.0
      %3343 = vmatprep.subr.mxu0 0.0
      %3344 = vmatpush1.msra.mxu0 0.0
      %3345 = vmatprep.subr.mxu0 0.0
      %3346 = vmatpush1.msra.mxu0 0.0
      %3347 = vmatprep.subr.mxu0 0.0
      %3348 = vmatpush1.msra.mxu0 0.0
      %3349 = vmatprep.subr.mxu0 0.0
      %3350 = vmatpush1.msra.mxu0 0.0
      %3351 = vmatprep.subr.mxu0 0.0
      %3352 = vmatpush1.msra.mxu0 0.0
      %3353 = vmatprep.subr.mxu0 0.0
      %3354 = vmatpush1.msra.mxu0 0.0
      %3355 = vmatprep.subr.mxu0 0.0
      %3356 = vmatpush1.msra.mxu0 0.0
      %3357 = vmatprep.subr.mxu0 0.0
      %3358 = vmatpush1.msra.mxu0 0.0
      %3359 = vmatprep.mubr.f32.mxu0 0.0
      %3360 = vmatmul.mubr.f32.gmra.mrb[0].mxu0 %v3284
      %v3361 = vpop.f32.mrb[0].mxu0
      %v3362 = vadd.f32 %v3281, %v3361
      %v3363 = vpop.f32.mrb[0].mxu0
      %3364 = vmatprep.mubr.f32.mxu0 0.0
      %3365 = vmatmul.mubr.f32.gmra.mrb[0].mxu0 %v3287
      %v3366 = vpop.f32.mrb[0].mxu0
      %v3367 = vadd.f32 %v3281, %v3366
      %v3368 = vpop.f32.mrb[0].mxu0
      %3369 = vmatprep.mubr.f32.mxu0 0.0
      %3370 = vmatmul.mubr.f32.gmra.mrb[0].mxu0 %v3290
      %v3371 = vpop.f32.mrb[0].mxu0
      %v3372 = vadd.f32 %v3281, %v3371
      %v3373 = vpop.f32.mrb[0].mxu0
      %3374 = vmatprep.mubr.f32.mxu0 0.0
      %3375 = vmatmul.mubr.f32.gmra.mrb[0].mxu0 %v3293
      %v3376 = vpop.f32.mrb[0].mxu0
      %v3377 = vadd.f32 %v3281, %v3376
      %v3378 = vpop.f32.mrb[0].mxu0
      %3379 = vdwg.mxu0
      %v3380 = vadd.f32 %v444, %v3362
      %v3381 = vadd.f32 %v445, %v3367
      %v3382 = vadd.f32 %v446, %v3372
      %v3383 = vadd.f32 %v447, %v3377
      %v3384 = vld [vmem:[%s5] sm:$0x1]
      %v3385 = vld [vmem:[%s6] sm:$0x1]
      %v3386 = vsel %vm459, %v3380, 0.0
      %3387 = vadd.xlane.f32.xlu0 %v3386
      %v3388 = vpop.xlane.xlu0 %3387
      %v3389 = vsel %vm459, %v3381, 0.0
      %3390 = vadd.xlane.f32.xlu0 %v3389
      %v3391 = vpop.xlane.xlu0 %3390
      %v3392 = vsel %vm459, %v3382, 0.0
      %3393 = vadd.xlane.f32.xlu0 %v3392
      %v3394 = vpop.xlane.xlu0 %3393
      %v3395 = vsel %vm459, %v3383, 0.0
      %3396 = vadd.xlane.f32.xlu0 %v3395
      %v3397 = vpop.xlane.xlu0 %3396
      %v3398 = vrcp.pop 32.0
      %v3399 = vmul.f32 %v3388, %v3398
      %v3400 = vmul.f32 %v3391, %v3398
      %v3401 = vmul.f32 %v3394, %v3398
      %v3402 = vmul.f32 %v3397, %v3398
      %v3403 = vsub.f32 %v3380, %v3399
      %v3404 = vsub.f32 %v3381, %v3400
      %v3405 = vsub.f32 %v3382, %v3401
      %v3406 = vsub.f32 %v3383, %v3402
      %v3407 = vmul.f32 %v3403, %v3403
      %v3408 = vmul.f32 %v3404, %v3404
      %v3409 = vmul.f32 %v3405, %v3405
      %v3410 = vmul.f32 %v3406, %v3406
      %v3411 = vsel %vm459, %v3407, 0.0
      %3412 = vadd.xlane.f32.xlu0 %v3411
      %v3413 = vpop.xlane.xlu0 %3412
      %v3414 = vsel %vm459, %v3408, 0.0
      %3415 = vadd.xlane.f32.xlu0 %v3414
      %v3416 = vpop.xlane.xlu0 %3415
      %v3417 = vsel %vm459, %v3409, 0.0
      %3418 = vadd.xlane.f32.xlu0 %v3417
      %v3419 = vpop.xlane.xlu0 %3418
      %v3420 = vsel %vm459, %v3410, 0.0
      %3421 = vadd.xlane.f32.xlu0 %v3420
      %v3422 = vpop.xlane.xlu0 %3421
      %v3423 = vmul.f32 %v3413, %v3398
      %v3424 = vmul.f32 %v3416, %v3398
      %v3425 = vmul.f32 %v3419, %v3398
      %v3426 = vmul.f32 %v3422, %v3398
      %v3427 = vadd.f32 %v3423, 1e-05
      %v3428 = vadd.f32 %v3424, 1e-05
      %v3429 = vadd.f32 %v3425, 1e-05
      %v3430 = vadd.f32 %v3426, 1e-05
      %v3431 = vrsqrt.pop %v3427
      %v3432 = vrsqrt.pop %v3428
      %v3433 = vrsqrt.pop %v3429
      %v3434 = vrsqrt.pop %v3430
      %v3435 = vmul.f32 %v3403, %v3431
      %v3436 = vmul.f32 %v3404, %v3432
      %v3437 = vmul.f32 %v3405, %v3433
      %v3438 = vmul.f32 %v3406, %v3434
      %v3440 = vlaneseq
      %v3441 = vshrl.u32 %v3440, 7
      %v3442 = vsub.s32 0, %v3441
      %v3443 = vrot.slane %v3384, %v3442
      %v3445 = vmul.f32 %v3435, %v3443
      %v3446 = vmul.f32 %v3436, %v3443
      %v3447 = vmul.f32 %v3437, %v3443
      %v3448 = vmul.f32 %v3438, %v3443
      %v3450 = vlaneseq
      %v3451 = vshrl.u32 %v3450, 7
      %v3452 = vsub.s32 0, %v3451
      %v3453 = vrot.slane %v3385, %v3452
      %v3455 = vadd.f32 %v3445, %v3453
      %v3456 = vadd.f32 %v3446, %v3453
      %v3457 = vadd.f32 %v3447, %v3453
      %v3458 = vadd.f32 %v3448, %v3453
      %v3459 = vld [vmem:[%s10] sm:$0x1]
      %v3461 = vlaneseq
      %v3462 = vshrl.u32 %v3461, 7
      %v3463 = vsub.s32 0, %v3462
      %v3464 = vrot.slane %v3459, %v3463
      %v3466 = vadd.f32 %v3464, 0.0
      %v3467 = vld [vmem:[%s7] sm:$0xff]
      %v3468 = vld [vmem:[%s7 + $0x8] sm:$0xff]
      %v3469 = vld [vmem:[%s7 + $0x10] sm:$0xff]
      %v3470 = vld [vmem:[%s7 + $0x18] sm:$0xff]
      %v3471 = vld [vmem:[%s8] sm:$0x1]
      %v3473 = vlaneseq
      %v3474 = vshrl.u32 %v3473, 7
      %v3475 = vsub.s32 0, %v3474
      %v3476 = vrot.slane %v3471, %v3475
      %v3479 = vsel %vm459, %v3455, 0
      %v3482 = vsel %vm459, %v3456, 0
      %v3485 = vsel %vm459, %v3457, 0
      %v3488 = vsel %vm459, %v3458, 0
      %3490 = vmatprep.subr.mxu0 0.0
      %3491 = vmatpush1.msra.mxu0 %v3467
      %3492 = vmatprep.subr.mxu0 0.0
      %3493 = vmatpush1.msra.mxu0 %v3468
      %3494 = vmatprep.subr.mxu0 0.0
      %3495 = vmatpush1.msra.mxu0 %v3469
      %3496 = vmatprep.subr.mxu0 0.0
      %3497 = vmatpush1.msra.mxu0 %v3470
      %3498 = vmatprep.subr.mxu0 0.0
      %3499 = vmatpush1.msra.mxu0 0.0
      %3500 = vmatprep.subr.mxu0 0.0
      %3501 = vmatpush1.msra.mxu0 0.0
      %3502 = vmatprep.subr.mxu0 0.0
      %3503 = vmatpush1.msra.mxu0 0.0
      %3504 = vmatprep.subr.mxu0 0.0
      %3505 = vmatpush1.msra.mxu0 0.0
      %3506 = vmatprep.subr.mxu0 0.0
      %3507 = vmatpush1.msra.mxu0 0.0
      %3508 = vmatprep.subr.mxu0 0.0
      %3509 = vmatpush1.msra.mxu0 0.0
      %3510 = vmatprep.subr.mxu0 0.0
      %3511 = vmatpush1.msra.mxu0 0.0
      %3512 = vmatprep.subr.mxu0 0.0
      %3513 = vmatpush1.msra.mxu0 0.0
      %3514 = vmatprep.subr.mxu0 0.0
      %3515 = vmatpush1.msra.mxu0 0.0
      %3516 = vmatprep.subr.mxu0 0.0
      %3517 = vmatpush1.msra.mxu0 0.0
      %3518 = vmatprep.subr.mxu0 0.0
      %3519 = vmatpush1.msra.mxu0 0.0
      %3520 = vmatprep.subr.mxu0 0.0
      %3521 = vmatpush1.msra.mxu0 0.0
      %3522 = vmatprep.subr.mxu0 0.0
      %3523 = vmatpush1.msra.mxu0 0.0
      %3524 = vmatprep.subr.mxu0 0.0
      %3525 = vmatpush1.msra.mxu0 0.0
      %3526 = vmatprep.subr.mxu0 0.0
      %3527 = vmatpush1.msra.mxu0 0.0
      %3528 = vmatprep.subr.mxu0 0.0
      %3529 = vmatpush1.msra.mxu0 0.0
      %3530 = vmatprep.subr.mxu0 0.0
      %3531 = vmatpush1.msra.mxu0 0.0
      %3532 = vmatprep.subr.mxu0 0.0
      %3533 = vmatpush1.msra.mxu0 0.0
      %3534 = vmatprep.subr.mxu0 0.0
      %3535 = vmatpush1.msra.mxu0 0.0
      %3536 = vmatprep.subr.mxu0 0.0
      %3537 = vmatpush1.msra.mxu0 0.0
      %3538 = vmatprep.subr.mxu0 0.0
      %3539 = vmatpush1.msra.mxu0 0.0
      %3540 = vmatprep.subr.mxu0 0.0
      %3541 = vmatpush1.msra.mxu0 0.0
      %3542 = vmatprep.subr.mxu0 0.0
      %3543 = vmatpush1.msra.mxu0 0.0
      %3544 = vmatprep.subr.mxu0 0.0
      %3545 = vmatpush1.msra.mxu0 0.0
      %3546 = vmatprep.subr.mxu0 0.0
      %3547 = vmatpush1.msra.mxu0 0.0
      %3548 = vmatprep.subr.mxu0 0.0
      %3549 = vmatpush1.msra.mxu0 0.0
      %3550 = vmatprep.subr.mxu0 0.0
      %3551 = vmatpush1.msra.mxu0 0.0
      %3552 = vmatprep.subr.mxu0 0.0
      %3553 = vmatpush1.msra.mxu0 0.0
      %3554 = vmatprep.mubr.f32.mxu0 0.0
      %3555 = vmatmul.mubr.f32.gmra.mrb[0].mxu0 %v3479
      %v3556 = vpop.f32.mrb[0].mxu0
      %v3557 = vadd.f32 %v3476, %v3556
      %v3558 = vpop.f32.mrb[0].mxu0
      %3559 = vmatprep.mubr.f32.mxu0 0.0
      %3560 = vmatmul.mubr.f32.gmra.mrb[0].mxu0 %v3482
      %v3561 = vpop.f32.mrb[0].mxu0
      %v3562 = vadd.f32 %v3476, %v3561
      %v3563 = vpop.f32.mrb[0].mxu0
      %3564 = vmatprep.mubr.f32.mxu0 0.0
      %3565 = vmatmul.mubr.f32.gmra.mrb[0].mxu0 %v3485
      %v3566 = vpop.f32.mrb[0].mxu0
      %v3567 = vadd.f32 %v3476, %v3566
      %v3568 = vpop.f32.mrb[0].mxu0
      %3569 = vmatprep.mubr.f32.mxu0 0.0
      %3570 = vmatmul.mubr.f32.gmra.mrb[0].mxu0 %v3488
      %v3571 = vpop.f32.mrb[0].mxu0
      %v3572 = vadd.f32 %v3476, %v3571
      %v3573 = vpop.f32.mrb[0].mxu0
      %3574 = vdwg.mxu0
      %v3575 = vmax.f32 %v3557, 0.0
      %v3576 = vmax.f32 %v3562, 0.0
      %v3577 = vmax.f32 %v3567, 0.0
      %v3578 = vmax.f32 %v3572, 0.0
      %v3579 = vld [vmem:[%s9] sm:$0xff]
      %v3580 = vld [vmem:[%s9 + $0x8] sm:$0xff]
      %v3581 = vld [vmem:[%s9 + $0x10] sm:$0xff]
      %v3582 = vld [vmem:[%s9 + $0x18] sm:$0xff]
      %v3583 = vld [vmem:[%s9 + $0x20] sm:$0xff]
      %v3584 = vld [vmem:[%s9 + $0x28] sm:$0xff]
      %v3585 = vld [vmem:[%s9 + $0x30] sm:$0xff]
      %v3586 = vld [vmem:[%s9 + $0x38] sm:$0xff]
      %vm3587 = vcmask 523264
      %v3589 = vsel %vm3587, %v3575, 0
      %v3592 = vsel %vm3587, %v3576, 0
      %v3595 = vsel %vm3587, %v3577, 0
      %v3598 = vsel %vm3587, %v3578, 0
      %3600 = vmatprep.subr.mxu0 0.0
      %3601 = vmatpush1.msra.mxu0 %v3579
      %3602 = vmatprep.subr.mxu0 0.0
      %3603 = vmatpush1.msra.mxu0 %v3580
      %3604 = vmatprep.subr.mxu0 0.0
      %3605 = vmatpush1.msra.mxu0 %v3581
      %3606 = vmatprep.subr.mxu0 0.0
      %3607 = vmatpush1.msra.mxu0 %v3582
      %3608 = vmatprep.subr.mxu0 0.0
      %3609 = vmatpush1.msra.mxu0 %v3583
      %3610 = vmatprep.subr.mxu0 0.0
      %3611 = vmatpush1.msra.mxu0 %v3584
      %3612 = vmatprep.subr.mxu0 0.0
      %3613 = vmatpush1.msra.mxu0 %v3585
      %3614 = vmatprep.subr.mxu0 0.0
      %3615 = vmatpush1.msra.mxu0 %v3586
      %3616 = vmatprep.subr.mxu0 0.0
      %3617 = vmatpush1.msra.mxu0 0.0
      %3618 = vmatprep.subr.mxu0 0.0
      %3619 = vmatpush1.msra.mxu0 0.0
      %3620 = vmatprep.subr.mxu0 0.0
      %3621 = vmatpush1.msra.mxu0 0.0
      %3622 = vmatprep.subr.mxu0 0.0
      %3623 = vmatpush1.msra.mxu0 0.0
      %3624 = vmatprep.subr.mxu0 0.0
      %3625 = vmatpush1.msra.mxu0 0.0
      %3626 = vmatprep.subr.mxu0 0.0
      %3627 = vmatpush1.msra.mxu0 0.0
      %3628 = vmatprep.subr.mxu0 0.0
      %3629 = vmatpush1.msra.mxu0 0.0
      %3630 = vmatprep.subr.mxu0 0.0
      %3631 = vmatpush1.msra.mxu0 0.0
      %3632 = vmatprep.subr.mxu0 0.0
      %3633 = vmatpush1.msra.mxu0 0.0
      %3634 = vmatprep.subr.mxu0 0.0
      %3635 = vmatpush1.msra.mxu0 0.0
      %3636 = vmatprep.subr.mxu0 0.0
      %3637 = vmatpush1.msra.mxu0 0.0
      %3638 = vmatprep.subr.mxu0 0.0
      %3639 = vmatpush1.msra.mxu0 0.0
      %3640 = vmatprep.subr.mxu0 0.0
      %3641 = vmatpush1.msra.mxu0 0.0
      %3642 = vmatprep.subr.mxu0 0.0
      %3643 = vmatpush1.msra.mxu0 0.0
      %3644 = vmatprep.subr.mxu0 0.0
      %3645 = vmatpush1.msra.mxu0 0.0
      %3646 = vmatprep.subr.mxu0 0.0
      %3647 = vmatpush1.msra.mxu0 0.0
      %3648 = vmatprep.subr.mxu0 0.0
      %3649 = vmatpush1.msra.mxu0 0.0
      %3650 = vmatprep.subr.mxu0 0.0
      %3651 = vmatpush1.msra.mxu0 0.0
      %3652 = vmatprep.subr.mxu0 0.0
      %3653 = vmatpush1.msra.mxu0 0.0
      %3654 = vmatprep.subr.mxu0 0.0
      %3655 = vmatpush1.msra.mxu0 0.0
      %3656 = vmatprep.subr.mxu0 0.0
      %3657 = vmatpush1.msra.mxu0 0.0
      %3658 = vmatprep.subr.mxu0 0.0
      %3659 = vmatpush1.msra.mxu0 0.0
      %3660 = vmatprep.subr.mxu0 0.0
      %3661 = vmatpush1.msra.mxu0 0.0
      %3662 = vmatprep.subr.mxu0 0.0
      %3663 = vmatpush1.msra.mxu0 0.0
      %3664 = vmatprep.mubr.f32.mxu0 0.0
      %3665 = vmatmul.mubr.f32.gmra.mrb[0].mxu0 %v3589
      %v3666 = vpop.f32.mrb[0].mxu0
      %v3667 = vadd.f32 0.0, %v3666
      %v3668 = vpop.f32.mrb[0].mxu0
      %3669 = vmatprep.mubr.f32.mxu0 0.0
      %3670 = vmatmul.mubr.f32.gmra.mrb[0].mxu0 %v3592
      %v3671 = vpop.f32.mrb[0].mxu0
      %v3672 = vadd.f32 0.0, %v3671
      %v3673 = vpop.f32.mrb[0].mxu0
      %3674 = vmatprep.mubr.f32.mxu0 0.0
      %3675 = vmatmul.mubr.f32.gmra.mrb[0].mxu0 %v3595
      %v3676 = vpop.f32.mrb[0].mxu0
      %v3677 = vadd.f32 0.0, %v3676
      %v3678 = vpop.f32.mrb[0].mxu0
      %3679 = vmatprep.mubr.f32.mxu0 0.0
      %3680 = vmatmul.mubr.f32.gmra.mrb[0].mxu0 %v3598
      %v3681 = vpop.f32.mrb[0].mxu0
      %v3682 = vadd.f32 0.0, %v3681
      %v3683 = vpop.f32.mrb[0].mxu0
      %3684 = vdwg.mxu0
      %v3685 = vadd.f32 %v3466, %v3667
      %v3686 = vadd.f32 %v3466, %v3672
      %v3687 = vadd.f32 %v3466, %v3677
      %v3688 = vadd.f32 %v3466, %v3682
      %v3689 = vadd.f32 %v3455, %v3685
      %v3690 = vadd.f32 %v3456, %v3686
      %v3691 = vadd.f32 %v3457, %v3687
      %v3692 = vadd.f32 %v3458, %v3688
      %v3693 = vld [vmem:[%s11] sm:$0x1]
      %v3694 = vld [vmem:[%s12] sm:$0x1]
      %v3695 = vsel %vm459, %v3689, 0.0
      %3696 = vadd.xlane.f32.xlu0 %v3695
      %v3697 = vpop.xlane.xlu0 %3696
      %v3698 = vsel %vm459, %v3690, 0.0
      %3699 = vadd.xlane.f32.xlu0 %v3698
      %v3700 = vpop.xlane.xlu0 %3699
      %v3701 = vsel %vm459, %v3691, 0.0
      %3702 = vadd.xlane.f32.xlu0 %v3701
      %v3703 = vpop.xlane.xlu0 %3702
      %v3704 = vsel %vm459, %v3692, 0.0
      %3705 = vadd.xlane.f32.xlu0 %v3704
      %v3706 = vpop.xlane.xlu0 %3705
      %v3707 = vmul.f32 %v3697, %v3398
      %v3708 = vmul.f32 %v3700, %v3398
      %v3709 = vmul.f32 %v3703, %v3398
      %v3710 = vmul.f32 %v3706, %v3398
      %v3711 = vsub.f32 %v3689, %v3707
      %v3712 = vsub.f32 %v3690, %v3708
      %v3713 = vsub.f32 %v3691, %v3709
      %v3714 = vsub.f32 %v3692, %v3710
      %v3715 = vmul.f32 %v3711, %v3711
      %v3716 = vmul.f32 %v3712, %v3712
      %v3717 = vmul.f32 %v3713, %v3713
      %v3718 = vmul.f32 %v3714, %v3714
      %v3719 = vsel %vm459, %v3715, 0.0
      %3720 = vadd.xlane.f32.xlu0 %v3719
      %v3721 = vpop.xlane.xlu0 %3720
      %v3722 = vsel %vm459, %v3716, 0.0
      %3723 = vadd.xlane.f32.xlu0 %v3722
      %v3724 = vpop.xlane.xlu0 %3723
      %v3725 = vsel %vm459, %v3717, 0.0
      %3726 = vadd.xlane.f32.xlu0 %v3725
      %v3727 = vpop.xlane.xlu0 %3726
      %v3728 = vsel %vm459, %v3718, 0.0
      %3729 = vadd.xlane.f32.xlu0 %v3728
      %v3730 = vpop.xlane.xlu0 %3729
      %v3731 = vmul.f32 %v3721, %v3398
      %v3732 = vmul.f32 %v3724, %v3398
      %v3733 = vmul.f32 %v3727, %v3398
      %v3734 = vmul.f32 %v3730, %v3398
      %v3735 = vadd.f32 %v3731, 1e-05
      %v3736 = vadd.f32 %v3732, 1e-05
      %v3737 = vadd.f32 %v3733, 1e-05
      %v3738 = vadd.f32 %v3734, 1e-05
      %v3739 = vrsqrt.pop %v3735
      %v3740 = vrsqrt.pop %v3736
      %v3741 = vrsqrt.pop %v3737
      %v3742 = vrsqrt.pop %v3738
      %v3743 = vmul.f32 %v3711, %v3739
      %v3744 = vmul.f32 %v3712, %v3740
      %v3745 = vmul.f32 %v3713, %v3741
      %v3746 = vmul.f32 %v3714, %v3742
      %v3748 = vlaneseq
      %v3749 = vshrl.u32 %v3748, 7
      %v3750 = vsub.s32 0, %v3749
      %v3751 = vrot.slane %v3693, %v3750
      %v3753 = vmul.f32 %v3743, %v3751
      %v3754 = vmul.f32 %v3744, %v3751
      %v3755 = vmul.f32 %v3745, %v3751
      %v3756 = vmul.f32 %v3746, %v3751
      %v3758 = vlaneseq
      %v3759 = vshrl.u32 %v3758, 7
      %v3760 = vsub.s32 0, %v3759
      %v3761 = vrot.slane %v3694, %v3760
      %v3763 = vadd.f32 %v3753, %v3761
      %v3764 = vadd.f32 %v3754, %v3761
      %v3765 = vadd.f32 %v3755, %v3761
      %v3766 = vadd.f32 %v3756, %v3761
      %3767 = vst.msk [vmem:[%s442] sm:$0xff] %vm459, %v3763
      %3768 = vst.msk [vmem:[%s442 + $0x8] sm:$0xff] %vm459, %v3764
      %3769 = vst.msk [vmem:[%s442 + $0x10] sm:$0xff] %vm459, %v3765
      %3770 = vst.msk [vmem:[%s442 + $0x18] sm:$0xff] %vm459, %v3766
      %s3771 = smul.u32 4, %s24
      %p3772 = scmp.lt.s32.totalorder %s3771, 7
      %s3773 = scalar_select %p3772, %s3771, 7
      %s3774 = smul.addr %s3773, 8
      %s3775 = scalar_lea.vmem %s13, %s3774
      // Predicated region
      $region73: #{tpu_custom_call.1} parent=71 // pred_check
        %p3776 = pneg %p320
      $region74: #{tpu_custom_call.1} parent=71 // pred_check_branch
        %3778 = sbr.rel (%p3776) target = $region76
      $region75: #{tpu_custom_call.1} parent=71 // pred_region
        %s3779 = smul.u32 4, %s24
      $region76: #{tpu_custom_call.1} parent=71 // pred_fallthru
        _
    $region72: #{tpu_custom_call.1} parent=5 // pred_fallthru
      _
    %p3780 = scmp.le.s32.totalorder 2, %s19
    // Predicated region
    $region77: #{tpu_custom_call.1} parent=5 // pred_check
      %p3781 = pneg %p3780
    $region78: #{tpu_custom_call.1} parent=5 // pred_check_branch
      %3783 = sbr.rel (%p3781) target = $region80
    $region79: #{tpu_custom_call.1} parent=5 // pred_region
      %s3784 = ssub.s32 %s19, 2
      // Predicated region
      $region81: #{tpu_custom_call.1} parent=79 // pred_check
        %p3785 = pneg %p326
      $region82: #{tpu_custom_call.1} parent=79 // pred_check_branch
        %3787 = sbr.rel (%p3785) target = $region84
      $region83: #{tpu_custom_call.1} parent=79 // pred_region
        %s3788 = smul.u32 4, %s25
        %p3789 = scmp.lt.s32.totalorder %s3788, 7
        %s3790 = scalar_select %p3789, %s3788, 7
        %s3791 = smul.addr %s3790, 8
        %s3792 = scalar_lea.vmem %s13, %s3791
      $region84: #{tpu_custom_call.1} parent=79 // pred_fallthru
        _
    $region80: #{tpu_custom_call.1} parent=5 // pred_fallthru
      _
  $region6: #{tpu_custom_call.1} parent=0 // loop_footer
    %s23 = sadd.s32 1, %s19
  $region7: #{tpu_custom_call.1} parent=0 // loop_footer_branch
    %18 = sbr.rel target = $region3
  $region8: #{tpu_custom_call.1} parent=0 // loop_exit
    _

</llo_original>
